<compile_context>
chip_gen: v7x
topology: tpu7x:2x2x1
jax: 0.10.0
libtpu: 0.0.40
codegen_flags: <defaults>
</compile_context>

<pallas_src>
import functools

import jax
import jax.numpy as jnp
from jax.experimental import pallas as pl
from jax.experimental.pallas import tpu as pltpu


def _ds(start, size, stride):
    return pl.ds(start, size) if stride == 1 else pl.ds(start, size, stride)


# ----------------------------------------------------------------------------
# Fused whole-network kernel (one grid step == `nb` images end-to-end)
# ----------------------------------------------------------------------------
def _fused_cnn_kernel(x_ref, *refs, conv_meta, n_fc, nb):
    """refs layout:
         [w_conv_0, b_conv_0, ..., w_conv_{L-1}, b_conv_{L-1},
          w_fc_0, b_fc_0, ..., w_fc_{F-1}, b_fc_{F-1},
          logits_ref, feat_ref,
          (xpad_l, conv_l, hpool_l) for each conv layer l]
       conv_meta: per layer (kh, kw, stride, pad, Ho, Wo, Ho2, Wo2, Cin, Cout).
    """
    n_conv = len(conv_meta)
    n_in = 2 * n_conv + 2 * n_fc
    in_refs = refs[:n_in]
    logits_ref = refs[n_in]
    feat_ref = refs[n_in + 1]
    scratch = refs[n_in + 2:]

    # ---------------- conv stack ----------------
    cur = x_ref[...]                                   # [NB, H, W, Cin] f32
    for l, (kh, kw, s, pad, Ho, Wo, Ho2, Wo2, Cin, Cout) in enumerate(conv_meta):
        w_ref = in_refs[2 * l]                         # [kh*kw*Cin, Cout] bf16
        b_ref = in_refs[2 * l + 1]                     # [1, Cout] f32
        xpad_ref, conv_ref, hpool_ref = scratch[3 * l: 3 * l + 3]

        # In-kernel zero padding: zero the scratch, store the interior.
        H, W = cur.shape[1], cur.shape[2]
        if pad > 0:
            xpad_ref[...] = jnp.zeros_like(xpad_ref)
            xpad_ref[:, pl.ds(pad, H), pl.ds(pad, W), :] = cur
        else:
            xpad_ref[...] = cur

        # im2col: stack the kh*kw tap windows along K -> one MXU GEMM.
        pieces = []
        for i in range(kh):
            for j in range(kw):
                win = xpad_ref[:, _ds(i, Ho, s), _ds(j, Wo, s), :]   # [NB,Ho,Wo,Cin]
                pieces.append(win.reshape(nb * Ho * Wo, Cin))
        patches = jnp.concatenate(pieces, axis=-1).astype(w_ref.dtype)  # [NB*Ho*Wo, K]

        acc = jnp.dot(patches, w_ref[...], preferred_element_type=jnp.float32)
        conv_ref[...] = jnp.maximum(acc + b_ref[...], 0.0).reshape(nb, Ho, Wo, Cout)

        # 2x2 max-pool as two strided slab maxes (no per-row Python loop).
        hmax = jnp.maximum(conv_ref[:, pl.ds(0, Ho2, 2), :, :],
                           conv_ref[:, pl.ds(1, Ho2, 2), :, :])       # [NB,Ho2,Wo,C]
        hpool_ref[...] = hmax
        cur = jnp.maximum(hpool_ref[:, :, pl.ds(0, Wo2, 2), :],
                          hpool_ref[:, :, pl.ds(1, Wo2, 2), :])       # [NB,Ho2,Wo2,C]

    # ---------------- flatten (NHWC order; fc1 weights pre-permuted) --------
    _, Hf, Wf, Cf = cur.shape
    for hh in range(Hf):
        for ww in range(Wf):
            p = hh * Wf + ww
            feat_ref[0, :, pl.ds(p * Cf, Cf)] = cur[:, hh, ww, :]
    feat = feat_ref[0]                                  # [NB, Hf*Wf*Cf] lane-dense

    # ---------------- FC stack (all weights resident in VMEM) ---------------
    h = feat
    for f in range(n_fc):
        w_ref = in_refs[2 * n_conv + 2 * f]
        b_ref = in_refs[2 * n_conv + 2 * f + 1]
        h = jnp.dot(h.astype(w_ref.dtype), w_ref[...],
                    preferred_element_type=jnp.float32) + b_ref[...]
        if f < n_fc - 1:                                # FCN hidden activation (ReLU)
            h = jnp.maximum(h, 0.0)
    logits_ref[0] = h


# ----------------------------------------------------------------------------
# Wrapper: one pallas_call for the whole CNN forward
# ----------------------------------------------------------------------------
def cnn_forward(x_nchw, conv_prep, fc_prep, *, images_per_block=1):
    """CNN.forward: returns (fc(flatten(conv(x))), flatten(conv(x)))."""
    N = x_nchw.shape[0]
    nb = images_per_block
    assert N % nb == 0, "batch must be divisible by images_per_block"
    G = N // nb

    # NCHW -> NHWC once at the boundary (4 KiB input).
    x = jnp.transpose(x_nchw, (0, 2, 3, 1)).astype(jnp.float32)
    H, W, Cin = x.shape[1], x.shape[2], x.shape[3]

    # Static shape walk + scratch allocation per conv layer.
    conv_meta = []
    scratch_shapes = []
    ch, cw, cc = H, W, Cin
    for (wf, bz, kh, kw, stride, pad) in conv_prep:
        cout = wf.shape[1]
        hp, wp = ch + 2 * pad, cw + 2 * pad
        ho = (hp - kh) // stride + 1
        wo = (wp - kw) // stride + 1
        ho2, wo2 = ho // 2, wo // 2
        conv_meta.append((kh, kw, stride, pad, ho, wo, ho2, wo2, cc, cout))
        scratch_shapes += [pltpu.VMEM((nb, hp, wp, cc), jnp.float32),     # padded in
                           pltpu.VMEM((nb, ho, wo, cout), jnp.float32),   # conv+relu
                           pltpu.VMEM((nb, ho2, wo, cout), jnp.float32)]  # row-pooled
        ch, cw, cc = ho2, wo2, cout
    feat_dim = ch * cw * cc
    out_dim = fc_prep[-1][0].shape[1]
    n_fc = len(fc_prep)

    args = [x]
    in_specs = [pl.BlockSpec((nb, H, W, Cin), lambda n: (n, 0, 0, 0))]
    for (wf, bz, *_rest) in conv_prep:
        args += [wf, bz]
        in_specs += [pl.BlockSpec(wf.shape, lambda n: (0, 0)),
                     pl.BlockSpec(bz.shape, lambda n: (0, 0))]
    for (wf, bz) in fc_prep:
        args += [wf, bz]
        in_specs += [pl.BlockSpec(wf.shape, lambda n: (0, 0)),
                     pl.BlockSpec(bz.shape, lambda n: (0, 0))]

    kernel = functools.partial(_fused_cnn_kernel, conv_meta=tuple(conv_meta),
                               n_fc=n_fc, nb=nb)

    logits3, feat3 = pl.pallas_call(
        kernel,
        grid=(G,),
        in_specs=in_specs,
        out_specs=[pl.BlockSpec((1, nb, out_dim), lambda n: (n, 0, 0)),
                   pl.BlockSpec((1, nb, feat_dim), lambda n: (n, 0, 0))],
        out_shape=[jax.ShapeDtypeStruct((G, nb, out_dim), jnp.float32),
                   jax.ShapeDtypeStruct((G, nb, feat_dim), jnp.float32)],
        scratch_shapes=scratch_shapes,
        compiler_params=pltpu.CompilerParams(
            dimension_semantics=("parallel",)),
    )(*args)

    logits = logits3.reshape(N, out_dim)
    # Tiny transpose only to present the returned feature in PyTorch's
    # (C, H, W) flatten order; the FC path already consumed NHWC order.
    feat_nhwc = feat3.reshape(N, ch, cw, cc)
    feat = jnp.transpose(feat_nhwc, (0, 3, 1, 2)).reshape(N, feat_dim)
    return logits, feat


# ----------------------------------------------------------------------------
# Parameters (PyTorch layouts) + one-time kernel-friendly conversion
# ----------------------------------------------------------------------------
def make_params(key, conv_cfg, fc_sizes):
    conv_params = []
    for (cin, cout, k, stride, pad) in conv_cfg:
        key, k1, k2 = jax.random.split(key, 3)
        w = 0.1 * jax.random.normal(k1, (cout, cin, k, k), jnp.float32)
        b = 0.1 * jax.random.normal(k2, (cout,), jnp.float32)
        conv_params.append((w, b, stride, pad))
    fc_params = []
    for i in range(len(fc_sizes) - 1):
        key, k1, k2 = jax.random.split(key, 3)
        w = 0.1 * jax.random.normal(k1, (fc_sizes[i + 1], fc_sizes[i]), jnp.float32)
        b = 0.1 * jax.random.normal(k2, (fc_sizes[i + 1],), jnp.float32)
        fc_params.append((w, b))
    return conv_params, fc_params


def prepare_params(conv_params, fc_params, input_hw):
    """conv [Cout,Cin,kh,kw] -> [kh*kw*Cin, Cout] bf16 (tap-major K),
       fc [out,in] -> [in,out] bf16 with fc1 rows permuted to NHWC flatten
       order, biases -> [1,out] f32."""
    conv_prep = []
    h, w = input_hw
    c = None
    for (wt, bt, stride, pad) in conv_params:
        cout, cin, kh, kw = wt.shape
        w_flat = (wt.transpose(2, 3, 1, 0)             # [kh, kw, cin, cout]
                    .reshape(kh * kw * cin, cout)
                    .astype(jnp.bfloat16))
        conv_prep.append((w_flat, bt.reshape(1, cout).astype(jnp.float32),
                          kh, kw, stride, pad))
        hp, wp = h + 2 * pad, w + 2 * pad
        h = ((hp - kh) // stride + 1) // 2
        w = ((wp - kw) // stride + 1) // 2
        c = cout
    fc_prep = []
    for li, (wt, bt) in enumerate(fc_params):
        out_d, in_d = wt.shape
        if li == 0:
            assert in_d == c * h * w
            # absorb the NHWC->NCHW flatten into fc1 (free, prep-time)
            wt = (wt.reshape(out_d, c, h, w)
                    .transpose(0, 2, 3, 1)             # [out, h, w, c]
                    .reshape(out_d, in_d))
        fc_prep.append((wt.T.astype(jnp.bfloat16),
                        bt.reshape(1, out_d).astype(jnp.float32)))
    return conv_prep, fc_prep


# ----------------------------------------------------------------------------
# Pure-JAX reference (PyTorch semantics, matched bf16/f32 precision)
# ----------------------------------------------------------------------------
def reference_forward(x_nchw, conv_params, fc_params):
    bf16, f32 = jnp.bfloat16, jnp.float32
    x = x_nchw.astype(f32)
    for (wt, bt, stride, pad) in conv_params:
        cout, cin, kh, kw = wt.shape
        xp = jnp.pad(x, ((0, 0), (0, 0), (pad, pad), (pad, pad)))
        n, _, hp, wp = xp.shape
        ho = (hp - kh) // stride + 1
        wo = (wp - kw) // stride + 1
        acc = jnp.zeros((n, cout, ho, wo), f32)
        for i in range(kh):
            for j in range(kw):
                win = xp[:, :, i:i + (ho - 1) * stride + 1:stride,
                               j:j + (wo - 1) * stride + 1:stride]
                acc = acc + jnp.einsum("ncij,oc->noij",
                                       win.astype(bf16),
                                       wt[:, :, i, j].astype(bf16),
                                       preferred_element_type=f32)
        acc = jnp.maximum(acc + bt[None, :, None, None], 0.0)
        ho2, wo2 = ho // 2, wo // 2
        x = (acc[:, :, :2 * ho2, :2 * wo2]
             .reshape(n, cout, ho2, 2, wo2, 2).max(axis=(3, 5)))
    feat = x.reshape(x.shape[0], -1)                    # PyTorch (C,H,W) flatten
    h = feat
    for li, (wt, bt) in enumerate(fc_params):
        h = jnp.dot(h.astype(bf16), wt.T.astype(bf16),
                    preferred_element_type=f32) + bt
        if li < len(fc_params) - 1:
            h = jnp.maximum(h, 0.0)
    return h, feat


# ----------------------------------------------------------------------------
# Demo
# ----------------------------------------------------------------------------
if __name__ == "__main__":
    key = jax.random.PRNGKey(0)
    key, kx = jax.random.split(key)

    # conv = [(in_ch, out_ch, kernel, stride, padding), ...]
    conv_cfg = [(4, 8, 3, 1, 1), (8, 16, 3, 1, 1)]
    # 2x4x16x16 -> conv/pool -> 2x8x8x8 -> conv/pool -> 2x16x4x4 -> 256 -> 32 -> 10
    fc_sizes = [16 * 4 * 4, 32, 10]

    x = jax.random.normal(kx, (2, 4, 16, 16), jnp.float32)
    conv_params, fc_params = make_params(key, conv_cfg, fc_sizes)
    conv_prep, fc_prep = prepare_params(conv_params, fc_params, input_hw=(16, 16))

    fwd = jax.jit(lambda xx: cnn_forward(xx, conv_prep, fc_prep,
                                         images_per_block=1))
    logits, feat = fwd(x)
    jax.block_until_ready((logits, feat))

    assert logits.shape == (2, 10)
    assert feat.shape == (2, 256)

    ref_logits, ref_feat = reference_forward(x, conv_params, fc_params)
    assert jnp.allclose(feat, ref_feat, atol=1e-2, rtol=1e-2)
    assert jnp.allclose(logits, ref_logits, atol=1e-2, rtol=1e-2)

    print("KERNEL_OK")
</pallas_src>

<mosaic_0001>
module attributes {stable_mosaic.version = 11 : i64} {
  func.func @_fused_cnn_kernel(%arg0: i32, %arg1: memref<1x16x16x4xf32, #tpu.memory_space<vmem>>, %arg2: memref<36x8xbf16, #tpu.memory_space<vmem>>, %arg3: memref<1x8xf32, #tpu.memory_space<vmem>>, %arg4: memref<72x16xbf16, #tpu.memory_space<vmem>>, %arg5: memref<1x16xf32, #tpu.memory_space<vmem>>, %arg6: memref<256x32xbf16, #tpu.memory_space<vmem>>, %arg7: memref<1x32xf32, #tpu.memory_space<vmem>>, %arg8: memref<32x10xbf16, #tpu.memory_space<vmem>>, %arg9: memref<1x10xf32, #tpu.memory_space<vmem>>, %arg10: memref<1x1x10xf32, #tpu.memory_space<vmem>>, %arg11: memref<1x1x256xf32, #tpu.memory_space<vmem>>, %arg12: memref<1x18x18x4xf32, #tpu.memory_space<vmem>>, %arg13: memref<1x16x16x8xf32, #tpu.memory_space<vmem>>, %arg14: memref<1x8x16x8xf32, #tpu.memory_space<vmem>>, %arg15: memref<1x10x10x8xf32, #tpu.memory_space<vmem>>, %arg16: memref<1x8x8x16xf32, #tpu.memory_space<vmem>>, %arg17: memref<1x4x8x16xf32, #tpu.memory_space<vmem>>) attributes {dimension_semantics = [#tpu.dimension_semantics<parallel>], iteration_bounds = array<i64: 2>, scalar_prefetch = 0 : i64, scratch_operands = 6 : i64, tpu.core_type = #tpu.core_type<tc>, window_params = [{transform_indices = @transform_0, window_bounds = array<i64: 1, 16, 16, 4>}, {pipeline_mode = #tpu.pipeline_mode<synchronous>, transform_indices = @transform_1, window_bounds = array<i64: 36, 8>}, {pipeline_mode = #tpu.pipeline_mode<synchronous>, transform_indices = @transform_2, window_bounds = array<i64: 1, 8>}, {pipeline_mode = #tpu.pipeline_mode<synchronous>, transform_indices = @transform_3, window_bounds = array<i64: 72, 16>}, {pipeline_mode = #tpu.pipeline_mode<synchronous>, transform_indices = @transform_4, window_bounds = array<i64: 1, 16>}, {pipeline_mode = #tpu.pipeline_mode<synchronous>, transform_indices = @transform_5, window_bounds = array<i64: 256, 32>}, {pipeline_mode = #tpu.pipeline_mode<synchronous>, transform_indices = @transform_6, window_bounds = array<i64: 1, 32>}, {pipeline_mode = #tpu.pipeline_mode<synchronous>, transform_indices = @transform_7, window_bounds = array<i64: 32, 10>}, {pipeline_mode = #tpu.pipeline_mode<synchronous>, transform_indices = @transform_8, window_bounds = array<i64: 1, 10>}, {transform_indices = @transform_9, window_bounds = array<i64: 1, 1, 10>}, {transform_indices = @transform_10, window_bounds = array<i64: 1, 1, 256>}]} {
    %c0 = arith.constant 0 : index
    %c0_0 = arith.constant 0 : index
    %c0_1 = arith.constant 0 : index
    %c0_2 = arith.constant 0 : index
    %0 = vector.load %arg1[%c0, %c0_0, %c0_1, %c0_2] : memref<1x16x16x4xf32, #tpu.memory_space<vmem>>, vector<1x16x16x4xf32>
    %cst = arith.constant 0.000000e+00 : f32
    %1 = vector.broadcast %cst : f32 to vector<1x18x18x4xf32>
    %c0_3 = arith.constant 0 : index
    %c0_4 = arith.constant 0 : index
    %c0_5 = arith.constant 0 : index
    %c0_6 = arith.constant 0 : index
    %2 = vector.load %arg12[%c0_3, %c0_4, %c0_5, %c0_6] : memref<1x18x18x4xf32, #tpu.memory_space<vmem>>, vector<1x18x18x4xf32>
    tpu.vector_store %arg12[%c0_3, %c0_4, %c0_5, %c0_6], %1 {strides = array<i32>} : memref<1x18x18x4xf32, #tpu.memory_space<vmem>>, vector<1x18x18x4xf32>,
    %c0_7 = arith.constant 0 : index
    %c1 = arith.constant 1 : index
    %c1_8 = arith.constant 1 : index
    %c0_9 = arith.constant 0 : index
    %3 = vector.load %arg12[%c0_7, %c1, %c1_8, %c0_9] : memref<1x18x18x4xf32, #tpu.memory_space<vmem>>, vector<1x16x16x4xf32>
    tpu.vector_store %arg12[%c0_7, %c1, %c1_8, %c0_9], %0 {strides = array<i32>} : memref<1x18x18x4xf32, #tpu.memory_space<vmem>>, vector<1x16x16x4xf32>,
    %c0_10 = arith.constant 0 : index
    %c0_11 = arith.constant 0 : index
    %c0_12 = arith.constant 0 : index
    %c0_13 = arith.constant 0 : index
    %4 = vector.load %arg12[%c0_10, %c0_11, %c0_12, %c0_13] : memref<1x18x18x4xf32, #tpu.memory_space<vmem>>, vector<1x16x16x4xf32>
    %5 = vector.shape_cast %4 : vector<1x16x16x4xf32> to vector<256x4xf32>
    %c0_14 = arith.constant 0 : index
    %c0_15 = arith.constant 0 : index
    %c1_16 = arith.constant 1 : index
    %c0_17 = arith.constant 0 : index
    %6 = vector.load %arg12[%c0_14, %c0_15, %c1_16, %c0_17] : memref<1x18x18x4xf32, #tpu.memory_space<vmem>>, vector<1x16x16x4xf32>
    %7 = vector.shape_cast %6 : vector<1x16x16x4xf32> to vector<256x4xf32>
    %c0_18 = arith.constant 0 : index
    %c0_19 = arith.constant 0 : index
    %c2 = arith.constant 2 : index
    %c0_20 = arith.constant 0 : index
    %8 = vector.load %arg12[%c0_18, %c0_19, %c2, %c0_20] : memref<1x18x18x4xf32, #tpu.memory_space<vmem>>, vector<1x16x16x4xf32>
    %9 = vector.shape_cast %8 : vector<1x16x16x4xf32> to vector<256x4xf32>
    %c0_21 = arith.constant 0 : index
    %c1_22 = arith.constant 1 : index
    %c0_23 = arith.constant 0 : index
    %c0_24 = arith.constant 0 : index
    %10 = vector.load %arg12[%c0_21, %c1_22, %c0_23, %c0_24] : memref<1x18x18x4xf32, #tpu.memory_space<vmem>>, vector<1x16x16x4xf32>
    %11 = vector.shape_cast %10 : vector<1x16x16x4xf32> to vector<256x4xf32>
    %c0_25 = arith.constant 0 : index
    %c1_26 = arith.constant 1 : index
    %c1_27 = arith.constant 1 : index
    %c0_28 = arith.constant 0 : index
    %12 = vector.load %arg12[%c0_25, %c1_26, %c1_27, %c0_28] : memref<1x18x18x4xf32, #tpu.memory_space<vmem>>, vector<1x16x16x4xf32>
    %13 = vector.shape_cast %12 : vector<1x16x16x4xf32> to vector<256x4xf32>
    %c0_29 = arith.constant 0 : index
    %c1_30 = arith.constant 1 : index
    %c2_31 = arith.constant 2 : index
    %c0_32 = arith.constant 0 : index
    %14 = vector.load %arg12[%c0_29, %c1_30, %c2_31, %c0_32] : memref<1x18x18x4xf32, #tpu.memory_space<vmem>>, vector<1x16x16x4xf32>
    %15 = vector.shape_cast %14 : vector<1x16x16x4xf32> to vector<256x4xf32>
    %c0_33 = arith.constant 0 : index
    %c2_34 = arith.constant 2 : index
    %c0_35 = arith.constant 0 : index
    %c0_36 = arith.constant 0 : index
    %16 = vector.load %arg12[%c0_33, %c2_34, %c0_35, %c0_36] : memref<1x18x18x4xf32, #tpu.memory_space<vmem>>, vector<1x16x16x4xf32>
    %17 = vector.shape_cast %16 : vector<1x16x16x4xf32> to vector<256x4xf32>
    %c0_37 = arith.constant 0 : index
    %c2_38 = arith.constant 2 : index
    %c1_39 = arith.constant 1 : index
    %c0_40 = arith.constant 0 : index
    %18 = vector.load %arg12[%c0_37, %c2_38, %c1_39, %c0_40] : memref<1x18x18x4xf32, #tpu.memory_space<vmem>>, vector<1x16x16x4xf32>
    %19 = vector.shape_cast %18 : vector<1x16x16x4xf32> to vector<256x4xf32>
    %c0_41 = arith.constant 0 : index
    %c2_42 = arith.constant 2 : index
    %c2_43 = arith.constant 2 : index
    %c0_44 = arith.constant 0 : index
    %20 = vector.load %arg12[%c0_41, %c2_42, %c2_43, %c0_44] : memref<1x18x18x4xf32, #tpu.memory_space<vmem>>, vector<1x16x16x4xf32>
    %21 = vector.shape_cast %20 : vector<1x16x16x4xf32> to vector<256x4xf32>
    %22 = tpu.concatenate %5, %7, %9, %11, %13, %15, %17, %19, %21 in 1 : vector<256x4xf32>, vector<256x4xf32>, vector<256x4xf32>, vector<256x4xf32>, vector<256x4xf32>, vector<256x4xf32>, vector<256x4xf32>, vector<256x4xf32>, vector<256x4xf32> -> vector<256x36xf32>
    %23 = arith.truncf %22 : vector<256x36xf32> to vector<256x36xbf16>
    %c0_45 = arith.constant 0 : index
    %c0_46 = arith.constant 0 : index
    %24 = vector.load %arg2[%c0_45, %c0_46] : memref<36x8xbf16, #tpu.memory_space<vmem>>, vector<36x8xbf16>
    %cst_47 = arith.constant dense<0.000000e+00> : vector<256x8xf32>
    %25 = tpu.matmul %23, %24, %cst_47 {dimension_numbers = #tpu.dot_dimension_numbers<[1], [0], [0], [1], [0, 0, 1, 1], [], []>} : vector<256x36xbf16>, vector<36x8xbf16>, vector<256x8xf32> -> vector<256x8xf32>
    %c0_48 = arith.constant 0 : index
    %c0_49 = arith.constant 0 : index
    %26 = vector.load %arg3[%c0_48, %c0_49] : memref<1x8xf32, #tpu.memory_space<vmem>>, vector<1x8xf32>
    %27 = vector.broadcast %26 : vector<1x8xf32> to vector<256x8xf32>
    %28 = arith.addf %25, %27 : vector<256x8xf32>
    %cst_50 = arith.constant 0.000000e+00 : f32
    %29 = vector.broadcast %cst_50 : f32 to vector<256x8xf32>
    %30 = arith.maximumf %28, %29 : vector<256x8xf32>
    %31 = vector.shape_cast %30 : vector<256x8xf32> to vector<1x16x16x8xf32>
    %c0_51 = arith.constant 0 : index
    %c0_52 = arith.constant 0 : index
    %c0_53 = arith.constant 0 : index
    %c0_54 = arith.constant 0 : index
    %32 = vector.load %arg13[%c0_51, %c0_52, %c0_53, %c0_54] : memref<1x16x16x8xf32, #tpu.memory_space<vmem>>, vector<1x16x16x8xf32>
    tpu.vector_store %arg13[%c0_51, %c0_52, %c0_53, %c0_54], %31 {strides = array<i32>} : memref<1x16x16x8xf32, #tpu.memory_space<vmem>>, vector<1x16x16x8xf32>,
    %c0_55 = arith.constant 0 : index
    %c0_56 = arith.constant 0 : index
    %c0_57 = arith.constant 0 : index
    %c0_58 = arith.constant 0 : index
    %33 = tpu.strided_load %arg13[%c0_55, %c0_56, %c0_57, %c0_58] {strides = array<i32: 1, 2, 1, 1>} : memref<1x16x16x8xf32, #tpu.memory_space<vmem>>, vector<1x8x16x8xf32>
    %c0_59 = arith.constant 0 : index
    %c1_60 = arith.constant 1 : index
    %c0_61 = arith.constant 0 : index
    %c0_62 = arith.constant 0 : index
    %34 = tpu.strided_load %arg13[%c0_59, %c1_60, %c0_61, %c0_62] {strides = array<i32: 1, 2, 1, 1>} : memref<1x16x16x8xf32, #tpu.memory_space<vmem>>, vector<1x8x16x8xf32>
    %35 = arith.maximumf %33, %34 : vector<1x8x16x8xf32>
    %c0_63 = arith.constant 0 : index
    %c0_64 = arith.constant 0 : index
    %c0_65 = arith.constant 0 : index
    %c0_66 = arith.constant 0 : index
    %36 = vector.load %arg14[%c0_63, %c0_64, %c0_65, %c0_66] : memref<1x8x16x8xf32, #tpu.memory_space<vmem>>, vector<1x8x16x8xf32>
    tpu.vector_store %arg14[%c0_63, %c0_64, %c0_65, %c0_66], %35 {strides = array<i32>} : memref<1x8x16x8xf32, #tpu.memory_space<vmem>>, vector<1x8x16x8xf32>,
    %c0_67 = arith.constant 0 : index
    %c0_68 = arith.constant 0 : index
    %c0_69 = arith.constant 0 : index
    %c0_70 = arith.constant 0 : index
    %37 = tpu.strided_load %arg14[%c0_67, %c0_68, %c0_69, %c0_70] {strides = array<i32: 1, 1, 2, 1>} : memref<1x8x16x8xf32, #tpu.memory_space<vmem>>, vector<1x8x8x8xf32>
    %c0_71 = arith.constant 0 : index
    %c0_72 = arith.constant 0 : index
    %c1_73 = arith.constant 1 : index
    %c0_74 = arith.constant 0 : index
    %38 = tpu.strided_load %arg14[%c0_71, %c0_72, %c1_73, %c0_74] {strides = array<i32: 1, 1, 2, 1>} : memref<1x8x16x8xf32, #tpu.memory_space<vmem>>, vector<1x8x8x8xf32>
    %39 = arith.maximumf %37, %38 : vector<1x8x8x8xf32>
    %cst_75 = arith.constant 0.000000e+00 : f32
    %40 = vector.broadcast %cst_75 : f32 to vector<1x10x10x8xf32>
    %c0_76 = arith.constant 0 : index
    %c0_77 = arith.constant 0 : index
    %c0_78 = arith.constant 0 : index
    %c0_79 = arith.constant 0 : index
    %41 = vector.load %arg15[%c0_76, %c0_77, %c0_78, %c0_79] : memref<1x10x10x8xf32, #tpu.memory_space<vmem>>, vector<1x10x10x8xf32>
    tpu.vector_store %arg15[%c0_76, %c0_77, %c0_78, %c0_79], %40 {strides = array<i32>} : memref<1x10x10x8xf32, #tpu.memory_space<vmem>>, vector<1x10x10x8xf32>,
    %c0_80 = arith.constant 0 : index
    %c1_81 = arith.constant 1 : index
    %c1_82 = arith.constant 1 : index
    %c0_83 = arith.constant 0 : index
    %42 = vector.load %arg15[%c0_80, %c1_81, %c1_82, %c0_83] : memref<1x10x10x8xf32, #tpu.memory_space<vmem>>, vector<1x8x8x8xf32>
    tpu.vector_store %arg15[%c0_80, %c1_81, %c1_82, %c0_83], %39 {strides = array<i32>} : memref<1x10x10x8xf32, #tpu.memory_space<vmem>>, vector<1x8x8x8xf32>,
    %c0_84 = arith.constant 0 : index
    %c0_85 = arith.constant 0 : index
    %c0_86 = arith.constant 0 : index
    %c0_87 = arith.constant 0 : index
    %43 = vector.load %arg15[%c0_84, %c0_85, %c0_86, %c0_87] : memref<1x10x10x8xf32, #tpu.memory_space<vmem>>, vector<1x8x8x8xf32>
    %44 = vector.shape_cast %43 : vector<1x8x8x8xf32> to vector<64x8xf32>
    %c0_88 = arith.constant 0 : index
    %c0_89 = arith.constant 0 : index
    %c1_90 = arith.constant 1 : index
    %c0_91 = arith.constant 0 : index
    %45 = vector.load %arg15[%c0_88, %c0_89, %c1_90, %c0_91] : memref<1x10x10x8xf32, #tpu.memory_space<vmem>>, vector<1x8x8x8xf32>
    %46 = vector.shape_cast %45 : vector<1x8x8x8xf32> to vector<64x8xf32>
    %c0_92 = arith.constant 0 : index
    %c0_93 = arith.constant 0 : index
    %c2_94 = arith.constant 2 : index
    %c0_95 = arith.constant 0 : index
    %47 = vector.load %arg15[%c0_92, %c0_93, %c2_94, %c0_95] : memref<1x10x10x8xf32, #tpu.memory_space<vmem>>, vector<1x8x8x8xf32>
    %48 = vector.shape_cast %47 : vector<1x8x8x8xf32> to vector<64x8xf32>
    %c0_96 = arith.constant 0 : index
    %c1_97 = arith.constant 1 : index
    %c0_98 = arith.constant 0 : index
    %c0_99 = arith.constant 0 : index
    %49 = vector.load %arg15[%c0_96, %c1_97, %c0_98, %c0_99] : memref<1x10x10x8xf32, #tpu.memory_space<vmem>>, vector<1x8x8x8xf32>
    %50 = vector.shape_cast %49 : vector<1x8x8x8xf32> to vector<64x8xf32>
    %c0_100 = arith.constant 0 : index
    %c1_101 = arith.constant 1 : index
    %c1_102 = arith.constant 1 : index
    %c0_103 = arith.constant 0 : index
    %51 = vector.load %arg15[%c0_100, %c1_101, %c1_102, %c0_103] : memref<1x10x10x8xf32, #tpu.memory_space<vmem>>, vector<1x8x8x8xf32>
    %52 = vector.shape_cast %51 : vector<1x8x8x8xf32> to vector<64x8xf32>
    %c0_104 = arith.constant 0 : index
    %c1_105 = arith.constant 1 : index
    %c2_106 = arith.constant 2 : index
    %c0_107 = arith.constant 0 : index
    %53 = vector.load %arg15[%c0_104, %c1_105, %c2_106, %c0_107] : memref<1x10x10x8xf32, #tpu.memory_space<vmem>>, vector<1x8x8x8xf32>
    %54 = vector.shape_cast %53 : vector<1x8x8x8xf32> to vector<64x8xf32>
    %c0_108 = arith.constant 0 : index
    %c2_109 = arith.constant 2 : index
    %c0_110 = arith.constant 0 : index
    %c0_111 = arith.constant 0 : index
    %55 = vector.load %arg15[%c0_108, %c2_109, %c0_110, %c0_111] : memref<1x10x10x8xf32, #tpu.memory_space<vmem>>, vector<1x8x8x8xf32>
    %56 = vector.shape_cast %55 : vector<1x8x8x8xf32> to vector<64x8xf32>
    %c0_112 = arith.constant 0 : index
    %c2_113 = arith.constant 2 : index
    %c1_114 = arith.constant 1 : index
    %c0_115 = arith.constant 0 : index
    %57 = vector.load %arg15[%c0_112, %c2_113, %c1_114, %c0_115] : memref<1x10x10x8xf32, #tpu.memory_space<vmem>>, vector<1x8x8x8xf32>
    %58 = vector.shape_cast %57 : vector<1x8x8x8xf32> to vector<64x8xf32>
    %c0_116 = arith.constant 0 : index
    %c2_117 = arith.constant 2 : index
    %c2_118 = arith.constant 2 : index
    %c0_119 = arith.constant 0 : index
    %59 = vector.load %arg15[%c0_116, %c2_117, %c2_118, %c0_119] : memref<1x10x10x8xf32, #tpu.memory_space<vmem>>, vector<1x8x8x8xf32>
    %60 = vector.shape_cast %59 : vector<1x8x8x8xf32> to vector<64x8xf32>
    %61 = tpu.concatenate %44, %46, %48, %50, %52, %54, %56, %58, %60 in 1 : vector<64x8xf32>, vector<64x8xf32>, vector<64x8xf32>, vector<64x8xf32>, vector<64x8xf32>, vector<64x8xf32>, vector<64x8xf32>, vector<64x8xf32>, vector<64x8xf32> -> vector<64x72xf32>
    %62 = arith.truncf %61 : vector<64x72xf32> to vector<64x72xbf16>
    %c0_120 = arith.constant 0 : index
    %c0_121 = arith.constant 0 : index
    %63 = vector.load %arg4[%c0_120, %c0_121] : memref<72x16xbf16, #tpu.memory_space<vmem>>, vector<72x16xbf16>
    %cst_122 = arith.constant dense<0.000000e+00> : vector<64x16xf32>
    %64 = tpu.matmul %62, %63, %cst_122 {dimension_numbers = #tpu.dot_dimension_numbers<[1], [0], [0], [1], [0, 0, 1, 1], [], []>} : vector<64x72xbf16>, vector<72x16xbf16>, vector<64x16xf32> -> vector<64x16xf32>
    %c0_123 = arith.constant 0 : index
    %c0_124 = arith.constant 0 : index
    %65 = vector.load %arg5[%c0_123, %c0_124] : memref<1x16xf32, #tpu.memory_space<vmem>>, vector<1x16xf32>
    %66 = vector.broadcast %65 : vector<1x16xf32> to vector<64x16xf32>
    %67 = arith.addf %64, %66 : vector<64x16xf32>
    %cst_125 = arith.constant 0.000000e+00 : f32
    %68 = vector.broadcast %cst_125 : f32 to vector<64x16xf32>
    %69 = arith.maximumf %67, %68 : vector<64x16xf32>
    %70 = vector.shape_cast %69 : vector<64x16xf32> to vector<1x8x8x16xf32>
    %c0_126 = arith.constant 0 : index
    %c0_127 = arith.constant 0 : index
    %c0_128 = arith.constant 0 : index
    %c0_129 = arith.constant 0 : index
    %71 = vector.load %arg16[%c0_126, %c0_127, %c0_128, %c0_129] : memref<1x8x8x16xf32, #tpu.memory_space<vmem>>, vector<1x8x8x16xf32>
    tpu.vector_store %arg16[%c0_126, %c0_127, %c0_128, %c0_129], %70 {strides = array<i32>} : memref<1x8x8x16xf32, #tpu.memory_space<vmem>>, vector<1x8x8x16xf32>,
    %c0_130 = arith.constant 0 : index
    %c0_131 = arith.constant 0 : index
    %c0_132 = arith.constant 0 : index
    %c0_133 = arith.constant 0 : index
    %72 = tpu.strided_load %arg16[%c0_130, %c0_131, %c0_132, %c0_133] {strides = array<i32: 1, 2, 1, 1>} : memref<1x8x8x16xf32, #tpu.memory_space<vmem>>, vector<1x4x8x16xf32>
    %c0_134 = arith.constant 0 : index
    %c1_135 = arith.constant 1 : index
    %c0_136 = arith.constant 0 : index
    %c0_137 = arith.constant 0 : index
    %73 = tpu.strided_load %arg16[%c0_134, %c1_135, %c0_136, %c0_137] {strides = array<i32: 1, 2, 1, 1>} : memref<1x8x8x16xf32, #tpu.memory_space<vmem>>, vector<1x4x8x16xf32>
    %74 = arith.maximumf %72, %73 : vector<1x4x8x16xf32>
    %c0_138 = arith.constant 0 : index
    %c0_139 = arith.constant 0 : index
    %c0_140 = arith.constant 0 : index
    %c0_141 = arith.constant 0 : index
    %75 = vector.load %arg17[%c0_138, %c0_139, %c0_140, %c0_141] : memref<1x4x8x16xf32, #tpu.memory_space<vmem>>, vector<1x4x8x16xf32>
    tpu.vector_store %arg17[%c0_138, %c0_139, %c0_140, %c0_141], %74 {strides = array<i32>} : memref<1x4x8x16xf32, #tpu.memory_space<vmem>>, vector<1x4x8x16xf32>,
    %c0_142 = arith.constant 0 : index
    %c0_143 = arith.constant 0 : index
    %c0_144 = arith.constant 0 : index
    %c0_145 = arith.constant 0 : index
    %76 = tpu.strided_load %arg17[%c0_142, %c0_143, %c0_144, %c0_145] {strides = array<i32: 1, 1, 2, 1>} : memref<1x4x8x16xf32, #tpu.memory_space<vmem>>, vector<1x4x4x16xf32>
    %c0_146 = arith.constant 0 : index
    %c0_147 = arith.constant 0 : index
    %c1_148 = arith.constant 1 : index
    %c0_149 = arith.constant 0 : index
    %77 = tpu.strided_load %arg17[%c0_146, %c0_147, %c1_148, %c0_149] {strides = array<i32: 1, 1, 2, 1>} : memref<1x4x8x16xf32, #tpu.memory_space<vmem>>, vector<1x4x4x16xf32>
    %78 = arith.maximumf %76, %77 : vector<1x4x4x16xf32>
    %79 = vector.extract_strided_slice %78 {offsets = [0, 0, 0, 0], sizes = [1, 1, 1, 16], strides = [1, 1, 1, 1]} : vector<1x4x4x16xf32> to vector<1x1x1x16xf32>
    %80 = vector.shape_cast %79 : vector<1x1x1x16xf32> to vector<1x16xf32>
    %c0_150 = arith.constant 0 : index
    %c0_151 = arith.constant 0 : index
    %c0_152 = arith.constant 0 : index
    %81 = vector.load %arg11[%c0_150, %c0_151, %c0_152] : memref<1x1x256xf32, #tpu.memory_space<vmem>>, vector<1x1x16xf32>
    %82 = vector.shape_cast %81 : vector<1x1x16xf32> to vector<1x16xf32>
    %83 = vector.shape_cast %80 : vector<1x16xf32> to vector<1x1x16xf32>
    tpu.vector_store %arg11[%c0_150, %c0_151, %c0_152], %83 {strides = array<i32>} : memref<1x1x256xf32, #tpu.memory_space<vmem>>, vector<1x1x16xf32>,
    %84 = vector.extract_strided_slice %78 {offsets = [0, 0, 1, 0], sizes = [1, 1, 1, 16], strides = [1, 1, 1, 1]} : vector<1x4x4x16xf32> to vector<1x1x1x16xf32>
    %85 = vector.shape_cast %84 : vector<1x1x1x16xf32> to vector<1x16xf32>
    %c0_153 = arith.constant 0 : index
    %c0_154 = arith.constant 0 : index
    %c16 = arith.constant 16 : index
    %86 = vector.load %arg11[%c0_153, %c0_154, %c16] : memref<1x1x256xf32, #tpu.memory_space<vmem>>, vector<1x1x16xf32>
    %87 = vector.shape_cast %86 : vector<1x1x16xf32> to vector<1x16xf32>
    %88 = vector.shape_cast %85 : vector<1x16xf32> to vector<1x1x16xf32>
    tpu.vector_store %arg11[%c0_153, %c0_154, %c16], %88 {strides = array<i32>} : memref<1x1x256xf32, #tpu.memory_space<vmem>>, vector<1x1x16xf32>,
    %89 = vector.extract_strided_slice %78 {offsets = [0, 0, 2, 0], sizes = [1, 1, 1, 16], strides = [1, 1, 1, 1]} : vector<1x4x4x16xf32> to vector<1x1x1x16xf32>
    %90 = vector.shape_cast %89 : vector<1x1x1x16xf32> to vector<1x16xf32>
    %c0_155 = arith.constant 0 : index
    %c0_156 = arith.constant 0 : index
    %c32 = arith.constant 32 : index
    %91 = vector.load %arg11[%c0_155, %c0_156, %c32] : memref<1x1x256xf32, #tpu.memory_space<vmem>>, vector<1x1x16xf32>
    %92 = vector.shape_cast %91 : vector<1x1x16xf32> to vector<1x16xf32>
    %93 = vector.shape_cast %90 : vector<1x16xf32> to vector<1x1x16xf32>
    tpu.vector_store %arg11[%c0_155, %c0_156, %c32], %93 {strides = array<i32>} : memref<1x1x256xf32, #tpu.memory_space<vmem>>, vector<1x1x16xf32>,
    %94 = vector.extract_strided_slice %78 {offsets = [0, 0, 3, 0], sizes = [1, 1, 1, 16], strides = [1, 1, 1, 1]} : vector<1x4x4x16xf32> to vector<1x1x1x16xf32>
    %95 = vector.shape_cast %94 : vector<1x1x1x16xf32> to vector<1x16xf32>
    %c0_157 = arith.constant 0 : index
    %c0_158 = arith.constant 0 : index
    %c48 = arith.constant 48 : index
    %96 = vector.load %arg11[%c0_157, %c0_158, %c48] : memref<1x1x256xf32, #tpu.memory_space<vmem>>, vector<1x1x16xf32>
    %97 = vector.shape_cast %96 : vector<1x1x16xf32> to vector<1x16xf32>
    %98 = vector.shape_cast %95 : vector<1x16xf32> to vector<1x1x16xf32>
    tpu.vector_store %arg11[%c0_157, %c0_158, %c48], %98 {strides = array<i32>} : memref<1x1x256xf32, #tpu.memory_space<vmem>>, vector<1x1x16xf32>,
    %99 = vector.extract_strided_slice %78 {offsets = [0, 1, 0, 0], sizes = [1, 1, 1, 16], strides = [1, 1, 1, 1]} : vector<1x4x4x16xf32> to vector<1x1x1x16xf32>
    %100 = vector.shape_cast %99 : vector<1x1x1x16xf32> to vector<1x16xf32>
    %c0_159 = arith.constant 0 : index
    %c0_160 = arith.constant 0 : index
    %c64 = arith.constant 64 : index
    %101 = vector.load %arg11[%c0_159, %c0_160, %c64] : memref<1x1x256xf32, #tpu.memory_space<vmem>>, vector<1x1x16xf32>
    %102 = vector.shape_cast %101 : vector<1x1x16xf32> to vector<1x16xf32>
    %103 = vector.shape_cast %100 : vector<1x16xf32> to vector<1x1x16xf32>
    tpu.vector_store %arg11[%c0_159, %c0_160, %c64], %103 {strides = array<i32>} : memref<1x1x256xf32, #tpu.memory_space<vmem>>, vector<1x1x16xf32>,
    %104 = vector.extract_strided_slice %78 {offsets = [0, 1, 1, 0], sizes = [1, 1, 1, 16], strides = [1, 1, 1, 1]} : vector<1x4x4x16xf32> to vector<1x1x1x16xf32>
    %105 = vector.shape_cast %104 : vector<1x1x1x16xf32> to vector<1x16xf32>
    %c0_161 = arith.constant 0 : index
    %c0_162 = arith.constant 0 : index
    %c80 = arith.constant 80 : index
    %106 = vector.load %arg11[%c0_161, %c0_162, %c80] : memref<1x1x256xf32, #tpu.memory_space<vmem>>, vector<1x1x16xf32>
    %107 = vector.shape_cast %106 : vector<1x1x16xf32> to vector<1x16xf32>
    %108 = vector.shape_cast %105 : vector<1x16xf32> to vector<1x1x16xf32>
    tpu.vector_store %arg11[%c0_161, %c0_162, %c80], %108 {strides = array<i32>} : memref<1x1x256xf32, #tpu.memory_space<vmem>>, vector<1x1x16xf32>,
    %109 = vector.extract_strided_slice %78 {offsets = [0, 1, 2, 0], sizes = [1, 1, 1, 16], strides = [1, 1, 1, 1]} : vector<1x4x4x16xf32> to vector<1x1x1x16xf32>
    %110 = vector.shape_cast %109 : vector<1x1x1x16xf32> to vector<1x16xf32>
    %c0_163 = arith.constant 0 : index
    %c0_164 = arith.constant 0 : index
    %c96 = arith.constant 96 : index
    %111 = vector.load %arg11[%c0_163, %c0_164, %c96] : memref<1x1x256xf32, #tpu.memory_space<vmem>>, vector<1x1x16xf32>
    %112 = vector.shape_cast %111 : vector<1x1x16xf32> to vector<1x16xf32>
    %113 = vector.shape_cast %110 : vector<1x16xf32> to vector<1x1x16xf32>
    tpu.vector_store %arg11[%c0_163, %c0_164, %c96], %113 {strides = array<i32>} : memref<1x1x256xf32, #tpu.memory_space<vmem>>, vector<1x1x16xf32>,
    %114 = vector.extract_strided_slice %78 {offsets = [0, 1, 3, 0], sizes = [1, 1, 1, 16], strides = [1, 1, 1, 1]} : vector<1x4x4x16xf32> to vector<1x1x1x16xf32>
    %115 = vector.shape_cast %114 : vector<1x1x1x16xf32> to vector<1x16xf32>
    %c0_165 = arith.constant 0 : index
    %c0_166 = arith.constant 0 : index
    %c112 = arith.constant 112 : index
    %116 = vector.load %arg11[%c0_165, %c0_166, %c112] : memref<1x1x256xf32, #tpu.memory_space<vmem>>, vector<1x1x16xf32>
    %117 = vector.shape_cast %116 : vector<1x1x16xf32> to vector<1x16xf32>
    %118 = vector.shape_cast %115 : vector<1x16xf32> to vector<1x1x16xf32>
    tpu.vector_store %arg11[%c0_165, %c0_166, %c112], %118 {strides = array<i32>} : memref<1x1x256xf32, #tpu.memory_space<vmem>>, vector<1x1x16xf32>,
    %119 = vector.extract_strided_slice %78 {offsets = [0, 2, 0, 0], sizes = [1, 1, 1, 16], strides = [1, 1, 1, 1]} : vector<1x4x4x16xf32> to vector<1x1x1x16xf32>
    %120 = vector.shape_cast %119 : vector<1x1x1x16xf32> to vector<1x16xf32>
    %c0_167 = arith.constant 0 : index
    %c0_168 = arith.constant 0 : index
    %c128 = arith.constant 128 : index
    %121 = vector.load %arg11[%c0_167, %c0_168, %c128] : memref<1x1x256xf32, #tpu.memory_space<vmem>>, vector<1x1x16xf32>
    %122 = vector.shape_cast %121 : vector<1x1x16xf32> to vector<1x16xf32>
    %123 = vector.shape_cast %120 : vector<1x16xf32> to vector<1x1x16xf32>
    tpu.vector_store %arg11[%c0_167, %c0_168, %c128], %123 {strides = array<i32>} : memref<1x1x256xf32, #tpu.memory_space<vmem>>, vector<1x1x16xf32>,
    %124 = vector.extract_strided_slice %78 {offsets = [0, 2, 1, 0], sizes = [1, 1, 1, 16], strides = [1, 1, 1, 1]} : vector<1x4x4x16xf32> to vector<1x1x1x16xf32>
    %125 = vector.shape_cast %124 : vector<1x1x1x16xf32> to vector<1x16xf32>
    %c0_169 = arith.constant 0 : index
    %c0_170 = arith.constant 0 : index
    %c144 = arith.constant 144 : index
    %126 = vector.load %arg11[%c0_169, %c0_170, %c144] : memref<1x1x256xf32, #tpu.memory_space<vmem>>, vector<1x1x16xf32>
    %127 = vector.shape_cast %126 : vector<1x1x16xf32> to vector<1x16xf32>
    %128 = vector.shape_cast %125 : vector<1x16xf32> to vector<1x1x16xf32>
    tpu.vector_store %arg11[%c0_169, %c0_170, %c144], %128 {strides = array<i32>} : memref<1x1x256xf32, #tpu.memory_space<vmem>>, vector<1x1x16xf32>,
    %129 = vector.extract_strided_slice %78 {offsets = [0, 2, 2, 0], sizes = [1, 1, 1, 16], strides = [1, 1, 1, 1]} : vector<1x4x4x16xf32> to vector<1x1x1x16xf32>
    %130 = vector.shape_cast %129 : vector<1x1x1x16xf32> to vector<1x16xf32>
    %c0_171 = arith.constant 0 : index
    %c0_172 = arith.constant 0 : index
    %c160 = arith.constant 160 : index
    %131 = vector.load %arg11[%c0_171, %c0_172, %c160] : memref<1x1x256xf32, #tpu.memory_space<vmem>>, vector<1x1x16xf32>
    %132 = vector.shape_cast %131 : vector<1x1x16xf32> to vector<1x16xf32>
    %133 = vector.shape_cast %130 : vector<1x16xf32> to vector<1x1x16xf32>
    tpu.vector_store %arg11[%c0_171, %c0_172, %c160], %133 {strides = array<i32>} : memref<1x1x256xf32, #tpu.memory_space<vmem>>, vector<1x1x16xf32>,
    %134 = vector.extract_strided_slice %78 {offsets = [0, 2, 3, 0], sizes = [1, 1, 1, 16], strides = [1, 1, 1, 1]} : vector<1x4x4x16xf32> to vector<1x1x1x16xf32>
    %135 = vector.shape_cast %134 : vector<1x1x1x16xf32> to vector<1x16xf32>
    %c0_173 = arith.constant 0 : index
    %c0_174 = arith.constant 0 : index
    %c176 = arith.constant 176 : index
    %136 = vector.load %arg11[%c0_173, %c0_174, %c176] : memref<1x1x256xf32, #tpu.memory_space<vmem>>, vector<1x1x16xf32>
    %137 = vector.shape_cast %136 : vector<1x1x16xf32> to vector<1x16xf32>
    %138 = vector.shape_cast %135 : vector<1x16xf32> to vector<1x1x16xf32>
    tpu.vector_store %arg11[%c0_173, %c0_174, %c176], %138 {strides = array<i32>} : memref<1x1x256xf32, #tpu.memory_space<vmem>>, vector<1x1x16xf32>,
    %139 = vector.extract_strided_slice %78 {offsets = [0, 3, 0, 0], sizes = [1, 1, 1, 16], strides = [1, 1, 1, 1]} : vector<1x4x4x16xf32> to vector<1x1x1x16xf32>
    %140 = vector.shape_cast %139 : vector<1x1x1x16xf32> to vector<1x16xf32>
    %c0_175 = arith.constant 0 : index
    %c0_176 = arith.constant 0 : index
    %c192 = arith.constant 192 : index
    %141 = vector.load %arg11[%c0_175, %c0_176, %c192] : memref<1x1x256xf32, #tpu.memory_space<vmem>>, vector<1x1x16xf32>
    %142 = vector.shape_cast %141 : vector<1x1x16xf32> to vector<1x16xf32>
    %143 = vector.shape_cast %140 : vector<1x16xf32> to vector<1x1x16xf32>
    tpu.vector_store %arg11[%c0_175, %c0_176, %c192], %143 {strides = array<i32>} : memref<1x1x256xf32, #tpu.memory_space<vmem>>, vector<1x1x16xf32>,
    %144 = vector.extract_strided_slice %78 {offsets = [0, 3, 1, 0], sizes = [1, 1, 1, 16], strides = [1, 1, 1, 1]} : vector<1x4x4x16xf32> to vector<1x1x1x16xf32>
    %145 = vector.shape_cast %144 : vector<1x1x1x16xf32> to vector<1x16xf32>
    %c0_177 = arith.constant 0 : index
    %c0_178 = arith.constant 0 : index
    %c208 = arith.constant 208 : index
    %146 = vector.load %arg11[%c0_177, %c0_178, %c208] : memref<1x1x256xf32, #tpu.memory_space<vmem>>, vector<1x1x16xf32>
    %147 = vector.shape_cast %146 : vector<1x1x16xf32> to vector<1x16xf32>
    %148 = vector.shape_cast %145 : vector<1x16xf32> to vector<1x1x16xf32>
    tpu.vector_store %arg11[%c0_177, %c0_178, %c208], %148 {strides = array<i32>} : memref<1x1x256xf32, #tpu.memory_space<vmem>>, vector<1x1x16xf32>,
    %149 = vector.extract_strided_slice %78 {offsets = [0, 3, 2, 0], sizes = [1, 1, 1, 16], strides = [1, 1, 1, 1]} : vector<1x4x4x16xf32> to vector<1x1x1x16xf32>
    %150 = vector.shape_cast %149 : vector<1x1x1x16xf32> to vector<1x16xf32>
    %c0_179 = arith.constant 0 : index
    %c0_180 = arith.constant 0 : index
    %c224 = arith.constant 224 : index
    %151 = vector.load %arg11[%c0_179, %c0_180, %c224] : memref<1x1x256xf32, #tpu.memory_space<vmem>>, vector<1x1x16xf32>
    %152 = vector.shape_cast %151 : vector<1x1x16xf32> to vector<1x16xf32>
    %153 = vector.shape_cast %150 : vector<1x16xf32> to vector<1x1x16xf32>
    tpu.vector_store %arg11[%c0_179, %c0_180, %c224], %153 {strides = array<i32>} : memref<1x1x256xf32, #tpu.memory_space<vmem>>, vector<1x1x16xf32>,
    %154 = vector.extract_strided_slice %78 {offsets = [0, 3, 3, 0], sizes = [1, 1, 1, 16], strides = [1, 1, 1, 1]} : vector<1x4x4x16xf32> to vector<1x1x1x16xf32>
    %155 = vector.shape_cast %154 : vector<1x1x1x16xf32> to vector<1x16xf32>
    %c0_181 = arith.constant 0 : index
    %c0_182 = arith.constant 0 : index
    %c240 = arith.constant 240 : index
    %156 = vector.load %arg11[%c0_181, %c0_182, %c240] : memref<1x1x256xf32, #tpu.memory_space<vmem>>, vector<1x1x16xf32>
    %157 = vector.shape_cast %156 : vector<1x1x16xf32> to vector<1x16xf32>
    %158 = vector.shape_cast %155 : vector<1x16xf32> to vector<1x1x16xf32>
    tpu.vector_store %arg11[%c0_181, %c0_182, %c240], %158 {strides = array<i32>} : memref<1x1x256xf32, #tpu.memory_space<vmem>>, vector<1x1x16xf32>,
    %c0_183 = arith.constant 0 : index
    %c0_184 = arith.constant 0 : index
    %c0_185 = arith.constant 0 : index
    %159 = vector.load %arg11[%c0_183, %c0_184, %c0_185] : memref<1x1x256xf32, #tpu.memory_space<vmem>>, vector<1x1x256xf32>
    %160 = vector.shape_cast %159 : vector<1x1x256xf32> to vector<1x256xf32>
    %161 = arith.truncf %160 : vector<1x256xf32> to vector<1x256xbf16>
    %c0_186 = arith.constant 0 : index
    %c0_187 = arith.constant 0 : index
    %162 = vector.load %arg6[%c0_186, %c0_187] : memref<256x32xbf16, #tpu.memory_space<vmem>>, vector<256x32xbf16>
    %cst_188 = arith.constant dense<0.000000e+00> : vector<1x32xf32>
    %163 = tpu.matmul %161, %162, %cst_188 {dimension_numbers = #tpu.dot_dimension_numbers<[1], [0], [0], [1], [0, 0, 1, 1], [], []>} : vector<1x256xbf16>, vector<256x32xbf16>, vector<1x32xf32> -> vector<1x32xf32>
    %c0_189 = arith.constant 0 : index
    %c0_190 = arith.constant 0 : index
    %164 = vector.load %arg7[%c0_189, %c0_190] : memref<1x32xf32, #tpu.memory_space<vmem>>, vector<1x32xf32>
    %165 = arith.addf %163, %164 : vector<1x32xf32>
    %cst_191 = arith.constant 0.000000e+00 : f32
    %166 = vector.broadcast %cst_191 : f32 to vector<1x32xf32>
    %167 = arith.maximumf %165, %166 : vector<1x32xf32>
    %168 = arith.truncf %167 : vector<1x32xf32> to vector<1x32xbf16>
    %c0_192 = arith.constant 0 : index
    %c0_193 = arith.constant 0 : index
    %169 = vector.load %arg8[%c0_192, %c0_193] : memref<32x10xbf16, #tpu.memory_space<vmem>>, vector<32x10xbf16>
    %cst_194 = arith.constant dense<0.000000e+00> : vector<1x10xf32>
    %170 = tpu.matmul %168, %169, %cst_194 {dimension_numbers = #tpu.dot_dimension_numbers<[1], [0], [0], [1], [0, 0, 1, 1], [], []>} : vector<1x32xbf16>, vector<32x10xbf16>, vector<1x10xf32> -> vector<1x10xf32>
    %c0_195 = arith.constant 0 : index
    %c0_196 = arith.constant 0 : index
    %171 = vector.load %arg9[%c0_195, %c0_196] : memref<1x10xf32, #tpu.memory_space<vmem>>, vector<1x10xf32>
    %172 = arith.addf %170, %171 : vector<1x10xf32>
    %c0_197 = arith.constant 0 : index
    %c0_198 = arith.constant 0 : index
    %c0_199 = arith.constant 0 : index
    %173 = vector.load %arg10[%c0_197, %c0_198, %c0_199] : memref<1x1x10xf32, #tpu.memory_space<vmem>>, vector<1x1x10xf32>
    %174 = vector.shape_cast %173 : vector<1x1x10xf32> to vector<1x10xf32>
    %175 = vector.shape_cast %172 : vector<1x10xf32> to vector<1x1x10xf32>
    tpu.vector_store %arg10[%c0_197, %c0_198, %c0_199], %175 {strides = array<i32>} : memref<1x1x10xf32, #tpu.memory_space<vmem>>, vector<1x1x10xf32>,
    return
  }
  func.func @transform_0(%arg0: i32) -> (i32, i32, i32, i32) {
    %c0_i32 = arith.constant 0 : i32
    %c0_i32_0 = arith.constant 0 : i32
    %c0_i32_1 = arith.constant 0 : i32
    %c0_i32_2 = arith.constant 0 : i32
    return %arg0, %c0_i32, %c0_i32_0, %c0_i32_1 : i32, i32, i32, i32
  }
  func.func @transform_1(%arg0: i32) -> (i32, i32) {
    %c0_i32 = arith.constant 0 : i32
    %c0_i32_0 = arith.constant 0 : i32
    %c0_i32_1 = arith.constant 0 : i32
    return %c0_i32, %c0_i32_0 : i32, i32
  }
  func.func @transform_2(%arg0: i32) -> (i32, i32) {
    %c0_i32 = arith.constant 0 : i32
    %c0_i32_0 = arith.constant 0 : i32
    %c0_i32_1 = arith.constant 0 : i32
    return %c0_i32, %c0_i32_0 : i32, i32
  }
  func.func @transform_3(%arg0: i32) -> (i32, i32) {
    %c0_i32 = arith.constant 0 : i32
    %c0_i32_0 = arith.constant 0 : i32
    %c0_i32_1 = arith.constant 0 : i32
    return %c0_i32, %c0_i32_0 : i32, i32
  }
  func.func @transform_4(%arg0: i32) -> (i32, i32) {
    %c0_i32 = arith.constant 0 : i32
    %c0_i32_0 = arith.constant 0 : i32
    %c0_i32_1 = arith.constant 0 : i32
    return %c0_i32, %c0_i32_0 : i32, i32
  }
  func.func @transform_5(%arg0: i32) -> (i32, i32) {
    %c0_i32 = arith.constant 0 : i32
    %c0_i32_0 = arith.constant 0 : i32
    %c0_i32_1 = arith.constant 0 : i32
    return %c0_i32, %c0_i32_0 : i32, i32
  }
  func.func @transform_6(%arg0: i32) -> (i32, i32) {
    %c0_i32 = arith.constant 0 : i32
    %c0_i32_0 = arith.constant 0 : i32
    %c0_i32_1 = arith.constant 0 : i32
    return %c0_i32, %c0_i32_0 : i32, i32
  }
  func.func @transform_7(%arg0: i32) -> (i32, i32) {
    %c0_i32 = arith.constant 0 : i32
    %c0_i32_0 = arith.constant 0 : i32
    %c0_i32_1 = arith.constant 0 : i32
    return %c0_i32, %c0_i32_0 : i32, i32
  }
  func.func @transform_8(%arg0: i32) -> (i32, i32) {
    %c0_i32 = arith.constant 0 : i32
    %c0_i32_0 = arith.constant 0 : i32
    %c0_i32_1 = arith.constant 0 : i32
    return %c0_i32, %c0_i32_0 : i32, i32
  }
  func.func @transform_9(%arg0: i32) -> (i32, i32, i32) {
    %c0_i32 = arith.constant 0 : i32
    %c0_i32_0 = arith.constant 0 : i32
    %c0_i32_1 = arith.constant 0 : i32
    return %arg0, %c0_i32, %c0_i32_0 : i32, i32, i32
  }
  func.func @transform_10(%arg0: i32) -> (i32, i32, i32) {
    %c0_i32 = arith.constant 0 : i32
    %c0_i32_0 = arith.constant 0 : i32
    %c0_i32_1 = arith.constant 0 : i32
    return %arg0, %c0_i32, %c0_i32_0 : i32, i32, i32
  }
}

</mosaic_0001>

<llo_original>
// kernel: _lambda_.1
$region0: #{_lambda_.1}
  #allocation0 [shape = 'u32[]', space=smem, size = 0x4, offset = 0x4, fixed_abs, tag = 'smem constant byte address 0x4 - core index']
  #allocation1 [shape = 'u32[144,128]{1,0:T(1,128)}', space=vmem, size = 0x12000, scoped, tag = 'internal scratch']
  #allocation2 [shape = 'f32[1,18,18,4]{3,2,1,0:T(8,128)}', space=vmem, size = 0x36000, scoped, tag = 'scratch operand']
  #allocation3 [shape = 'f32[1,16,16,8]{3,2,1,0:T(8,128)}', space=vmem, size = 0x20000, scoped, tag = 'scratch operand']
  #allocation4 [shape = 'f32[1,8,16,8]{3,2,1,0:T(8,128)}', space=vmem, size = 0x10000, scoped, tag = 'scratch operand']
  #allocation5 [shape = 'f32[1,10,10,8]{3,2,1,0:T(8,128)}', space=vmem, size = 0x14000, scoped, tag = 'scratch operand']
  #allocation6 [shape = 'f32[1,8,8,16]{3,2,1,0:T(8,128)}', space=vmem, size = 0x8000, scoped, tag = 'scratch operand']
  #allocation7 [shape = 'f32[1,4,8,16]{3,2,1,0:T(8,128)}', space=vmem, size = 0x4000, scoped, tag = 'scratch operand']
  %s0 = inlined_call_operand.vmem [shape: f32[2,16,16,4], index: 0, kind: input, shape index: {}]
  %s1 = inlined_call_operand.vmem [shape: bf16[36,8], index: 1, kind: input, shape index: {}]
  %s2 = inlined_call_operand.vmem [shape: f32[1,8], index: 2, kind: input, shape index: {}]
  %s3 = inlined_call_operand.vmem [shape: bf16[72,16], index: 3, kind: input, shape index: {}]
  %s4 = inlined_call_operand.vmem [shape: f32[1,16], index: 4, kind: input, shape index: {}]
  %s5 = inlined_call_operand.vmem [shape: bf16[256,32], index: 5, kind: input, shape index: {}]
  %s6 = inlined_call_operand.vmem [shape: f32[1,32], index: 6, kind: input, shape index: {}]
  %s7 = inlined_call_operand.vmem [shape: bf16[32,10], index: 7, kind: input, shape index: {}]
  %s8 = inlined_call_operand.vmem [shape: f32[1,10], index: 8, kind: input, shape index: {}]
  %s9 = inlined_call_operand.hbm [shape: f32[2,1,10], index: 9, kind: output, shape index: {0}]
  %s10 = inlined_call_operand.vmem [shape: f32[2,1,256], index: 10, kind: output, shape index: {1}]
  %11 = xla_tuple %s9, %s10
  %s12 = sld [smem:[#allocation0]]
  $region77: #{_lambda_.1} parent=0
    _
  %s14 = ssub.s32 1, %s12
  %s15 = scalar_select 0, %s14, %s12
  $region1: #{_lambda_.1} parent=0
    #allocation8 [shape = 'u8[1024]{0}', space=vmem, size = 0x400, scoped, tag = 'output window, operand 0']
    #allocation9 [shape = 's32[2]{0}', space=sflag, size = 0x8, scoped, tag = 'scoped memory for _lambda_.1']
    %16 = vsyncpa [#allocation9], 0
    %s17 = scalar_lea.sflag [#allocation9], 1
    %18 = vsyncpa %s17, 0
    loop: start=0, step=1, limit=4
    $region2: #{_lambda_.1} parent=1 // loop_pre_header
      _
    $region3: #{_lambda_.1} parent=1 // loop_header
      %s20 = sphi 0, %s24
      %p21 = scmp.ge.s32.totalorder %s20, 4
      %s30 = sphi 0, %s32
      %s33 = sphi 0, %s30
      %s34 = sphi 0, %s33
      %s50 = sphi 0, %s34
      %s54 = sphi 0, %s54
      %s56 = sphi 0, %s54
      %s57 = sphi 0, %s56
      %s71 = sphi 0, %s57
      %s75 = sphi 0, %s75
      %s77 = sphi 0, %s75
      %s78 = sphi 0, %s77
      %s92 = sphi 0, %s78
      %s96 = sphi 0, %s96
      %s98 = sphi 0, %s96
      %s99 = sphi 0, %s98
      %s113 = sphi 0, %s99
      %s117 = sphi 0, %s117
      %s119 = sphi 0, %s117
      %s120 = sphi 0, %s119
      %s134 = sphi 0, %s120
      %s138 = sphi 0, %s138
      %s140 = sphi 0, %s138
      %s141 = sphi 0, %s140
      %s155 = sphi 0, %s141
      %s159 = sphi 0, %s159
      %s161 = sphi 0, %s159
      %s162 = sphi 0, %s161
      %s176 = sphi 0, %s162
      %s180 = sphi 0, %s180
      %s182 = sphi 0, %s180
      %s183 = sphi 0, %s182
      %s197 = sphi 0, %s183
      %s201 = sphi 0, %s201
      %s203 = sphi 0, %s201
      %s204 = sphi 0, %s203
      %s218 = sphi 0, %s204
      %s224 = sphi 0, %s226
      %s227 = sphi 0, %s224
      %s228 = sphi 0, %s227
      %s244 = sphi 0, %s228
      %s250 = sphi 0, %s252
      %s253 = sphi 0, %s250
      %s254 = sphi 0, %s253
      %s270 = sphi 0, %s254
    $region4: #{_lambda_.1} parent=1 // loop_header_branch
      %23 = sbr.rel (%p21) target = $region8
    $region5: #{_lambda_.1} parent=1 // loop_body
      %s25 = ssub.s32 %s20, 1
      %s26 = ssub.s32 %s20, 2
      %s27 = sadd.s32 %s20, 1
      %s28 = ssub.s32 %s20, %s27
      %p29 = scmp.eq.s32.totalorder %s28, 0
      %s31 = sadd.s32 %s30, 1
      %s32 = scalar_select %p29, %s30, %s31
      %p35 = pneg %p29
      %p36 = scmp.eq.s32.totalorder %s20, 1
      %p37 = por %p35, %p36
      %p38 = scmp.ne.s32.totalorder %s30, %s33
      %p39 = scmp.eq.s32.totalorder %s20, 0
      %p40 = por %p38, %p39
      %p41 = scmp.ne.s32.totalorder %s30, %s33
      %p42 = scmp.eq.s32.totalorder %s25, 1
      %p43 = por %p41, %p42
      %p44 = scmp.ne.s32.totalorder %s33, %s34
      %p45 = scmp.eq.s32.totalorder %s25, 0
      %p46 = por %p44, %p45
      %p47 = scmp.ne.s32.totalorder %s33, %s34
      %p48 = scmp.eq.s32.totalorder %s26, 1
      %p49 = por %p47, %p48
      %p51 = scmp.ne.s32.totalorder %s34, %s50
      %p52 = scmp.eq.s32.totalorder %s26, 0
      %p53 = por %p51, %p52
      %s55 = sadd.s32 %s54, 1
      %p58 = scmp.eq.s32.totalorder %s20, 1
      %p59 = scmp.ne.s32.totalorder %s54, %s56
      %p60 = scmp.eq.s32.totalorder %s20, 0
      %p61 = por %p59, %p60
      %p62 = scmp.ne.s32.totalorder %s54, %s56
      %p63 = scmp.eq.s32.totalorder %s25, 1
      %p64 = por %p62, %p63
      %p65 = scmp.ne.s32.totalorder %s56, %s57
      %p66 = scmp.eq.s32.totalorder %s25, 0
      %p67 = por %p65, %p66
      %p68 = scmp.ne.s32.totalorder %s56, %s57
      %p69 = scmp.eq.s32.totalorder %s26, 1
      %p70 = por %p68, %p69
      %p72 = scmp.ne.s32.totalorder %s57, %s71
      %p73 = scmp.eq.s32.totalorder %s26, 0
      %p74 = por %p72, %p73
      %s76 = sadd.s32 %s75, 1
      %p79 = scmp.eq.s32.totalorder %s20, 1
      %p80 = scmp.ne.s32.totalorder %s75, %s77
      %p81 = scmp.eq.s32.totalorder %s20, 0
      %p82 = por %p80, %p81
      %p83 = scmp.ne.s32.totalorder %s75, %s77
      %p84 = scmp.eq.s32.totalorder %s25, 1
      %p85 = por %p83, %p84
      %p86 = scmp.ne.s32.totalorder %s77, %s78
      %p87 = scmp.eq.s32.totalorder %s25, 0
      %p88 = por %p86, %p87
      %p89 = scmp.ne.s32.totalorder %s77, %s78
      %p90 = scmp.eq.s32.totalorder %s26, 1
      %p91 = por %p89, %p90
      %p93 = scmp.ne.s32.totalorder %s78, %s92
      %p94 = scmp.eq.s32.totalorder %s26, 0
      %p95 = por %p93, %p94
      %s97 = sadd.s32 %s96, 1
      %p100 = scmp.eq.s32.totalorder %s20, 1
      %p101 = scmp.ne.s32.totalorder %s96, %s98
      %p102 = scmp.eq.s32.totalorder %s20, 0
      %p103 = por %p101, %p102
      %p104 = scmp.ne.s32.totalorder %s96, %s98
      %p105 = scmp.eq.s32.totalorder %s25, 1
      %p106 = por %p104, %p105
      %p107 = scmp.ne.s32.totalorder %s98, %s99
      %p108 = scmp.eq.s32.totalorder %s25, 0
      %p109 = por %p107, %p108
      %p110 = scmp.ne.s32.totalorder %s98, %s99
      %p111 = scmp.eq.s32.totalorder %s26, 1
      %p112 = por %p110, %p111
      %p114 = scmp.ne.s32.totalorder %s99, %s113
      %p115 = scmp.eq.s32.totalorder %s26, 0
      %p116 = por %p114, %p115
      %s118 = sadd.s32 %s117, 1
      %p121 = scmp.eq.s32.totalorder %s20, 1
      %p122 = scmp.ne.s32.totalorder %s117, %s119
      %p123 = scmp.eq.s32.totalorder %s20, 0
      %p124 = por %p122, %p123
      %p125 = scmp.ne.s32.totalorder %s117, %s119
      %p126 = scmp.eq.s32.totalorder %s25, 1
      %p127 = por %p125, %p126
      %p128 = scmp.ne.s32.totalorder %s119, %s120
      %p129 = scmp.eq.s32.totalorder %s25, 0
      %p130 = por %p128, %p129
      %p131 = scmp.ne.s32.totalorder %s119, %s120
      %p132 = scmp.eq.s32.totalorder %s26, 1
      %p133 = por %p131, %p132
      %p135 = scmp.ne.s32.totalorder %s120, %s134
      %p136 = scmp.eq.s32.totalorder %s26, 0
      %p137 = por %p135, %p136
      %s139 = sadd.s32 %s138, 1
      %p142 = scmp.eq.s32.totalorder %s20, 1
      %p143 = scmp.ne.s32.totalorder %s138, %s140
      %p144 = scmp.eq.s32.totalorder %s20, 0
      %p145 = por %p143, %p144
      %p146 = scmp.ne.s32.totalorder %s138, %s140
      %p147 = scmp.eq.s32.totalorder %s25, 1
      %p148 = por %p146, %p147
      %p149 = scmp.ne.s32.totalorder %s140, %s141
      %p150 = scmp.eq.s32.totalorder %s25, 0
      %p151 = por %p149, %p150
      %p152 = scmp.ne.s32.totalorder %s140, %s141
      %p153 = scmp.eq.s32.totalorder %s26, 1
      %p154 = por %p152, %p153
      %p156 = scmp.ne.s32.totalorder %s141, %s155
      %p157 = scmp.eq.s32.totalorder %s26, 0
      %p158 = por %p156, %p157
      %s160 = sadd.s32 %s159, 1
      %p163 = scmp.eq.s32.totalorder %s20, 1
      %p164 = scmp.ne.s32.totalorder %s159, %s161
      %p165 = scmp.eq.s32.totalorder %s20, 0
      %p166 = por %p164, %p165
      %p167 = scmp.ne.s32.totalorder %s159, %s161
      %p168 = scmp.eq.s32.totalorder %s25, 1
      %p169 = por %p167, %p168
      %p170 = scmp.ne.s32.totalorder %s161, %s162
      %p171 = scmp.eq.s32.totalorder %s25, 0
      %p172 = por %p170, %p171
      %p173 = scmp.ne.s32.totalorder %s161, %s162
      %p174 = scmp.eq.s32.totalorder %s26, 1
      %p175 = por %p173, %p174
      %p177 = scmp.ne.s32.totalorder %s162, %s176
      %p178 = scmp.eq.s32.totalorder %s26, 0
      %p179 = por %p177, %p178
      %s181 = sadd.s32 %s180, 1
      %p184 = scmp.eq.s32.totalorder %s20, 1
      %p185 = scmp.ne.s32.totalorder %s180, %s182
      %p186 = scmp.eq.s32.totalorder %s20, 0
      %p187 = por %p185, %p186
      %p188 = scmp.ne.s32.totalorder %s180, %s182
      %p189 = scmp.eq.s32.totalorder %s25, 1
      %p190 = por %p188, %p189
      %p191 = scmp.ne.s32.totalorder %s182, %s183
      %p192 = scmp.eq.s32.totalorder %s25, 0
      %p193 = por %p191, %p192
      %p194 = scmp.ne.s32.totalorder %s182, %s183
      %p195 = scmp.eq.s32.totalorder %s26, 1
      %p196 = por %p194, %p195
      %p198 = scmp.ne.s32.totalorder %s183, %s197
      %p199 = scmp.eq.s32.totalorder %s26, 0
      %p200 = por %p198, %p199
      %s202 = sadd.s32 %s201, 1
      %p205 = scmp.eq.s32.totalorder %s20, 1
      %p206 = scmp.ne.s32.totalorder %s201, %s203
      %p207 = scmp.eq.s32.totalorder %s20, 0
      %p208 = por %p206, %p207
      %p209 = scmp.ne.s32.totalorder %s201, %s203
      %p210 = scmp.eq.s32.totalorder %s25, 1
      %p211 = por %p209, %p210
      %p212 = scmp.ne.s32.totalorder %s203, %s204
      %p213 = scmp.eq.s32.totalorder %s25, 0
      %p214 = por %p212, %p213
      %p215 = scmp.ne.s32.totalorder %s203, %s204
      %p216 = scmp.eq.s32.totalorder %s26, 1
      %p217 = por %p215, %p216
      %p219 = scmp.ne.s32.totalorder %s204, %s218
      %p220 = scmp.eq.s32.totalorder %s26, 0
      %p221 = por %p219, %p220
      %s222 = ssub.s32 %s20, %s27
      %p223 = scmp.eq.s32.totalorder %s222, 0
      %s225 = sadd.s32 %s224, 1
      %s226 = scalar_select %p223, %s224, %s225
      %p229 = pneg %p223
      %p230 = scmp.eq.s32.totalorder %s20, 1
      %p231 = por %p229, %p230
      %p232 = scmp.ne.s32.totalorder %s224, %s227
      %p233 = scmp.eq.s32.totalorder %s20, 0
      %p234 = por %p232, %p233
      %p235 = scmp.ne.s32.totalorder %s224, %s227
      %p236 = scmp.eq.s32.totalorder %s25, 1
      %p237 = por %p235, %p236
      %p238 = scmp.ne.s32.totalorder %s227, %s228
      %p239 = scmp.eq.s32.totalorder %s25, 0
      %p240 = por %p238, %p239
      %p241 = scmp.ne.s32.totalorder %s227, %s228
      %p242 = scmp.eq.s32.totalorder %s26, 1
      %p243 = por %p241, %p242
      %p245 = scmp.ne.s32.totalorder %s228, %s244
      %p246 = scmp.eq.s32.totalorder %s26, 0
      %p247 = por %p245, %p246
      %s248 = ssub.s32 %s20, %s27
      %p249 = scmp.eq.s32.totalorder %s248, 0
      %s251 = sadd.s32 %s250, 1
      %s252 = scalar_select %p249, %s250, %s251
      %p255 = pneg %p249
      %p256 = scmp.eq.s32.totalorder %s20, 1
      %p257 = por %p255, %p256
      %p258 = scmp.ne.s32.totalorder %s250, %s253
      %p259 = scmp.eq.s32.totalorder %s20, 0
      %p260 = por %p258, %p259
      %p261 = scmp.ne.s32.totalorder %s250, %s253
      %p262 = scmp.eq.s32.totalorder %s25, 1
      %p263 = por %p261, %p262
      %p264 = scmp.ne.s32.totalorder %s253, %s254
      %p265 = scmp.eq.s32.totalorder %s25, 0
      %p266 = por %p264, %p265
      %p267 = scmp.ne.s32.totalorder %s253, %s254
      %p268 = scmp.eq.s32.totalorder %s26, 1
      %p269 = por %p267, %p268
      %p271 = scmp.ne.s32.totalorder %s254, %s270
      %p272 = scmp.eq.s32.totalorder %s26, 0
      %p273 = por %p271, %p272
      %p274 = scmp.le.s32.totalorder 1, %s20
      %p275 = scmp.lt.s32.totalorder %s20, 3
      %p276 = pnand %p274, %p275
      %p277 = pneg %p276
      // Predicated region
      $region9: #{_lambda_.1} parent=5 // pred_check
        _
      $region10: #{_lambda_.1} parent=5 // pred_check_branch
        %279 = sbr.rel (%p276) target = $region12
      $region11: #{_lambda_.1} parent=5 // pred_region
        %s280 = ssub.s32 %s20, 1
        // Predicated region
        $region13: #{_lambda_.1} parent=11 // pred_check
          %p281 = pneg %p67
        $region14: #{_lambda_.1} parent=11 // pred_check_branch
          %283 = sbr.rel (%p281) target = $region16
        $region15: #{_lambda_.1} parent=11 // pred_region
          _
        $region16: #{_lambda_.1} parent=11 // pred_fallthru
          _
        // Predicated region
        $region17: #{_lambda_.1} parent=11 // pred_check
          %p284 = pneg %p88
        $region18: #{_lambda_.1} parent=11 // pred_check_branch
          %286 = sbr.rel (%p284) target = $region20
        $region19: #{_lambda_.1} parent=11 // pred_region
          _
        $region20: #{_lambda_.1} parent=11 // pred_fallthru
          _
        // Predicated region
        $region21: #{_lambda_.1} parent=11 // pred_check
          %p287 = pneg %p109
        $region22: #{_lambda_.1} parent=11 // pred_check_branch
          %289 = sbr.rel (%p287) target = $region24
        $region23: #{_lambda_.1} parent=11 // pred_region
          _
        $region24: #{_lambda_.1} parent=11 // pred_fallthru
          _
        // Predicated region
        $region25: #{_lambda_.1} parent=11 // pred_check
          %p290 = pneg %p130
        $region26: #{_lambda_.1} parent=11 // pred_check_branch
          %292 = sbr.rel (%p290) target = $region28
        $region27: #{_lambda_.1} parent=11 // pred_region
          _
        $region28: #{_lambda_.1} parent=11 // pred_fallthru
          _
        // Predicated region
        $region29: #{_lambda_.1} parent=11 // pred_check
          %p293 = pneg %p151
        $region30: #{_lambda_.1} parent=11 // pred_check_branch
          %295 = sbr.rel (%p293) target = $region32
        $region31: #{_lambda_.1} parent=11 // pred_region
          _
        $region32: #{_lambda_.1} parent=11 // pred_fallthru
          _
        // Predicated region
        $region33: #{_lambda_.1} parent=11 // pred_check
          %p296 = pneg %p172
        $region34: #{_lambda_.1} parent=11 // pred_check_branch
          %298 = sbr.rel (%p296) target = $region36
        $region35: #{_lambda_.1} parent=11 // pred_region
          _
        $region36: #{_lambda_.1} parent=11 // pred_fallthru
          _
        // Predicated region
        $region37: #{_lambda_.1} parent=11 // pred_check
          %p299 = pneg %p193
        $region38: #{_lambda_.1} parent=11 // pred_check_branch
          %301 = sbr.rel (%p299) target = $region40
        $region39: #{_lambda_.1} parent=11 // pred_region
          _
        $region40: #{_lambda_.1} parent=11 // pred_fallthru
          _
        // Predicated region
        $region41: #{_lambda_.1} parent=11 // pred_check
          %p302 = pneg %p214
        $region42: #{_lambda_.1} parent=11 // pred_check_branch
          %304 = sbr.rel (%p302) target = $region44
        $region43: #{_lambda_.1} parent=11 // pred_region
          _
        $region44: #{_lambda_.1} parent=11 // pred_fallthru
          _
      $region12: #{_lambda_.1} parent=5 // pred_fallthru
        _
      %p305 = scmp.lt.s32.totalorder %s20, 2
      // Predicated region
      $region45: #{_lambda_.1} parent=5 // pred_check
        %p306 = pneg %p305
      $region46: #{_lambda_.1} parent=5 // pred_check_branch
        %308 = sbr.rel (%p306) target = $region48
      $region47: #{_lambda_.1} parent=5 // pred_region
        // Predicated region
        $region49: #{_lambda_.1} parent=47 // pred_check
          %p309 = pneg %p40
        $region50: #{_lambda_.1} parent=47 // pred_check_branch
          %311 = sbr.rel (%p309) target = $region52
        $region51: #{_lambda_.1} parent=47 // pred_region
          %p312 = scmp.lt.s32.totalorder %s20, 1
          %s313 = scalar_select %p312, %s20, 1
          %s314 = smul.addr %s313, 32
          %s315 = smul.addr %s314, 8
          %s316 = scalar_lea.vmem %s0, %s315
        $region52: #{_lambda_.1} parent=47 // pred_fallthru
          _
      $region48: #{_lambda_.1} parent=5 // pred_fallthru
        _
      %p317 = scmp.le.s32.totalorder 1, %s20
      %p318 = scmp.lt.s32.totalorder %s20, 3
      %p319 = pnand %p317, %p318
      %p320 = pneg %p319
      // Predicated region
      $region53: #{_lambda_.1} parent=5 // pred_check
        _
      $region54: #{_lambda_.1} parent=5 // pred_check_branch
        %322 = sbr.rel (%p319) target = $region56
      $region55: #{_lambda_.1} parent=5 // pred_region
        %s323 = ssub.s32 %s20, 1
        %p324 = scmp.lt.s32.totalorder %s25, 1
        %s325 = scalar_select %p324, %s25, 1
        %s326 = smul.addr %s325, 32
        %s327 = smul.addr %s326, 8
        %s328 = scalar_lea.vmem %s0, %s327
        %p329 = pneg %p46
        %p330 = pneg %p43
        %p331 = pneg %p67
        %p332 = pneg %p64
        %p333 = pneg %p88
        %p334 = pneg %p85
        %p335 = pneg %p109
        %p336 = pneg %p106
        %p337 = pneg %p130
        %p338 = pneg %p127
        %p339 = pneg %p151
        %p340 = pneg %p148
        %p341 = pneg %p172
        %p342 = pneg %p169
        %p343 = pneg %p193
        %p344 = pneg %p190
        %p345 = pneg %p214
        %p346 = pneg %p211
        %p347 = pneg %p240
        %p348 = pneg %p237
        %s349 = sand.u32 %s227, 1
        %s350 = scalar_lea.sflag [#allocation9], %s349
        %s351 = sand.u32 %s227, 1
        %s352 = scalar_lea.vmem [#allocation8], %s351
        %p353 = pneg %p266
        %p354 = pneg %p263
        %p355 = scmp.lt.s32.totalorder %s25, 1
        %s356 = scalar_select %p355, %s25, 1
        %s357 = smul.addr %s356, 2
        %s358 = scalar_lea.vmem %s10, %s357
        %p359 = scmp.lt.s32.totalorder %s25, 1
        %s360 = scalar_select %p359, %s25, 1
        %s361 = smul.addr %s360, 32
        %s362 = smul.addr %s361, 8
        %s363 = scalar_lea.vmem %s0, %s362
        %p364 = scmp.lt.s32.totalorder %s25, 1
        %s365 = scalar_select %p364, %s25, 1
        %s366 = smul.addr %s365, 2
        %s367 = scalar_lea.vmem %s10, %s366
        %v369 = vld [vmem:[%s363] sm:$0xff]
        %v370 = vld [vmem:[%s363 + $0x8] sm:$0xff]
        %v371 = vld [vmem:[%s363 + $0x10] sm:$0xff]
        %v372 = vld [vmem:[%s363 + $0x18] sm:$0xff]
        %v373 = vld [vmem:[%s363 + $0x20] sm:$0xff]
        %v374 = vld [vmem:[%s363 + $0x28] sm:$0xff]
        %v375 = vld [vmem:[%s363 + $0x30] sm:$0xff]
        %v376 = vld [vmem:[%s363 + $0x38] sm:$0xff]
        %v377 = vld [vmem:[%s363 + $0x40] sm:$0xff]
        %v378 = vld [vmem:[%s363 + $0x48] sm:$0xff]
        %v379 = vld [vmem:[%s363 + $0x50] sm:$0xff]
        %v380 = vld [vmem:[%s363 + $0x58] sm:$0xff]
        %v381 = vld [vmem:[%s363 + $0x60] sm:$0xff]
        %v382 = vld [vmem:[%s363 + $0x68] sm:$0xff]
        %v383 = vld [vmem:[%s363 + $0x70] sm:$0xff]
        %v384 = vld [vmem:[%s363 + $0x78] sm:$0xff]
        %v385 = vld [vmem:[%s363 + $0x80] sm:$0xff]
        %v386 = vld [vmem:[%s363 + $0x88] sm:$0xff]
        %v387 = vld [vmem:[%s363 + $0x90] sm:$0xff]
        %v388 = vld [vmem:[%s363 + $0x98] sm:$0xff]
        %v389 = vld [vmem:[%s363 + $0xa0] sm:$0xff]
        %v390 = vld [vmem:[%s363 + $0xa8] sm:$0xff]
        %v391 = vld [vmem:[%s363 + $0xb0] sm:$0xff]
        %v392 = vld [vmem:[%s363 + $0xb8] sm:$0xff]
        %v393 = vld [vmem:[%s363 + $0xc0] sm:$0xff]
        %v394 = vld [vmem:[%s363 + $0xc8] sm:$0xff]
        %v395 = vld [vmem:[%s363 + $0xd0] sm:$0xff]
        %v396 = vld [vmem:[%s363 + $0xd8] sm:$0xff]
        %v397 = vld [vmem:[%s363 + $0xe0] sm:$0xff]
        %v398 = vld [vmem:[%s363 + $0xe8] sm:$0xff]
        %v399 = vld [vmem:[%s363 + $0xf0] sm:$0xff]
        %v400 = vld [vmem:[%s363 + $0xf8] sm:$0xff]
        %vm401 = vcmask 31744
        %402 = vst.msk [vmem:[#allocation2] sm:$0xff] %vm401, 0.0
        %403 = vst.msk [vmem:[#allocation2 + $0x8] sm:$0xff] %vm401, 0.0
        %vm404 = vcmask 25600
        %405 = vst.msk [vmem:[#allocation2 + $0x10] sm:$0x3] %vm404, 0.0
        %406 = vst.msk [vmem:[#allocation2 + $0x18] sm:$0xff] %vm401, 0.0
        %407 = vst.msk [vmem:[#allocation2 + $0x20] sm:$0xff] %vm401, 0.0
        %408 = vst.msk [vmem:[#allocation2 + $0x28] sm:$0x3] %vm404, 0.0
        %409 = vst.msk [vmem:[#allocation2 + $0x30] sm:$0xff] %vm401, 0.0
        %410 = vst.msk [vmem:[#allocation2 + $0x38] sm:$0xff] %vm401, 0.0
        %411 = vst.msk [vmem:[#allocation2 + $0x40] sm:$0x3] %vm404, 0.0
        %412 = vst.msk [vmem:[#allocation2 + $0x48] sm:$0xff] %vm401, 0.0
        %413 = vst.msk [vmem:[#allocation2 + $0x50] sm:$0xff] %vm401, 0.0
        %414 = vst.msk [vmem:[#allocation2 + $0x58] sm:$0x3] %vm404, 0.0
        %415 = vst.msk [vmem:[#allocation2 + $0x60] sm:$0xff] %vm401, 0.0
        %416 = vst.msk [vmem:[#allocation2 + $0x68] sm:$0xff] %vm401, 0.0
        %417 = vst.msk [vmem:[#allocation2 + $0x70] sm:$0x3] %vm404, 0.0
        %418 = vst.msk [vmem:[#allocation2 + $0x78] sm:$0xff] %vm401, 0.0
        %419 = vst.msk [vmem:[#allocation2 + $0x80] sm:$0xff] %vm401, 0.0
        %420 = vst.msk [vmem:[#allocation2 + $0x88] sm:$0x3] %vm404, 0.0
        %421 = vst.msk [vmem:[#allocation2 + $0x90] sm:$0xff] %vm401, 0.0
        %422 = vst.msk [vmem:[#allocation2 + $0x98] sm:$0xff] %vm401, 0.0
        %423 = vst.msk [vmem:[#allocation2 + $0xa0] sm:$0x3] %vm404, 0.0
        %424 = vst.msk [vmem:[#allocation2 + $0xa8] sm:$0xff] %vm401, 0.0
        %425 = vst.msk [vmem:[#allocation2 + $0xb0] sm:$0xff] %vm401, 0.0
        %426 = vst.msk [vmem:[#allocation2 + $0xb8] sm:$0x3] %vm404, 0.0
        %427 = vst.msk [vmem:[#allocation2 + $0xc0] sm:$0xff] %vm401, 0.0
        %428 = vst.msk [vmem:[#allocation2 + $0xc8] sm:$0xff] %vm401, 0.0
        %429 = vst.msk [vmem:[#allocation2 + $0xd0] sm:$0x3] %vm404, 0.0
        %430 = vst.msk [vmem:[#allocation2 + $0xd8] sm:$0xff] %vm401, 0.0
        %431 = vst.msk [vmem:[#allocation2 + $0xe0] sm:$0xff] %vm401, 0.0
        %432 = vst.msk [vmem:[#allocation2 + $0xe8] sm:$0x3] %vm404, 0.0
        %433 = vst.msk [vmem:[#allocation2 + $0xf0] sm:$0xff] %vm401, 0.0
        %434 = vst.msk [vmem:[#allocation2 + $0xf8] sm:$0xff] %vm401, 0.0
        %435 = vst.msk [vmem:[#allocation2 + $0x100] sm:$0x3] %vm404, 0.0
        %436 = vst.msk [vmem:[#allocation2 + $0x108] sm:$0xff] %vm401, 0.0
        %437 = vst.msk [vmem:[#allocation2 + $0x110] sm:$0xff] %vm401, 0.0
        %438 = vst.msk [vmem:[#allocation2 + $0x118] sm:$0x3] %vm404, 0.0
        %439 = vst.msk [vmem:[#allocation2 + $0x120] sm:$0xff] %vm401, 0.0
        %440 = vst.msk [vmem:[#allocation2 + $0x128] sm:$0xff] %vm401, 0.0
        %441 = vst.msk [vmem:[#allocation2 + $0x130] sm:$0x3] %vm404, 0.0
        %442 = vst.msk [vmem:[#allocation2 + $0x138] sm:$0xff] %vm401, 0.0
        %443 = vst.msk [vmem:[#allocation2 + $0x140] sm:$0xff] %vm401, 0.0
        %444 = vst.msk [vmem:[#allocation2 + $0x148] sm:$0x3] %vm404, 0.0
        %445 = vst.msk [vmem:[#allocation2 + $0x150] sm:$0xff] %vm401, 0.0
        %446 = vst.msk [vmem:[#allocation2 + $0x158] sm:$0xff] %vm401, 0.0
        %447 = vst.msk [vmem:[#allocation2 + $0x160] sm:$0x3] %vm404, 0.0
        %448 = vst.msk [vmem:[#allocation2 + $0x168] sm:$0xff] %vm401, 0.0
        %449 = vst.msk [vmem:[#allocation2 + $0x170] sm:$0xff] %vm401, 0.0
        %450 = vst.msk [vmem:[#allocation2 + $0x178] sm:$0x3] %vm404, 0.0
        %451 = vst.msk [vmem:[#allocation2 + $0x180] sm:$0xff] %vm401, 0.0
        %452 = vst.msk [vmem:[#allocation2 + $0x188] sm:$0xff] %vm401, 0.0
        %453 = vst.msk [vmem:[#allocation2 + $0x190] sm:$0x3] %vm404, 0.0
        %454 = vst.msk [vmem:[#allocation2 + $0x198] sm:$0xff] %vm401, 0.0
        %455 = vst.msk [vmem:[#allocation2 + $0x1a0] sm:$0xff] %vm401, 0.0
        %456 = vst.msk [vmem:[#allocation2 + $0x1a8] sm:$0x3] %vm404, 0.0
        %s457 = scalar_lea.vmem [#allocation2], 24
        %458 = vst.msk [vmem:[%s457 + $0x1] sm:$0xff] %vm401, %v369
        %459 = vst.msk [vmem:[%s457 + $0x9] sm:$0xff] %vm401, %v370
        %460 = vst.msk [vmem:[%s457 + $0x19] sm:$0xff] %vm401, %v371
        %461 = vst.msk [vmem:[%s457 + $0x21] sm:$0xff] %vm401, %v372
        %462 = vst.msk [vmem:[%s457 + $0x31] sm:$0xff] %vm401, %v373
        %463 = vst.msk [vmem:[%s457 + $0x39] sm:$0xff] %vm401, %v374
        %464 = vst.msk [vmem:[%s457 + $0x49] sm:$0xff] %vm401, %v375
        %465 = vst.msk [vmem:[%s457 + $0x51] sm:$0xff] %vm401, %v376
        %466 = vst.msk [vmem:[%s457 + $0x61] sm:$0xff] %vm401, %v377
        %467 = vst.msk [vmem:[%s457 + $0x69] sm:$0xff] %vm401, %v378
        %468 = vst.msk [vmem:[%s457 + $0x79] sm:$0xff] %vm401, %v379
        %469 = vst.msk [vmem:[%s457 + $0x81] sm:$0xff] %vm401, %v380
        %470 = vst.msk [vmem:[%s457 + $0x91] sm:$0xff] %vm401, %v381
        %471 = vst.msk [vmem:[%s457 + $0x99] sm:$0xff] %vm401, %v382
        %472 = vst.msk [vmem:[%s457 + $0xa9] sm:$0xff] %vm401, %v383
        %473 = vst.msk [vmem:[%s457 + $0xb1] sm:$0xff] %vm401, %v384
        %474 = vst.msk [vmem:[%s457 + $0xc1] sm:$0xff] %vm401, %v385
        %475 = vst.msk [vmem:[%s457 + $0xc9] sm:$0xff] %vm401, %v386
        %476 = vst.msk [vmem:[%s457 + $0xd9] sm:$0xff] %vm401, %v387
        %477 = vst.msk [vmem:[%s457 + $0xe1] sm:$0xff] %vm401, %v388
        %478 = vst.msk [vmem:[%s457 + $0xf1] sm:$0xff] %vm401, %v389
        %479 = vst.msk [vmem:[%s457 + $0xf9] sm:$0xff] %vm401, %v390
        %480 = vst.msk [vmem:[%s457 + $0x109] sm:$0xff] %vm401, %v391
        %481 = vst.msk [vmem:[%s457 + $0x111] sm:$0xff] %vm401, %v392
        %482 = vst.msk [vmem:[%s457 + $0x121] sm:$0xff] %vm401, %v393
        %483 = vst.msk [vmem:[%s457 + $0x129] sm:$0xff] %vm401, %v394
        %484 = vst.msk [vmem:[%s457 + $0x139] sm:$0xff] %vm401, %v395
        %485 = vst.msk [vmem:[%s457 + $0x141] sm:$0xff] %vm401, %v396
        %486 = vst.msk [vmem:[%s457 + $0x151] sm:$0xff] %vm401, %v397
        %487 = vst.msk [vmem:[%s457 + $0x159] sm:$0xff] %vm401, %v398
        %488 = vst.msk [vmem:[%s457 + $0x169] sm:$0xff] %vm401, %v399
        %489 = vst.msk [vmem:[%s457 + $0x171] sm:$0xff] %vm401, %v400
        %v490 = vld [vmem:[#allocation2] sm:$0xff]
        %v491 = vld [vmem:[#allocation2 + $0x8] sm:$0xff]
        %v492 = vld [vmem:[#allocation2 + $0x18] sm:$0xff]
        %v493 = vld [vmem:[#allocation2 + $0x20] sm:$0xff]
        %v494 = vld [vmem:[#allocation2 + $0x30] sm:$0xff]
        %v495 = vld [vmem:[#allocation2 + $0x38] sm:$0xff]
        %v496 = vld [vmem:[#allocation2 + $0x48] sm:$0xff]
        %v497 = vld [vmem:[#allocation2 + $0x50] sm:$0xff]
        %v498 = vld [vmem:[#allocation2 + $0x60] sm:$0xff]
        %v499 = vld [vmem:[#allocation2 + $0x68] sm:$0xff]
        %v500 = vld [vmem:[#allocation2 + $0x78] sm:$0xff]
        %v501 = vld [vmem:[#allocation2 + $0x80] sm:$0xff]
        %v502 = vld [vmem:[#allocation2 + $0x90] sm:$0xff]
        %v503 = vld [vmem:[#allocation2 + $0x98] sm:$0xff]
        %v504 = vld [vmem:[#allocation2 + $0xa8] sm:$0xff]
        %v505 = vld [vmem:[#allocation2 + $0xb0] sm:$0xff]
        %v506 = vld [vmem:[#allocation2 + $0xc0] sm:$0xff]
        %v507 = vld [vmem:[#allocation2 + $0xc8] sm:$0xff]
        %v508 = vld [vmem:[#allocation2 + $0xd8] sm:$0xff]
        %v509 = vld [vmem:[#allocation2 + $0xe0] sm:$0xff]
        %v510 = vld [vmem:[#allocation2 + $0xf0] sm:$0xff]
        %v511 = vld [vmem:[#allocation2 + $0xf8] sm:$0xff]
        %v512 = vld [vmem:[#allocation2 + $0x108] sm:$0xff]
        %v513 = vld [vmem:[#allocation2 + $0x110] sm:$0xff]
        %v514 = vld [vmem:[#allocation2 + $0x120] sm:$0xff]
        %v515 = vld [vmem:[#allocation2 + $0x128] sm:$0xff]
        %v516 = vld [vmem:[#allocation2 + $0x138] sm:$0xff]
        %v517 = vld [vmem:[#allocation2 + $0x140] sm:$0xff]
        %v518 = vld [vmem:[#allocation2 + $0x150] sm:$0xff]
        %v519 = vld [vmem:[#allocation2 + $0x158] sm:$0xff]
        %v520 = vld [vmem:[#allocation2 + $0x168] sm:$0xff]
        %v521 = vld [vmem:[#allocation2 + $0x170] sm:$0xff]
        %v522 = vld [vmem:[#allocation2 + $0x1] sm:$0xff]
        %v523 = vld [vmem:[#allocation2 + $0x9] sm:$0xff]
        %v524 = vld [vmem:[#allocation2 + $0x19] sm:$0xff]
        %v525 = vld [vmem:[#allocation2 + $0x21] sm:$0xff]
        %v526 = vld [vmem:[#allocation2 + $0x31] sm:$0xff]
        %v527 = vld [vmem:[#allocation2 + $0x39] sm:$0xff]
        %v528 = vld [vmem:[#allocation2 + $0x49] sm:$0xff]
        %v529 = vld [vmem:[#allocation2 + $0x51] sm:$0xff]
        %v530 = vld [vmem:[#allocation2 + $0x61] sm:$0xff]
        %v531 = vld [vmem:[#allocation2 + $0x69] sm:$0xff]
        %v532 = vld [vmem:[#allocation2 + $0x79] sm:$0xff]
        %v533 = vld [vmem:[#allocation2 + $0x81] sm:$0xff]
        %v534 = vld [vmem:[#allocation2 + $0x91] sm:$0xff]
        %v535 = vld [vmem:[#allocation2 + $0x99] sm:$0xff]
        %v536 = vld [vmem:[#allocation2 + $0xa9] sm:$0xff]
        %v537 = vld [vmem:[#allocation2 + $0xb1] sm:$0xff]
        %v538 = vld [vmem:[#allocation2 + $0xc1] sm:$0xff]
        %v539 = vld [vmem:[#allocation2 + $0xc9] sm:$0xff]
        %v540 = vld [vmem:[#allocation2 + $0xd9] sm:$0xff]
        %v541 = vld [vmem:[#allocation2 + $0xe1] sm:$0xff]
        %v542 = vld [vmem:[#allocation2 + $0xf1] sm:$0xff]
        %v543 = vld [vmem:[#allocation2 + $0xf9] sm:$0xff]
        %v544 = vld [vmem:[#allocation2 + $0x109] sm:$0xff]
        %v545 = vld [vmem:[#allocation2 + $0x111] sm:$0xff]
        %v546 = vld [vmem:[#allocation2 + $0x121] sm:$0xff]
        %v547 = vld [vmem:[#allocation2 + $0x129] sm:$0xff]
        %v548 = vld [vmem:[#allocation2 + $0x139] sm:$0xff]
        %v549 = vld [vmem:[#allocation2 + $0x141] sm:$0xff]
        %v550 = vld [vmem:[#allocation2 + $0x151] sm:$0xff]
        %v551 = vld [vmem:[#allocation2 + $0x159] sm:$0xff]
        %v552 = vld [vmem:[#allocation2 + $0x169] sm:$0xff]
        %v553 = vld [vmem:[#allocation2 + $0x171] sm:$0xff]
        %v554 = vld [vmem:[#allocation2 + $0x2] sm:$0xff]
        %v555 = vld [vmem:[#allocation2 + $0xa] sm:$0xff]
        %v556 = vld [vmem:[#allocation2 + $0x1a] sm:$0xff]
        %v557 = vld [vmem:[#allocation2 + $0x22] sm:$0xff]
        %v558 = vld [vmem:[#allocation2 + $0x32] sm:$0xff]
        %v559 = vld [vmem:[#allocation2 + $0x3a] sm:$0xff]
        %v560 = vld [vmem:[#allocation2 + $0x4a] sm:$0xff]
        %v561 = vld [vmem:[#allocation2 + $0x52] sm:$0xff]
        %v562 = vld [vmem:[#allocation2 + $0x62] sm:$0xff]
        %v563 = vld [vmem:[#allocation2 + $0x6a] sm:$0xff]
        %v564 = vld [vmem:[#allocation2 + $0x7a] sm:$0xff]
        %v565 = vld [vmem:[#allocation2 + $0x82] sm:$0xff]
        %v566 = vld [vmem:[#allocation2 + $0x92] sm:$0xff]
        %v567 = vld [vmem:[#allocation2 + $0x9a] sm:$0xff]
        %v568 = vld [vmem:[#allocation2 + $0xaa] sm:$0xff]
        %v569 = vld [vmem:[#allocation2 + $0xb2] sm:$0xff]
        %v570 = vld [vmem:[#allocation2 + $0xc2] sm:$0xff]
        %v571 = vld [vmem:[#allocation2 + $0xca] sm:$0xff]
        %v572 = vld [vmem:[#allocation2 + $0xda] sm:$0xff]
        %v573 = vld [vmem:[#allocation2 + $0xe2] sm:$0xff]
        %v574 = vld [vmem:[#allocation2 + $0xf2] sm:$0xff]
        %v575 = vld [vmem:[#allocation2 + $0xfa] sm:$0xff]
        %v576 = vld [vmem:[#allocation2 + $0x10a] sm:$0xff]
        %v577 = vld [vmem:[#allocation2 + $0x112] sm:$0xff]
        %v578 = vld [vmem:[#allocation2 + $0x122] sm:$0xff]
        %v579 = vld [vmem:[#allocation2 + $0x12a] sm:$0xff]
        %v580 = vld [vmem:[#allocation2 + $0x13a] sm:$0xff]
        %v581 = vld [vmem:[#allocation2 + $0x142] sm:$0xff]
        %v582 = vld [vmem:[#allocation2 + $0x152] sm:$0xff]
        %v583 = vld [vmem:[#allocation2 + $0x15a] sm:$0xff]
        %v584 = vld [vmem:[#allocation2 + $0x16a] sm:$0xff]
        %v585 = vld [vmem:[#allocation2 + $0x172] sm:$0xff]
        %v586 = vld [vmem:[%s457] sm:$0xff]
        %v587 = vld [vmem:[%s457 + $0x8] sm:$0xff]
        %v588 = vld [vmem:[%s457 + $0x18] sm:$0xff]
        %v589 = vld [vmem:[%s457 + $0x20] sm:$0xff]
        %v590 = vld [vmem:[%s457 + $0x30] sm:$0xff]
        %v591 = vld [vmem:[%s457 + $0x38] sm:$0xff]
        %v592 = vld [vmem:[%s457 + $0x48] sm:$0xff]
        %v593 = vld [vmem:[%s457 + $0x50] sm:$0xff]
        %v594 = vld [vmem:[%s457 + $0x60] sm:$0xff]
        %v595 = vld [vmem:[%s457 + $0x68] sm:$0xff]
        %v596 = vld [vmem:[%s457 + $0x78] sm:$0xff]
        %v597 = vld [vmem:[%s457 + $0x80] sm:$0xff]
        %v598 = vld [vmem:[%s457 + $0x90] sm:$0xff]
        %v599 = vld [vmem:[%s457 + $0x98] sm:$0xff]
        %v600 = vld [vmem:[%s457 + $0xa8] sm:$0xff]
        %v601 = vld [vmem:[%s457 + $0xb0] sm:$0xff]
        %v602 = vld [vmem:[%s457 + $0xc0] sm:$0xff]
        %v603 = vld [vmem:[%s457 + $0xc8] sm:$0xff]
        %v604 = vld [vmem:[%s457 + $0xd8] sm:$0xff]
        %v605 = vld [vmem:[%s457 + $0xe0] sm:$0xff]
        %v606 = vld [vmem:[%s457 + $0xf0] sm:$0xff]
        %v607 = vld [vmem:[%s457 + $0xf8] sm:$0xff]
        %v608 = vld [vmem:[%s457 + $0x108] sm:$0xff]
        %v609 = vld [vmem:[%s457 + $0x110] sm:$0xff]
        %v610 = vld [vmem:[%s457 + $0x120] sm:$0xff]
        %v611 = vld [vmem:[%s457 + $0x128] sm:$0xff]
        %v612 = vld [vmem:[%s457 + $0x138] sm:$0xff]
        %v613 = vld [vmem:[%s457 + $0x140] sm:$0xff]
        %v614 = vld [vmem:[%s457 + $0x150] sm:$0xff]
        %v615 = vld [vmem:[%s457 + $0x158] sm:$0xff]
        %v616 = vld [vmem:[%s457 + $0x168] sm:$0xff]
        %v617 = vld [vmem:[%s457 + $0x170] sm:$0xff]
        %v618 = vld [vmem:[%s457 + $0x1] sm:$0xff]
        %v619 = vld [vmem:[%s457 + $0x9] sm:$0xff]
        %v620 = vld [vmem:[%s457 + $0x19] sm:$0xff]
        %v621 = vld [vmem:[%s457 + $0x21] sm:$0xff]
        %v622 = vld [vmem:[%s457 + $0x31] sm:$0xff]
        %v623 = vld [vmem:[%s457 + $0x39] sm:$0xff]
        %v624 = vld [vmem:[%s457 + $0x49] sm:$0xff]
        %v625 = vld [vmem:[%s457 + $0x51] sm:$0xff]
        %v626 = vld [vmem:[%s457 + $0x61] sm:$0xff]
        %v627 = vld [vmem:[%s457 + $0x69] sm:$0xff]
        %v628 = vld [vmem:[%s457 + $0x79] sm:$0xff]
        %v629 = vld [vmem:[%s457 + $0x81] sm:$0xff]
        %v630 = vld [vmem:[%s457 + $0x91] sm:$0xff]
        %v631 = vld [vmem:[%s457 + $0x99] sm:$0xff]
        %v632 = vld [vmem:[%s457 + $0xa9] sm:$0xff]
        %v633 = vld [vmem:[%s457 + $0xb1] sm:$0xff]
        %v634 = vld [vmem:[%s457 + $0xc1] sm:$0xff]
        %v635 = vld [vmem:[%s457 + $0xc9] sm:$0xff]
        %v636 = vld [vmem:[%s457 + $0xd9] sm:$0xff]
        %v637 = vld [vmem:[%s457 + $0xe1] sm:$0xff]
        %v638 = vld [vmem:[%s457 + $0xf1] sm:$0xff]
        %v639 = vld [vmem:[%s457 + $0xf9] sm:$0xff]
        %v640 = vld [vmem:[%s457 + $0x109] sm:$0xff]
        %v641 = vld [vmem:[%s457 + $0x111] sm:$0xff]
        %v642 = vld [vmem:[%s457 + $0x121] sm:$0xff]
        %v643 = vld [vmem:[%s457 + $0x129] sm:$0xff]
        %v644 = vld [vmem:[%s457 + $0x139] sm:$0xff]
        %v645 = vld [vmem:[%s457 + $0x141] sm:$0xff]
        %v646 = vld [vmem:[%s457 + $0x151] sm:$0xff]
        %v647 = vld [vmem:[%s457 + $0x159] sm:$0xff]
        %v648 = vld [vmem:[%s457 + $0x169] sm:$0xff]
        %v649 = vld [vmem:[%s457 + $0x171] sm:$0xff]
        %v650 = vld [vmem:[%s457 + $0x2] sm:$0xff]
        %v651 = vld [vmem:[%s457 + $0xa] sm:$0xff]
        %v652 = vld [vmem:[%s457 + $0x1a] sm:$0xff]
        %v653 = vld [vmem:[%s457 + $0x22] sm:$0xff]
        %v654 = vld [vmem:[%s457 + $0x32] sm:$0xff]
        %v655 = vld [vmem:[%s457 + $0x3a] sm:$0xff]
        %v656 = vld [vmem:[%s457 + $0x4a] sm:$0xff]
        %v657 = vld [vmem:[%s457 + $0x52] sm:$0xff]
        %v658 = vld [vmem:[%s457 + $0x62] sm:$0xff]
        %v659 = vld [vmem:[%s457 + $0x6a] sm:$0xff]
        %v660 = vld [vmem:[%s457 + $0x7a] sm:$0xff]
        %v661 = vld [vmem:[%s457 + $0x82] sm:$0xff]
        %v662 = vld [vmem:[%s457 + $0x92] sm:$0xff]
        %v663 = vld [vmem:[%s457 + $0x9a] sm:$0xff]
        %v664 = vld [vmem:[%s457 + $0xaa] sm:$0xff]
        %v665 = vld [vmem:[%s457 + $0xb2] sm:$0xff]
        %v666 = vld [vmem:[%s457 + $0xc2] sm:$0xff]
        %v667 = vld [vmem:[%s457 + $0xca] sm:$0xff]
        %v668 = vld [vmem:[%s457 + $0xda] sm:$0xff]
        %v669 = vld [vmem:[%s457 + $0xe2] sm:$0xff]
        %v670 = vld [vmem:[%s457 + $0xf2] sm:$0xff]
        %v671 = vld [vmem:[%s457 + $0xfa] sm:$0xff]
        %v672 = vld [vmem:[%s457 + $0x10a] sm:$0xff]
        %v673 = vld [vmem:[%s457 + $0x112] sm:$0xff]
        %v674 = vld [vmem:[%s457 + $0x122] sm:$0xff]
        %v675 = vld [vmem:[%s457 + $0x12a] sm:$0xff]
        %v676 = vld [vmem:[%s457 + $0x13a] sm:$0xff]
        %v677 = vld [vmem:[%s457 + $0x142] sm:$0xff]
        %v678 = vld [vmem:[%s457 + $0x152] sm:$0xff]
        %v679 = vld [vmem:[%s457 + $0x15a] sm:$0xff]
        %v680 = vld [vmem:[%s457 + $0x16a] sm:$0xff]
        %v681 = vld [vmem:[%s457 + $0x172] sm:$0xff]
        %s682 = scalar_lea.vmem [#allocation2], 48
        %v683 = vld [vmem:[%s682] sm:$0xff]
        %v684 = vld [vmem:[%s682 + $0x8] sm:$0xff]
        %v685 = vld [vmem:[%s682 + $0x18] sm:$0xff]
        %v686 = vld [vmem:[%s682 + $0x20] sm:$0xff]
        %v687 = vld [vmem:[%s682 + $0x30] sm:$0xff]
        %v688 = vld [vmem:[%s682 + $0x38] sm:$0xff]
        %v689 = vld [vmem:[%s682 + $0x48] sm:$0xff]
        %v690 = vld [vmem:[%s682 + $0x50] sm:$0xff]
        %v691 = vld [vmem:[%s682 + $0x60] sm:$0xff]
        %v692 = vld [vmem:[%s682 + $0x68] sm:$0xff]
        %v693 = vld [vmem:[%s682 + $0x78] sm:$0xff]
        %v694 = vld [vmem:[%s682 + $0x80] sm:$0xff]
        %v695 = vld [vmem:[%s682 + $0x90] sm:$0xff]
        %v696 = vld [vmem:[%s682 + $0x98] sm:$0xff]
        %v697 = vld [vmem:[%s682 + $0xa8] sm:$0xff]
        %v698 = vld [vmem:[%s682 + $0xb0] sm:$0xff]
        %v699 = vld [vmem:[%s682 + $0xc0] sm:$0xff]
        %v700 = vld [vmem:[%s682 + $0xc8] sm:$0xff]
        %v701 = vld [vmem:[%s682 + $0xd8] sm:$0xff]
        %v702 = vld [vmem:[%s682 + $0xe0] sm:$0xff]
        %v703 = vld [vmem:[%s682 + $0xf0] sm:$0xff]
        %v704 = vld [vmem:[%s682 + $0xf8] sm:$0xff]
        %v705 = vld [vmem:[%s682 + $0x108] sm:$0xff]
        %v706 = vld [vmem:[%s682 + $0x110] sm:$0xff]
        %v707 = vld [vmem:[%s682 + $0x120] sm:$0xff]
        %v708 = vld [vmem:[%s682 + $0x128] sm:$0xff]
        %v709 = vld [vmem:[%s682 + $0x138] sm:$0xff]
        %v710 = vld [vmem:[%s682 + $0x140] sm:$0xff]
        %v711 = vld [vmem:[%s682 + $0x150] sm:$0xff]
        %v712 = vld [vmem:[%s682 + $0x158] sm:$0xff]
        %v713 = vld [vmem:[%s682 + $0x168] sm:$0xff]
        %v714 = vld [vmem:[%s682 + $0x170] sm:$0xff]
        %v715 = vld [vmem:[%s682 + $0x1] sm:$0xff]
        %v716 = vld [vmem:[%s682 + $0x9] sm:$0xff]
        %v717 = vld [vmem:[%s682 + $0x19] sm:$0xff]
        %v718 = vld [vmem:[%s682 + $0x21] sm:$0xff]
        %v719 = vld [vmem:[%s682 + $0x31] sm:$0xff]
        %v720 = vld [vmem:[%s682 + $0x39] sm:$0xff]
        %v721 = vld [vmem:[%s682 + $0x49] sm:$0xff]
        %v722 = vld [vmem:[%s682 + $0x51] sm:$0xff]
        %v723 = vld [vmem:[%s682 + $0x61] sm:$0xff]
        %v724 = vld [vmem:[%s682 + $0x69] sm:$0xff]
        %v725 = vld [vmem:[%s682 + $0x79] sm:$0xff]
        %v726 = vld [vmem:[%s682 + $0x81] sm:$0xff]
        %v727 = vld [vmem:[%s682 + $0x91] sm:$0xff]
        %v728 = vld [vmem:[%s682 + $0x99] sm:$0xff]
        %v729 = vld [vmem:[%s682 + $0xa9] sm:$0xff]
        %v730 = vld [vmem:[%s682 + $0xb1] sm:$0xff]
        %v731 = vld [vmem:[%s682 + $0xc1] sm:$0xff]
        %v732 = vld [vmem:[%s682 + $0xc9] sm:$0xff]
        %v733 = vld [vmem:[%s682 + $0xd9] sm:$0xff]
        %v734 = vld [vmem:[%s682 + $0xe1] sm:$0xff]
        %v735 = vld [vmem:[%s682 + $0xf1] sm:$0xff]
        %v736 = vld [vmem:[%s682 + $0xf9] sm:$0xff]
        %v737 = vld [vmem:[%s682 + $0x109] sm:$0xff]
        %v738 = vld [vmem:[%s682 + $0x111] sm:$0xff]
        %v739 = vld [vmem:[%s682 + $0x121] sm:$0xff]
        %v740 = vld [vmem:[%s682 + $0x129] sm:$0xff]
        %v741 = vld [vmem:[%s682 + $0x139] sm:$0xff]
        %v742 = vld [vmem:[%s682 + $0x141] sm:$0xff]
        %v743 = vld [vmem:[%s682 + $0x151] sm:$0xff]
        %v744 = vld [vmem:[%s682 + $0x159] sm:$0xff]
        %v745 = vld [vmem:[%s682 + $0x169] sm:$0xff]
        %v746 = vld [vmem:[%s682 + $0x171] sm:$0xff]
        %v747 = vld [vmem:[%s682 + $0x2] sm:$0xff]
        %v748 = vld [vmem:[%s682 + $0xa] sm:$0xff]
        %v749 = vld [vmem:[%s682 + $0x1a] sm:$0xff]
        %v750 = vld [vmem:[%s682 + $0x22] sm:$0xff]
        %v751 = vld [vmem:[%s682 + $0x32] sm:$0xff]
        %v752 = vld [vmem:[%s682 + $0x3a] sm:$0xff]
        %v753 = vld [vmem:[%s682 + $0x4a] sm:$0xff]
        %v754 = vld [vmem:[%s682 + $0x52] sm:$0xff]
        %v755 = vld [vmem:[%s682 + $0x62] sm:$0xff]
        %v756 = vld [vmem:[%s682 + $0x6a] sm:$0xff]
        %v757 = vld [vmem:[%s682 + $0x7a] sm:$0xff]
        %v758 = vld [vmem:[%s682 + $0x82] sm:$0xff]
        %v759 = vld [vmem:[%s682 + $0x92] sm:$0xff]
        %v760 = vld [vmem:[%s682 + $0x9a] sm:$0xff]
        %v761 = vld [vmem:[%s682 + $0xaa] sm:$0xff]
        %v762 = vld [vmem:[%s682 + $0xb2] sm:$0xff]
        %v763 = vld [vmem:[%s682 + $0xc2] sm:$0xff]
        %v764 = vld [vmem:[%s682 + $0xca] sm:$0xff]
        %v765 = vld [vmem:[%s682 + $0xda] sm:$0xff]
        %v766 = vld [vmem:[%s682 + $0xe2] sm:$0xff]
        %v767 = vld [vmem:[%s682 + $0xf2] sm:$0xff]
        %v768 = vld [vmem:[%s682 + $0xfa] sm:$0xff]
        %v769 = vld [vmem:[%s682 + $0x10a] sm:$0xff]
        %v770 = vld [vmem:[%s682 + $0x112] sm:$0xff]
        %v771 = vld [vmem:[%s682 + $0x122] sm:$0xff]
        %v772 = vld [vmem:[%s682 + $0x12a] sm:$0xff]
        %v773 = vld [vmem:[%s682 + $0x13a] sm:$0xff]
        %v774 = vld [vmem:[%s682 + $0x142] sm:$0xff]
        %v775 = vld [vmem:[%s682 + $0x152] sm:$0xff]
        %v776 = vld [vmem:[%s682 + $0x15a] sm:$0xff]
        %v777 = vld [vmem:[%s682 + $0x16a] sm:$0xff]
        %v778 = vld [vmem:[%s682 + $0x172] sm:$0xff]
        %811 = vrot.lane.b32.xlu0 %v522, 4
        %v812 = vpop.permute.xlu0 %811
        %813 = vrot.lane.b32.xlu0 %v523, 4
        %v814 = vpop.permute.xlu0 %813
        %815 = vrot.lane.b32.xlu0 %v524, 4
        %v816 = vpop.permute.xlu0 %815
        %817 = vrot.lane.b32.xlu0 %v525, 4
        %v818 = vpop.permute.xlu0 %817
        %819 = vrot.lane.b32.xlu0 %v526, 4
        %v820 = vpop.permute.xlu0 %819
        %821 = vrot.lane.b32.xlu0 %v527, 4
        %v822 = vpop.permute.xlu0 %821
        %823 = vrot.lane.b32.xlu0 %v528, 4
        %v824 = vpop.permute.xlu0 %823
        %825 = vrot.lane.b32.xlu0 %v529, 4
        %v826 = vpop.permute.xlu0 %825
        %827 = vrot.lane.b32.xlu0 %v530, 4
        %v828 = vpop.permute.xlu0 %827
        %829 = vrot.lane.b32.xlu0 %v531, 4
        %v830 = vpop.permute.xlu0 %829
        %831 = vrot.lane.b32.xlu0 %v532, 4
        %v832 = vpop.permute.xlu0 %831
        %833 = vrot.lane.b32.xlu0 %v533, 4
        %v834 = vpop.permute.xlu0 %833
        %835 = vrot.lane.b32.xlu0 %v534, 4
        %v836 = vpop.permute.xlu0 %835
        %837 = vrot.lane.b32.xlu0 %v535, 4
        %v838 = vpop.permute.xlu0 %837
        %839 = vrot.lane.b32.xlu0 %v536, 4
        %v840 = vpop.permute.xlu0 %839
        %841 = vrot.lane.b32.xlu0 %v537, 4
        %v842 = vpop.permute.xlu0 %841
        %843 = vrot.lane.b32.xlu0 %v538, 4
        %v844 = vpop.permute.xlu0 %843
        %845 = vrot.lane.b32.xlu0 %v539, 4
        %v846 = vpop.permute.xlu0 %845
        %847 = vrot.lane.b32.xlu0 %v540, 4
        %v848 = vpop.permute.xlu0 %847
        %849 = vrot.lane.b32.xlu0 %v541, 4
        %v850 = vpop.permute.xlu0 %849
        %851 = vrot.lane.b32.xlu0 %v542, 4
        %v852 = vpop.permute.xlu0 %851
        %853 = vrot.lane.b32.xlu0 %v543, 4
        %v854 = vpop.permute.xlu0 %853
        %855 = vrot.lane.b32.xlu0 %v544, 4
        %v856 = vpop.permute.xlu0 %855
        %857 = vrot.lane.b32.xlu0 %v545, 4
        %v858 = vpop.permute.xlu0 %857
        %859 = vrot.lane.b32.xlu0 %v546, 4
        %v860 = vpop.permute.xlu0 %859
        %861 = vrot.lane.b32.xlu0 %v547, 4
        %v862 = vpop.permute.xlu0 %861
        %863 = vrot.lane.b32.xlu0 %v548, 4
        %v864 = vpop.permute.xlu0 %863
        %865 = vrot.lane.b32.xlu0 %v549, 4
        %v866 = vpop.permute.xlu0 %865
        %867 = vrot.lane.b32.xlu0 %v550, 4
        %v868 = vpop.permute.xlu0 %867
        %869 = vrot.lane.b32.xlu0 %v551, 4
        %v870 = vpop.permute.xlu0 %869
        %871 = vrot.lane.b32.xlu0 %v552, 4
        %v872 = vpop.permute.xlu0 %871
        %873 = vrot.lane.b32.xlu0 %v553, 4
        %v874 = vpop.permute.xlu0 %873
        %939 = vrot.lane.b32.xlu0 %v554, 8
        %v940 = vpop.permute.xlu0 %939
        %941 = vrot.lane.b32.xlu0 %v555, 8
        %v942 = vpop.permute.xlu0 %941
        %943 = vrot.lane.b32.xlu0 %v556, 8
        %v944 = vpop.permute.xlu0 %943
        %945 = vrot.lane.b32.xlu0 %v557, 8
        %v946 = vpop.permute.xlu0 %945
        %947 = vrot.lane.b32.xlu0 %v558, 8
        %v948 = vpop.permute.xlu0 %947
        %949 = vrot.lane.b32.xlu0 %v559, 8
        %v950 = vpop.permute.xlu0 %949
        %951 = vrot.lane.b32.xlu0 %v560, 8
        %v952 = vpop.permute.xlu0 %951
        %953 = vrot.lane.b32.xlu0 %v561, 8
        %v954 = vpop.permute.xlu0 %953
        %955 = vrot.lane.b32.xlu0 %v562, 8
        %v956 = vpop.permute.xlu0 %955
        %957 = vrot.lane.b32.xlu0 %v563, 8
        %v958 = vpop.permute.xlu0 %957
        %959 = vrot.lane.b32.xlu0 %v564, 8
        %v960 = vpop.permute.xlu0 %959
        %961 = vrot.lane.b32.xlu0 %v565, 8
        %v962 = vpop.permute.xlu0 %961
        %963 = vrot.lane.b32.xlu0 %v566, 8
        %v964 = vpop.permute.xlu0 %963
        %965 = vrot.lane.b32.xlu0 %v567, 8
        %v966 = vpop.permute.xlu0 %965
        %967 = vrot.lane.b32.xlu0 %v568, 8
        %v968 = vpop.permute.xlu0 %967
        %969 = vrot.lane.b32.xlu0 %v569, 8
        %v970 = vpop.permute.xlu0 %969
        %971 = vrot.lane.b32.xlu0 %v570, 8
        %v972 = vpop.permute.xlu0 %971
        %973 = vrot.lane.b32.xlu0 %v571, 8
        %v974 = vpop.permute.xlu0 %973
        %975 = vrot.lane.b32.xlu0 %v572, 8
        %v976 = vpop.permute.xlu0 %975
        %977 = vrot.lane.b32.xlu0 %v573, 8
        %v978 = vpop.permute.xlu0 %977
        %979 = vrot.lane.b32.xlu0 %v574, 8
        %v980 = vpop.permute.xlu0 %979
        %981 = vrot.lane.b32.xlu0 %v575, 8
        %v982 = vpop.permute.xlu0 %981
        %983 = vrot.lane.b32.xlu0 %v576, 8
        %v984 = vpop.permute.xlu0 %983
        %985 = vrot.lane.b32.xlu0 %v577, 8
        %v986 = vpop.permute.xlu0 %985
        %987 = vrot.lane.b32.xlu0 %v578, 8
        %v988 = vpop.permute.xlu0 %987
        %989 = vrot.lane.b32.xlu0 %v579, 8
        %v990 = vpop.permute.xlu0 %989
        %991 = vrot.lane.b32.xlu0 %v580, 8
        %v992 = vpop.permute.xlu0 %991
        %993 = vrot.lane.b32.xlu0 %v581, 8
        %v994 = vpop.permute.xlu0 %993
        %995 = vrot.lane.b32.xlu0 %v582, 8
        %v996 = vpop.permute.xlu0 %995
        %997 = vrot.lane.b32.xlu0 %v583, 8
        %v998 = vpop.permute.xlu0 %997
        %999 = vrot.lane.b32.xlu0 %v584, 8
        %v1000 = vpop.permute.xlu0 %999
        %1001 = vrot.lane.b32.xlu0 %v585, 8
        %v1002 = vpop.permute.xlu0 %1001
        %1067 = vrot.lane.b32.xlu0 %v586, 12
        %v1068 = vpop.permute.xlu0 %1067
        %1069 = vrot.lane.b32.xlu0 %v587, 12
        %v1070 = vpop.permute.xlu0 %1069
        %1071 = vrot.lane.b32.xlu0 %v588, 12
        %v1072 = vpop.permute.xlu0 %1071
        %1073 = vrot.lane.b32.xlu0 %v589, 12
        %v1074 = vpop.permute.xlu0 %1073
        %1075 = vrot.lane.b32.xlu0 %v590, 12
        %v1076 = vpop.permute.xlu0 %1075
        %1077 = vrot.lane.b32.xlu0 %v591, 12
        %v1078 = vpop.permute.xlu0 %1077
        %1079 = vrot.lane.b32.xlu0 %v592, 12
        %v1080 = vpop.permute.xlu0 %1079
        %1081 = vrot.lane.b32.xlu0 %v593, 12
        %v1082 = vpop.permute.xlu0 %1081
        %1083 = vrot.lane.b32.xlu0 %v594, 12
        %v1084 = vpop.permute.xlu0 %1083
        %1085 = vrot.lane.b32.xlu0 %v595, 12
        %v1086 = vpop.permute.xlu0 %1085
        %1087 = vrot.lane.b32.xlu0 %v596, 12
        %v1088 = vpop.permute.xlu0 %1087
        %1089 = vrot.lane.b32.xlu0 %v597, 12
        %v1090 = vpop.permute.xlu0 %1089
        %1091 = vrot.lane.b32.xlu0 %v598, 12
        %v1092 = vpop.permute.xlu0 %1091
        %1093 = vrot.lane.b32.xlu0 %v599, 12
        %v1094 = vpop.permute.xlu0 %1093
        %1095 = vrot.lane.b32.xlu0 %v600, 12
        %v1096 = vpop.permute.xlu0 %1095
        %1097 = vrot.lane.b32.xlu0 %v601, 12
        %v1098 = vpop.permute.xlu0 %1097
        %1099 = vrot.lane.b32.xlu0 %v602, 12
        %v1100 = vpop.permute.xlu0 %1099
        %1101 = vrot.lane.b32.xlu0 %v603, 12
        %v1102 = vpop.permute.xlu0 %1101
        %1103 = vrot.lane.b32.xlu0 %v604, 12
        %v1104 = vpop.permute.xlu0 %1103
        %1105 = vrot.lane.b32.xlu0 %v605, 12
        %v1106 = vpop.permute.xlu0 %1105
        %1107 = vrot.lane.b32.xlu0 %v606, 12
        %v1108 = vpop.permute.xlu0 %1107
        %1109 = vrot.lane.b32.xlu0 %v607, 12
        %v1110 = vpop.permute.xlu0 %1109
        %1111 = vrot.lane.b32.xlu0 %v608, 12
        %v1112 = vpop.permute.xlu0 %1111
        %1113 = vrot.lane.b32.xlu0 %v609, 12
        %v1114 = vpop.permute.xlu0 %1113
        %1115 = vrot.lane.b32.xlu0 %v610, 12
        %v1116 = vpop.permute.xlu0 %1115
        %1117 = vrot.lane.b32.xlu0 %v611, 12
        %v1118 = vpop.permute.xlu0 %1117
        %1119 = vrot.lane.b32.xlu0 %v612, 12
        %v1120 = vpop.permute.xlu0 %1119
        %1121 = vrot.lane.b32.xlu0 %v613, 12
        %v1122 = vpop.permute.xlu0 %1121
        %1123 = vrot.lane.b32.xlu0 %v614, 12
        %v1124 = vpop.permute.xlu0 %1123
        %1125 = vrot.lane.b32.xlu0 %v615, 12
        %v1126 = vpop.permute.xlu0 %1125
        %1127 = vrot.lane.b32.xlu0 %v616, 12
        %v1128 = vpop.permute.xlu0 %1127
        %1129 = vrot.lane.b32.xlu0 %v617, 12
        %v1130 = vpop.permute.xlu0 %1129
        %1195 = vrot.lane.b32.xlu0 %v618, 16
        %v1196 = vpop.permute.xlu0 %1195
        %1197 = vrot.lane.b32.xlu0 %v619, 16
        %v1198 = vpop.permute.xlu0 %1197
        %1199 = vrot.lane.b32.xlu0 %v620, 16
        %v1200 = vpop.permute.xlu0 %1199
        %1201 = vrot.lane.b32.xlu0 %v621, 16
        %v1202 = vpop.permute.xlu0 %1201
        %1203 = vrot.lane.b32.xlu0 %v622, 16
        %v1204 = vpop.permute.xlu0 %1203
        %1205 = vrot.lane.b32.xlu0 %v623, 16
        %v1206 = vpop.permute.xlu0 %1205
        %1207 = vrot.lane.b32.xlu0 %v624, 16
        %v1208 = vpop.permute.xlu0 %1207
        %1209 = vrot.lane.b32.xlu0 %v625, 16
        %v1210 = vpop.permute.xlu0 %1209
        %1211 = vrot.lane.b32.xlu0 %v626, 16
        %v1212 = vpop.permute.xlu0 %1211
        %1213 = vrot.lane.b32.xlu0 %v627, 16
        %v1214 = vpop.permute.xlu0 %1213
        %1215 = vrot.lane.b32.xlu0 %v628, 16
        %v1216 = vpop.permute.xlu0 %1215
        %1217 = vrot.lane.b32.xlu0 %v629, 16
        %v1218 = vpop.permute.xlu0 %1217
        %1219 = vrot.lane.b32.xlu0 %v630, 16
        %v1220 = vpop.permute.xlu0 %1219
        %1221 = vrot.lane.b32.xlu0 %v631, 16
        %v1222 = vpop.permute.xlu0 %1221
        %1223 = vrot.lane.b32.xlu0 %v632, 16
        %v1224 = vpop.permute.xlu0 %1223
        %1225 = vrot.lane.b32.xlu0 %v633, 16
        %v1226 = vpop.permute.xlu0 %1225
        %1227 = vrot.lane.b32.xlu0 %v634, 16
        %v1228 = vpop.permute.xlu0 %1227
        %1229 = vrot.lane.b32.xlu0 %v635, 16
        %v1230 = vpop.permute.xlu0 %1229
        %1231 = vrot.lane.b32.xlu0 %v636, 16
        %v1232 = vpop.permute.xlu0 %1231
        %1233 = vrot.lane.b32.xlu0 %v637, 16
        %v1234 = vpop.permute.xlu0 %1233
        %1235 = vrot.lane.b32.xlu0 %v638, 16
        %v1236 = vpop.permute.xlu0 %1235
        %1237 = vrot.lane.b32.xlu0 %v639, 16
        %v1238 = vpop.permute.xlu0 %1237
        %1239 = vrot.lane.b32.xlu0 %v640, 16
        %v1240 = vpop.permute.xlu0 %1239
        %1241 = vrot.lane.b32.xlu0 %v641, 16
        %v1242 = vpop.permute.xlu0 %1241
        %1243 = vrot.lane.b32.xlu0 %v642, 16
        %v1244 = vpop.permute.xlu0 %1243
        %1245 = vrot.lane.b32.xlu0 %v643, 16
        %v1246 = vpop.permute.xlu0 %1245
        %1247 = vrot.lane.b32.xlu0 %v644, 16
        %v1248 = vpop.permute.xlu0 %1247
        %1249 = vrot.lane.b32.xlu0 %v645, 16
        %v1250 = vpop.permute.xlu0 %1249
        %1251 = vrot.lane.b32.xlu0 %v646, 16
        %v1252 = vpop.permute.xlu0 %1251
        %1253 = vrot.lane.b32.xlu0 %v647, 16
        %v1254 = vpop.permute.xlu0 %1253
        %1255 = vrot.lane.b32.xlu0 %v648, 16
        %v1256 = vpop.permute.xlu0 %1255
        %1257 = vrot.lane.b32.xlu0 %v649, 16
        %v1258 = vpop.permute.xlu0 %1257
        %1323 = vrot.lane.b32.xlu0 %v650, 20
        %v1324 = vpop.permute.xlu0 %1323
        %1325 = vrot.lane.b32.xlu0 %v651, 20
        %v1326 = vpop.permute.xlu0 %1325
        %1327 = vrot.lane.b32.xlu0 %v652, 20
        %v1328 = vpop.permute.xlu0 %1327
        %1329 = vrot.lane.b32.xlu0 %v653, 20
        %v1330 = vpop.permute.xlu0 %1329
        %1331 = vrot.lane.b32.xlu0 %v654, 20
        %v1332 = vpop.permute.xlu0 %1331
        %1333 = vrot.lane.b32.xlu0 %v655, 20
        %v1334 = vpop.permute.xlu0 %1333
        %1335 = vrot.lane.b32.xlu0 %v656, 20
        %v1336 = vpop.permute.xlu0 %1335
        %1337 = vrot.lane.b32.xlu0 %v657, 20
        %v1338 = vpop.permute.xlu0 %1337
        %1339 = vrot.lane.b32.xlu0 %v658, 20
        %v1340 = vpop.permute.xlu0 %1339
        %1341 = vrot.lane.b32.xlu0 %v659, 20
        %v1342 = vpop.permute.xlu0 %1341
        %1343 = vrot.lane.b32.xlu0 %v660, 20
        %v1344 = vpop.permute.xlu0 %1343
        %1345 = vrot.lane.b32.xlu0 %v661, 20
        %v1346 = vpop.permute.xlu0 %1345
        %1347 = vrot.lane.b32.xlu0 %v662, 20
        %v1348 = vpop.permute.xlu0 %1347
        %1349 = vrot.lane.b32.xlu0 %v663, 20
        %v1350 = vpop.permute.xlu0 %1349
        %1351 = vrot.lane.b32.xlu0 %v664, 20
        %v1352 = vpop.permute.xlu0 %1351
        %1353 = vrot.lane.b32.xlu0 %v665, 20
        %v1354 = vpop.permute.xlu0 %1353
        %1355 = vrot.lane.b32.xlu0 %v666, 20
        %v1356 = vpop.permute.xlu0 %1355
        %1357 = vrot.lane.b32.xlu0 %v667, 20
        %v1358 = vpop.permute.xlu0 %1357
        %1359 = vrot.lane.b32.xlu0 %v668, 20
        %v1360 = vpop.permute.xlu0 %1359
        %1361 = vrot.lane.b32.xlu0 %v669, 20
        %v1362 = vpop.permute.xlu0 %1361
        %1363 = vrot.lane.b32.xlu0 %v670, 20
        %v1364 = vpop.permute.xlu0 %1363
        %1365 = vrot.lane.b32.xlu0 %v671, 20
        %v1366 = vpop.permute.xlu0 %1365
        %1367 = vrot.lane.b32.xlu0 %v672, 20
        %v1368 = vpop.permute.xlu0 %1367
        %1369 = vrot.lane.b32.xlu0 %v673, 20
        %v1370 = vpop.permute.xlu0 %1369
        %1371 = vrot.lane.b32.xlu0 %v674, 20
        %v1372 = vpop.permute.xlu0 %1371
        %1373 = vrot.lane.b32.xlu0 %v675, 20
        %v1374 = vpop.permute.xlu0 %1373
        %1375 = vrot.lane.b32.xlu0 %v676, 20
        %v1376 = vpop.permute.xlu0 %1375
        %1377 = vrot.lane.b32.xlu0 %v677, 20
        %v1378 = vpop.permute.xlu0 %1377
        %1379 = vrot.lane.b32.xlu0 %v678, 20
        %v1380 = vpop.permute.xlu0 %1379
        %1381 = vrot.lane.b32.xlu0 %v679, 20
        %v1382 = vpop.permute.xlu0 %1381
        %1383 = vrot.lane.b32.xlu0 %v680, 20
        %v1384 = vpop.permute.xlu0 %1383
        %1385 = vrot.lane.b32.xlu0 %v681, 20
        %v1386 = vpop.permute.xlu0 %1385
        %1451 = vrot.lane.b32.xlu0 %v683, 24
        %v1452 = vpop.permute.xlu0 %1451
        %1453 = vrot.lane.b32.xlu0 %v684, 24
        %v1454 = vpop.permute.xlu0 %1453
        %1455 = vrot.lane.b32.xlu0 %v685, 24
        %v1456 = vpop.permute.xlu0 %1455
        %1457 = vrot.lane.b32.xlu0 %v686, 24
        %v1458 = vpop.permute.xlu0 %1457
        %1459 = vrot.lane.b32.xlu0 %v687, 24
        %v1460 = vpop.permute.xlu0 %1459
        %1461 = vrot.lane.b32.xlu0 %v688, 24
        %v1462 = vpop.permute.xlu0 %1461
        %1463 = vrot.lane.b32.xlu0 %v689, 24
        %v1464 = vpop.permute.xlu0 %1463
        %1465 = vrot.lane.b32.xlu0 %v690, 24
        %v1466 = vpop.permute.xlu0 %1465
        %1467 = vrot.lane.b32.xlu0 %v691, 24
        %v1468 = vpop.permute.xlu0 %1467
        %1469 = vrot.lane.b32.xlu0 %v692, 24
        %v1470 = vpop.permute.xlu0 %1469
        %1471 = vrot.lane.b32.xlu0 %v693, 24
        %v1472 = vpop.permute.xlu0 %1471
        %1473 = vrot.lane.b32.xlu0 %v694, 24
        %v1474 = vpop.permute.xlu0 %1473
        %1475 = vrot.lane.b32.xlu0 %v695, 24
        %v1476 = vpop.permute.xlu0 %1475
        %1477 = vrot.lane.b32.xlu0 %v696, 24
        %v1478 = vpop.permute.xlu0 %1477
        %1479 = vrot.lane.b32.xlu0 %v697, 24
        %v1480 = vpop.permute.xlu0 %1479
        %1481 = vrot.lane.b32.xlu0 %v698, 24
        %v1482 = vpop.permute.xlu0 %1481
        %1483 = vrot.lane.b32.xlu0 %v699, 24
        %v1484 = vpop.permute.xlu0 %1483
        %1485 = vrot.lane.b32.xlu0 %v700, 24
        %v1486 = vpop.permute.xlu0 %1485
        %1487 = vrot.lane.b32.xlu0 %v701, 24
        %v1488 = vpop.permute.xlu0 %1487
        %1489 = vrot.lane.b32.xlu0 %v702, 24
        %v1490 = vpop.permute.xlu0 %1489
        %1491 = vrot.lane.b32.xlu0 %v703, 24
        %v1492 = vpop.permute.xlu0 %1491
        %1493 = vrot.lane.b32.xlu0 %v704, 24
        %v1494 = vpop.permute.xlu0 %1493
        %1495 = vrot.lane.b32.xlu0 %v705, 24
        %v1496 = vpop.permute.xlu0 %1495
        %1497 = vrot.lane.b32.xlu0 %v706, 24
        %v1498 = vpop.permute.xlu0 %1497
        %1499 = vrot.lane.b32.xlu0 %v707, 24
        %v1500 = vpop.permute.xlu0 %1499
        %1501 = vrot.lane.b32.xlu0 %v708, 24
        %v1502 = vpop.permute.xlu0 %1501
        %1503 = vrot.lane.b32.xlu0 %v709, 24
        %v1504 = vpop.permute.xlu0 %1503
        %1505 = vrot.lane.b32.xlu0 %v710, 24
        %v1506 = vpop.permute.xlu0 %1505
        %1507 = vrot.lane.b32.xlu0 %v711, 24
        %v1508 = vpop.permute.xlu0 %1507
        %1509 = vrot.lane.b32.xlu0 %v712, 24
        %v1510 = vpop.permute.xlu0 %1509
        %1511 = vrot.lane.b32.xlu0 %v713, 24
        %v1512 = vpop.permute.xlu0 %1511
        %1513 = vrot.lane.b32.xlu0 %v714, 24
        %v1514 = vpop.permute.xlu0 %1513
        %1579 = vrot.lane.b32.xlu0 %v715, 28
        %v1580 = vpop.permute.xlu0 %1579
        %1581 = vrot.lane.b32.xlu0 %v716, 28
        %v1582 = vpop.permute.xlu0 %1581
        %1583 = vrot.lane.b32.xlu0 %v717, 28
        %v1584 = vpop.permute.xlu0 %1583
        %1585 = vrot.lane.b32.xlu0 %v718, 28
        %v1586 = vpop.permute.xlu0 %1585
        %1587 = vrot.lane.b32.xlu0 %v719, 28
        %v1588 = vpop.permute.xlu0 %1587
        %1589 = vrot.lane.b32.xlu0 %v720, 28
        %v1590 = vpop.permute.xlu0 %1589
        %1591 = vrot.lane.b32.xlu0 %v721, 28
        %v1592 = vpop.permute.xlu0 %1591
        %1593 = vrot.lane.b32.xlu0 %v722, 28
        %v1594 = vpop.permute.xlu0 %1593
        %1595 = vrot.lane.b32.xlu0 %v723, 28
        %v1596 = vpop.permute.xlu0 %1595
        %1597 = vrot.lane.b32.xlu0 %v724, 28
        %v1598 = vpop.permute.xlu0 %1597
        %1599 = vrot.lane.b32.xlu0 %v725, 28
        %v1600 = vpop.permute.xlu0 %1599
        %1601 = vrot.lane.b32.xlu0 %v726, 28
        %v1602 = vpop.permute.xlu0 %1601
        %1603 = vrot.lane.b32.xlu0 %v727, 28
        %v1604 = vpop.permute.xlu0 %1603
        %1605 = vrot.lane.b32.xlu0 %v728, 28
        %v1606 = vpop.permute.xlu0 %1605
        %1607 = vrot.lane.b32.xlu0 %v729, 28
        %v1608 = vpop.permute.xlu0 %1607
        %1609 = vrot.lane.b32.xlu0 %v730, 28
        %v1610 = vpop.permute.xlu0 %1609
        %1611 = vrot.lane.b32.xlu0 %v731, 28
        %v1612 = vpop.permute.xlu0 %1611
        %1613 = vrot.lane.b32.xlu0 %v732, 28
        %v1614 = vpop.permute.xlu0 %1613
        %1615 = vrot.lane.b32.xlu0 %v733, 28
        %v1616 = vpop.permute.xlu0 %1615
        %1617 = vrot.lane.b32.xlu0 %v734, 28
        %v1618 = vpop.permute.xlu0 %1617
        %1619 = vrot.lane.b32.xlu0 %v735, 28
        %v1620 = vpop.permute.xlu0 %1619
        %1621 = vrot.lane.b32.xlu0 %v736, 28
        %v1622 = vpop.permute.xlu0 %1621
        %1623 = vrot.lane.b32.xlu0 %v737, 28
        %v1624 = vpop.permute.xlu0 %1623
        %1625 = vrot.lane.b32.xlu0 %v738, 28
        %v1626 = vpop.permute.xlu0 %1625
        %1627 = vrot.lane.b32.xlu0 %v739, 28
        %v1628 = vpop.permute.xlu0 %1627
        %1629 = vrot.lane.b32.xlu0 %v740, 28
        %v1630 = vpop.permute.xlu0 %1629
        %1631 = vrot.lane.b32.xlu0 %v741, 28
        %v1632 = vpop.permute.xlu0 %1631
        %1633 = vrot.lane.b32.xlu0 %v742, 28
        %v1634 = vpop.permute.xlu0 %1633
        %1635 = vrot.lane.b32.xlu0 %v743, 28
        %v1636 = vpop.permute.xlu0 %1635
        %1637 = vrot.lane.b32.xlu0 %v744, 28
        %v1638 = vpop.permute.xlu0 %1637
        %1639 = vrot.lane.b32.xlu0 %v745, 28
        %v1640 = vpop.permute.xlu0 %1639
        %1641 = vrot.lane.b32.xlu0 %v746, 28
        %v1642 = vpop.permute.xlu0 %1641
        %1707 = vrot.lane.b32.xlu0 %v747, 32
        %v1708 = vpop.permute.xlu0 %1707
        %1709 = vrot.lane.b32.xlu0 %v748, 32
        %v1710 = vpop.permute.xlu0 %1709
        %1711 = vrot.lane.b32.xlu0 %v749, 32
        %v1712 = vpop.permute.xlu0 %1711
        %1713 = vrot.lane.b32.xlu0 %v750, 32
        %v1714 = vpop.permute.xlu0 %1713
        %1715 = vrot.lane.b32.xlu0 %v751, 32
        %v1716 = vpop.permute.xlu0 %1715
        %1717 = vrot.lane.b32.xlu0 %v752, 32
        %v1718 = vpop.permute.xlu0 %1717
        %1719 = vrot.lane.b32.xlu0 %v753, 32
        %v1720 = vpop.permute.xlu0 %1719
        %1721 = vrot.lane.b32.xlu0 %v754, 32
        %v1722 = vpop.permute.xlu0 %1721
        %1723 = vrot.lane.b32.xlu0 %v755, 32
        %v1724 = vpop.permute.xlu0 %1723
        %1725 = vrot.lane.b32.xlu0 %v756, 32
        %v1726 = vpop.permute.xlu0 %1725
        %1727 = vrot.lane.b32.xlu0 %v757, 32
        %v1728 = vpop.permute.xlu0 %1727
        %1729 = vrot.lane.b32.xlu0 %v758, 32
        %v1730 = vpop.permute.xlu0 %1729
        %1731 = vrot.lane.b32.xlu0 %v759, 32
        %v1732 = vpop.permute.xlu0 %1731
        %1733 = vrot.lane.b32.xlu0 %v760, 32
        %v1734 = vpop.permute.xlu0 %1733
        %1735 = vrot.lane.b32.xlu0 %v761, 32
        %v1736 = vpop.permute.xlu0 %1735
        %1737 = vrot.lane.b32.xlu0 %v762, 32
        %v1738 = vpop.permute.xlu0 %1737
        %1739 = vrot.lane.b32.xlu0 %v763, 32
        %v1740 = vpop.permute.xlu0 %1739
        %1741 = vrot.lane.b32.xlu0 %v764, 32
        %v1742 = vpop.permute.xlu0 %1741
        %1743 = vrot.lane.b32.xlu0 %v765, 32
        %v1744 = vpop.permute.xlu0 %1743
        %1745 = vrot.lane.b32.xlu0 %v766, 32
        %v1746 = vpop.permute.xlu0 %1745
        %1747 = vrot.lane.b32.xlu0 %v767, 32
        %v1748 = vpop.permute.xlu0 %1747
        %1749 = vrot.lane.b32.xlu0 %v768, 32
        %v1750 = vpop.permute.xlu0 %1749
        %1751 = vrot.lane.b32.xlu0 %v769, 32
        %v1752 = vpop.permute.xlu0 %1751
        %1753 = vrot.lane.b32.xlu0 %v770, 32
        %v1754 = vpop.permute.xlu0 %1753
        %1755 = vrot.lane.b32.xlu0 %v771, 32
        %v1756 = vpop.permute.xlu0 %1755
        %1757 = vrot.lane.b32.xlu0 %v772, 32
        %v1758 = vpop.permute.xlu0 %1757
        %1759 = vrot.lane.b32.xlu0 %v773, 32
        %v1760 = vpop.permute.xlu0 %1759
        %1761 = vrot.lane.b32.xlu0 %v774, 32
        %v1762 = vpop.permute.xlu0 %1761
        %1763 = vrot.lane.b32.xlu0 %v775, 32
        %v1764 = vpop.permute.xlu0 %1763
        %1765 = vrot.lane.b32.xlu0 %v776, 32
        %v1766 = vpop.permute.xlu0 %1765
        %1767 = vrot.lane.b32.xlu0 %v777, 32
        %v1768 = vpop.permute.xlu0 %1767
        %1769 = vrot.lane.b32.xlu0 %v778, 32
        %v1770 = vpop.permute.xlu0 %1769
        %v1803 = vsel %vm401, %v490, %v812
        %v1804 = vsel %vm401, %v491, %v814
        %v1805 = vsel %vm401, %v492, %v816
        %v1806 = vsel %vm401, %v493, %v818
        %v1807 = vsel %vm401, %v494, %v820
        %v1808 = vsel %vm401, %v495, %v822
        %v1809 = vsel %vm401, %v496, %v824
        %v1810 = vsel %vm401, %v497, %v826
        %v1811 = vsel %vm401, %v498, %v828
        %v1812 = vsel %vm401, %v499, %v830
        %v1813 = vsel %vm401, %v500, %v832
        %v1814 = vsel %vm401, %v501, %v834
        %v1815 = vsel %vm401, %v502, %v836
        %v1816 = vsel %vm401, %v503, %v838
        %v1817 = vsel %vm401, %v504, %v840
        %v1818 = vsel %vm401, %v505, %v842
        %v1819 = vsel %vm401, %v506, %v844
        %v1820 = vsel %vm401, %v507, %v846
        %v1821 = vsel %vm401, %v508, %v848
        %v1822 = vsel %vm401, %v509, %v850
        %v1823 = vsel %vm401, %v510, %v852
        %v1824 = vsel %vm401, %v511, %v854
        %v1825 = vsel %vm401, %v512, %v856
        %v1826 = vsel %vm401, %v513, %v858
        %v1827 = vsel %vm401, %v514, %v860
        %v1828 = vsel %vm401, %v515, %v862
        %v1829 = vsel %vm401, %v516, %v864
        %v1830 = vsel %vm401, %v517, %v866
        %v1831 = vsel %vm401, %v518, %v868
        %v1832 = vsel %vm401, %v519, %v870
        %v1833 = vsel %vm401, %v520, %v872
        %v1834 = vsel %vm401, %v521, %v874
        %vm1835 = vcmask 64512
        %v1836 = vsel %vm1835, %v1803, %v940
        %v1837 = vsel %vm1835, %v1804, %v942
        %v1838 = vsel %vm1835, %v1805, %v944
        %v1839 = vsel %vm1835, %v1806, %v946
        %v1840 = vsel %vm1835, %v1807, %v948
        %v1841 = vsel %vm1835, %v1808, %v950
        %v1842 = vsel %vm1835, %v1809, %v952
        %v1843 = vsel %vm1835, %v1810, %v954
        %v1844 = vsel %vm1835, %v1811, %v956
        %v1845 = vsel %vm1835, %v1812, %v958
        %v1846 = vsel %vm1835, %v1813, %v960
        %v1847 = vsel %vm1835, %v1814, %v962
        %v1848 = vsel %vm1835, %v1815, %v964
        %v1849 = vsel %vm1835, %v1816, %v966
        %v1850 = vsel %vm1835, %v1817, %v968
        %v1851 = vsel %vm1835, %v1818, %v970
        %v1852 = vsel %vm1835, %v1819, %v972
        %v1853 = vsel %vm1835, %v1820, %v974
        %v1854 = vsel %vm1835, %v1821, %v976
        %v1855 = vsel %vm1835, %v1822, %v978
        %v1856 = vsel %vm1835, %v1823, %v980
        %v1857 = vsel %vm1835, %v1824, %v982
        %v1858 = vsel %vm1835, %v1825, %v984
        %v1859 = vsel %vm1835, %v1826, %v986
        %v1860 = vsel %vm1835, %v1827, %v988
        %v1861 = vsel %vm1835, %v1828, %v990
        %v1862 = vsel %vm1835, %v1829, %v992
        %v1863 = vsel %vm1835, %v1830, %v994
        %v1864 = vsel %vm1835, %v1831, %v996
        %v1865 = vsel %vm1835, %v1832, %v998
        %v1866 = vsel %vm1835, %v1833, %v1000
        %v1867 = vsel %vm1835, %v1834, %v1002
        %vm1868 = vcmask 97280
        %v1869 = vsel %vm1868, %v1836, %v1068
        %v1870 = vsel %vm1868, %v1837, %v1070
        %v1871 = vsel %vm1868, %v1838, %v1072
        %v1872 = vsel %vm1868, %v1839, %v1074
        %v1873 = vsel %vm1868, %v1840, %v1076
        %v1874 = vsel %vm1868, %v1841, %v1078
        %v1875 = vsel %vm1868, %v1842, %v1080
        %v1876 = vsel %vm1868, %v1843, %v1082
        %v1877 = vsel %vm1868, %v1844, %v1084
        %v1878 = vsel %vm1868, %v1845, %v1086
        %v1879 = vsel %vm1868, %v1846, %v1088
        %v1880 = vsel %vm1868, %v1847, %v1090
        %v1881 = vsel %vm1868, %v1848, %v1092
        %v1882 = vsel %vm1868, %v1849, %v1094
        %v1883 = vsel %vm1868, %v1850, %v1096
        %v1884 = vsel %vm1868, %v1851, %v1098
        %v1885 = vsel %vm1868, %v1852, %v1100
        %v1886 = vsel %vm1868, %v1853, %v1102
        %v1887 = vsel %vm1868, %v1854, %v1104
        %v1888 = vsel %vm1868, %v1855, %v1106
        %v1889 = vsel %vm1868, %v1856, %v1108
        %v1890 = vsel %vm1868, %v1857, %v1110
        %v1891 = vsel %vm1868, %v1858, %v1112
        %v1892 = vsel %vm1868, %v1859, %v1114
        %v1893 = vsel %vm1868, %v1860, %v1116
        %v1894 = vsel %vm1868, %v1861, %v1118
        %v1895 = vsel %vm1868, %v1862, %v1120
        %v1896 = vsel %vm1868, %v1863, %v1122
        %v1897 = vsel %vm1868, %v1864, %v1124
        %v1898 = vsel %vm1868, %v1865, %v1126
        %v1899 = vsel %vm1868, %v1866, %v1128
        %v1900 = vsel %vm1868, %v1867, %v1130
        %vm1901 = vcmask 130048
        %v1902 = vsel %vm1901, %v1869, %v1196
        %v1903 = vsel %vm1901, %v1870, %v1198
        %v1904 = vsel %vm1901, %v1871, %v1200
        %v1905 = vsel %vm1901, %v1872, %v1202
        %v1906 = vsel %vm1901, %v1873, %v1204
        %v1907 = vsel %vm1901, %v1874, %v1206
        %v1908 = vsel %vm1901, %v1875, %v1208
        %v1909 = vsel %vm1901, %v1876, %v1210
        %v1910 = vsel %vm1901, %v1877, %v1212
        %v1911 = vsel %vm1901, %v1878, %v1214
        %v1912 = vsel %vm1901, %v1879, %v1216
        %v1913 = vsel %vm1901, %v1880, %v1218
        %v1914 = vsel %vm1901, %v1881, %v1220
        %v1915 = vsel %vm1901, %v1882, %v1222
        %v1916 = vsel %vm1901, %v1883, %v1224
        %v1917 = vsel %vm1901, %v1884, %v1226
        %v1918 = vsel %vm1901, %v1885, %v1228
        %v1919 = vsel %vm1901, %v1886, %v1230
        %v1920 = vsel %vm1901, %v1887, %v1232
        %v1921 = vsel %vm1901, %v1888, %v1234
        %v1922 = vsel %vm1901, %v1889, %v1236
        %v1923 = vsel %vm1901, %v1890, %v1238
        %v1924 = vsel %vm1901, %v1891, %v1240
        %v1925 = vsel %vm1901, %v1892, %v1242
        %v1926 = vsel %vm1901, %v1893, %v1244
        %v1927 = vsel %vm1901, %v1894, %v1246
        %v1928 = vsel %vm1901, %v1895, %v1248
        %v1929 = vsel %vm1901, %v1896, %v1250
        %v1930 = vsel %vm1901, %v1897, %v1252
        %v1931 = vsel %vm1901, %v1898, %v1254
        %v1932 = vsel %vm1901, %v1899, %v1256
        %v1933 = vsel %vm1901, %v1900, %v1258
        %vm1934 = vcmask 162816
        %v1935 = vsel %vm1934, %v1902, %v1324
        %v1936 = vsel %vm1934, %v1903, %v1326
        %v1937 = vsel %vm1934, %v1904, %v1328
        %v1938 = vsel %vm1934, %v1905, %v1330
        %v1939 = vsel %vm1934, %v1906, %v1332
        %v1940 = vsel %vm1934, %v1907, %v1334
        %v1941 = vsel %vm1934, %v1908, %v1336
        %v1942 = vsel %vm1934, %v1909, %v1338
        %v1943 = vsel %vm1934, %v1910, %v1340
        %v1944 = vsel %vm1934, %v1911, %v1342
        %v1945 = vsel %vm1934, %v1912, %v1344
        %v1946 = vsel %vm1934, %v1913, %v1346
        %v1947 = vsel %vm1934, %v1914, %v1348
        %v1948 = vsel %vm1934, %v1915, %v1350
        %v1949 = vsel %vm1934, %v1916, %v1352
        %v1950 = vsel %vm1934, %v1917, %v1354
        %v1951 = vsel %vm1934, %v1918, %v1356
        %v1952 = vsel %vm1934, %v1919, %v1358
        %v1953 = vsel %vm1934, %v1920, %v1360
        %v1954 = vsel %vm1934, %v1921, %v1362
        %v1955 = vsel %vm1934, %v1922, %v1364
        %v1956 = vsel %vm1934, %v1923, %v1366
        %v1957 = vsel %vm1934, %v1924, %v1368
        %v1958 = vsel %vm1934, %v1925, %v1370
        %v1959 = vsel %vm1934, %v1926, %v1372
        %v1960 = vsel %vm1934, %v1927, %v1374
        %v1961 = vsel %vm1934, %v1928, %v1376
        %v1962 = vsel %vm1934, %v1929, %v1378
        %v1963 = vsel %vm1934, %v1930, %v1380
        %v1964 = vsel %vm1934, %v1931, %v1382
        %v1965 = vsel %vm1934, %v1932, %v1384
        %v1966 = vsel %vm1934, %v1933, %v1386
        %vm1967 = vcmask 195584
        %v1968 = vsel %vm1967, %v1935, %v1452
        %v1969 = vsel %vm1967, %v1936, %v1454
        %v1970 = vsel %vm1967, %v1937, %v1456
        %v1971 = vsel %vm1967, %v1938, %v1458
        %v1972 = vsel %vm1967, %v1939, %v1460
        %v1973 = vsel %vm1967, %v1940, %v1462
        %v1974 = vsel %vm1967, %v1941, %v1464
        %v1975 = vsel %vm1967, %v1942, %v1466
        %v1976 = vsel %vm1967, %v1943, %v1468
        %v1977 = vsel %vm1967, %v1944, %v1470
        %v1978 = vsel %vm1967, %v1945, %v1472
        %v1979 = vsel %vm1967, %v1946, %v1474
        %v1980 = vsel %vm1967, %v1947, %v1476
        %v1981 = vsel %vm1967, %v1948, %v1478
        %v1982 = vsel %vm1967, %v1949, %v1480
        %v1983 = vsel %vm1967, %v1950, %v1482
        %v1984 = vsel %vm1967, %v1951, %v1484
        %v1985 = vsel %vm1967, %v1952, %v1486
        %v1986 = vsel %vm1967, %v1953, %v1488
        %v1987 = vsel %vm1967, %v1954, %v1490
        %v1988 = vsel %vm1967, %v1955, %v1492
        %v1989 = vsel %vm1967, %v1956, %v1494
        %v1990 = vsel %vm1967, %v1957, %v1496
        %v1991 = vsel %vm1967, %v1958, %v1498
        %v1992 = vsel %vm1967, %v1959, %v1500
        %v1993 = vsel %vm1967, %v1960, %v1502
        %v1994 = vsel %vm1967, %v1961, %v1504
        %v1995 = vsel %vm1967, %v1962, %v1506
        %v1996 = vsel %vm1967, %v1963, %v1508
        %v1997 = vsel %vm1967, %v1964, %v1510
        %v1998 = vsel %vm1967, %v1965, %v1512
        %v1999 = vsel %vm1967, %v1966, %v1514
        %vm2000 = vcmask 228352
        %v2001 = vsel %vm2000, %v1968, %v1580
        %v2002 = vsel %vm2000, %v1969, %v1582
        %v2003 = vsel %vm2000, %v1970, %v1584
        %v2004 = vsel %vm2000, %v1971, %v1586
        %v2005 = vsel %vm2000, %v1972, %v1588
        %v2006 = vsel %vm2000, %v1973, %v1590
        %v2007 = vsel %vm2000, %v1974, %v1592
        %v2008 = vsel %vm2000, %v1975, %v1594
        %v2009 = vsel %vm2000, %v1976, %v1596
        %v2010 = vsel %vm2000, %v1977, %v1598
        %v2011 = vsel %vm2000, %v1978, %v1600
        %v2012 = vsel %vm2000, %v1979, %v1602
        %v2013 = vsel %vm2000, %v1980, %v1604
        %v2014 = vsel %vm2000, %v1981, %v1606
        %v2015 = vsel %vm2000, %v1982, %v1608
        %v2016 = vsel %vm2000, %v1983, %v1610
        %v2017 = vsel %vm2000, %v1984, %v1612
        %v2018 = vsel %vm2000, %v1985, %v1614
        %v2019 = vsel %vm2000, %v1986, %v1616
        %v2020 = vsel %vm2000, %v1987, %v1618
        %v2021 = vsel %vm2000, %v1988, %v1620
        %v2022 = vsel %vm2000, %v1989, %v1622
        %v2023 = vsel %vm2000, %v1990, %v1624
        %v2024 = vsel %vm2000, %v1991, %v1626
        %v2025 = vsel %vm2000, %v1992, %v1628
        %v2026 = vsel %vm2000, %v1993, %v1630
        %v2027 = vsel %vm2000, %v1994, %v1632
        %v2028 = vsel %vm2000, %v1995, %v1634
        %v2029 = vsel %vm2000, %v1996, %v1636
        %v2030 = vsel %vm2000, %v1997, %v1638
        %v2031 = vsel %vm2000, %v1998, %v1640
        %v2032 = vsel %vm2000, %v1999, %v1642
        %vm2033 = vcmask 261120
        %v2034 = vsel %vm2033, %v2001, %v1708
        %v2035 = vsel %vm2033, %v2002, %v1710
        %v2036 = vsel %vm2033, %v2003, %v1712
        %v2037 = vsel %vm2033, %v2004, %v1714
        %v2038 = vsel %vm2033, %v2005, %v1716
        %v2039 = vsel %vm2033, %v2006, %v1718
        %v2040 = vsel %vm2033, %v2007, %v1720
        %v2041 = vsel %vm2033, %v2008, %v1722
        %v2042 = vsel %vm2033, %v2009, %v1724
        %v2043 = vsel %vm2033, %v2010, %v1726
        %v2044 = vsel %vm2033, %v2011, %v1728
        %v2045 = vsel %vm2033, %v2012, %v1730
        %v2046 = vsel %vm2033, %v2013, %v1732
        %v2047 = vsel %vm2033, %v2014, %v1734
        %v2048 = vsel %vm2033, %v2015, %v1736
        %v2049 = vsel %vm2033, %v2016, %v1738
        %v2050 = vsel %vm2033, %v2017, %v1740
        %v2051 = vsel %vm2033, %v2018, %v1742
        %v2052 = vsel %vm2033, %v2019, %v1744
        %v2053 = vsel %vm2033, %v2020, %v1746
        %v2054 = vsel %vm2033, %v2021, %v1748
        %v2055 = vsel %vm2033, %v2022, %v1750
        %v2056 = vsel %vm2033, %v2023, %v1752
        %v2057 = vsel %vm2033, %v2024, %v1754
        %v2058 = vsel %vm2033, %v2025, %v1756
        %v2059 = vsel %vm2033, %v2026, %v1758
        %v2060 = vsel %vm2033, %v2027, %v1760
        %v2061 = vsel %vm2033, %v2028, %v1762
        %v2062 = vsel %vm2033, %v2029, %v1764
        %v2063 = vsel %vm2033, %v2030, %v1766
        %v2064 = vsel %vm2033, %v2031, %v1768
        %v2065 = vsel %vm2033, %v2032, %v1770
        %v2066 = vpack.c.bf16 %v2035, %v2034
        %v2067 = vpack.c.bf16 %v2037, %v2036
        %v2068 = vpack.c.bf16 %v2039, %v2038
        %v2069 = vpack.c.bf16 %v2041, %v2040
        %v2070 = vpack.c.bf16 %v2043, %v2042
        %v2071 = vpack.c.bf16 %v2045, %v2044
        %v2072 = vpack.c.bf16 %v2047, %v2046
        %v2073 = vpack.c.bf16 %v2049, %v2048
        %v2074 = vpack.c.bf16 %v2051, %v2050
        %v2075 = vpack.c.bf16 %v2053, %v2052
        %v2076 = vpack.c.bf16 %v2055, %v2054
        %v2077 = vpack.c.bf16 %v2057, %v2056
        %v2078 = vpack.c.bf16 %v2059, %v2058
        %v2079 = vpack.c.bf16 %v2061, %v2060
        %v2080 = vpack.c.bf16 %v2063, %v2062
        %v2081 = vpack.c.bf16 %v2065, %v2064
        %v2082 = vld [vmem:[%s1] sm:$0xf]
        %v2083 = vld [vmem:[%s1 + $0x4] sm:$0xf]
        %v2084 = vld [vmem:[%s1 + $0x8] sm:$0xf]
        %v2085 = vld [vmem:[%s1 + $0xc] sm:$0xf]
        %v2086 = vld [vmem:[%s1 + $0x10] sm:$0x3]
        %v2087 = vld [vmem:[%s2] sm:$0x1]
        %v2089 = vlaneseq
        %v2090 = vshrl.u32 %v2089, 7
        %v2091 = vsub.s32 0, %v2090
        %v2092 = vrot.slane %v2087, %v2091
        %v2099 = vunpack.c.l.b16 %v2082
        %v2100 = vunpack.c.l.b16 %v2083
        %v2101 = vunpack.c.l.b16 %v2084
        %v2102 = vunpack.c.l.b16 %v2085
        %v2103 = vunpack.c.l.b16 %v2086
        %v2104 = vpack.c.b16 %v2100, %v2099
        %v2105 = vpack.c.b16 %v2102, %v2101
        %v2106 = vpack.c.b16 %v2103, %v2103
        %vm2109 = vcmask 293888
        %v2111 = vsel %vm2109, %v2066, 0
        %v2114 = vsel %vm2109, %v2067, 0
        %v2117 = vsel %vm2109, %v2068, 0
        %v2120 = vsel %vm2109, %v2069, 0
        %v2123 = vsel %vm2109, %v2070, 0
        %v2126 = vsel %vm2109, %v2071, 0
        %v2129 = vsel %vm2109, %v2072, 0
        %v2132 = vsel %vm2109, %v2073, 0
        %v2135 = vsel %vm2109, %v2074, 0
        %v2138 = vsel %vm2109, %v2075, 0
        %v2141 = vsel %vm2109, %v2076, 0
        %v2144 = vsel %vm2109, %v2077, 0
        %v2147 = vsel %vm2109, %v2078, 0
        %v2150 = vsel %vm2109, %v2079, 0
        %v2153 = vsel %vm2109, %v2080, 0
        %v2156 = vsel %vm2109, %v2081, 0
        %vm2158 = vcmask 1041408
        %v2160 = vsel %vm2158, %v2106, 0
        %2162 = vmatprep.subr.bf16.mxu0 0
        %2163 = vmatpush1.bf16.msra.mxu0 %v2104
        %2164 = vmatprep.subr.bf16.mxu0 0
        %2165 = vmatpush1.bf16.msra.mxu0 %v2105
        %2166 = vmatprep.subr.bf16.mxu0 0
        %2167 = vmatpush1.bf16.msra.mxu0 %v2160
        %2168 = vmatprep.subr.bf16.mxu0 0
        %2169 = vmatpush1.bf16.msra.mxu0 0
        %2170 = vmatprep.subr.bf16.mxu0 0
        %2171 = vmatpush1.bf16.msra.mxu0 0
        %2172 = vmatprep.subr.bf16.mxu0 0
        %2173 = vmatpush1.bf16.msra.mxu0 0
        %2174 = vmatprep.subr.bf16.mxu0 0
        %2175 = vmatpush1.bf16.msra.mxu0 0
        %2176 = vmatprep.subr.bf16.mxu0 0
        %2177 = vmatpush1.bf16.msra.mxu0 0
        %2178 = vmatprep.subr.bf16.mxu0 0
        %2179 = vmatpush1.bf16.msra.mxu0 0
        %2180 = vmatprep.subr.bf16.mxu0 0
        %2181 = vmatpush1.bf16.msra.mxu0 0
        %2182 = vmatprep.subr.bf16.mxu0 0
        %2183 = vmatpush1.bf16.msra.mxu0 0
        %2184 = vmatprep.subr.bf16.mxu0 0
        %2185 = vmatpush1.bf16.msra.mxu0 0
        %2186 = vmatprep.subr.bf16.mxu0 0
        %2187 = vmatpush1.bf16.msra.mxu0 0
        %2188 = vmatprep.subr.bf16.mxu0 0
        %2189 = vmatpush1.bf16.msra.mxu0 0
        %2190 = vmatprep.subr.bf16.mxu0 0
        %2191 = vmatpush1.bf16.msra.mxu0 0
        %2192 = vmatprep.subr.bf16.mxu0 0
        %2193 = vmatpush1.bf16.msra.mxu0 0
        %2194 = vmatprep.mubr.bf16.mxu0 0
        %2195 = vmatmul.mubr.bf16.gmra.mrb[0].mxu0 %v2111
        %v2196 = vpop.f32.mrb[0].mxu0
        %v2197 = vadd.f32 %v2092, %v2196
        %v2198 = vpop.f32.mrb[0].mxu0
        %v2199 = vpop.f32.mrb[0].mxu0
        %v2200 = vadd.f32 %v2092, %v2199
        %v2201 = vpop.f32.mrb[0].mxu0
        %2202 = vmatprep.mubr.bf16.mxu0 0
        %2203 = vmatmul.mubr.bf16.gmra.mrb[0].mxu0 %v2114
        %v2204 = vpop.f32.mrb[0].mxu0
        %v2205 = vadd.f32 %v2092, %v2204
        %v2206 = vpop.f32.mrb[0].mxu0
        %v2207 = vpop.f32.mrb[0].mxu0
        %v2208 = vadd.f32 %v2092, %v2207
        %v2209 = vpop.f32.mrb[0].mxu0
        %2210 = vmatprep.mubr.bf16.mxu0 0
        %2211 = vmatmul.mubr.bf16.gmra.mrb[0].mxu0 %v2117
        %v2212 = vpop.f32.mrb[0].mxu0
        %v2213 = vadd.f32 %v2092, %v2212
        %v2214 = vpop.f32.mrb[0].mxu0
        %v2215 = vpop.f32.mrb[0].mxu0
        %v2216 = vadd.f32 %v2092, %v2215
        %v2217 = vpop.f32.mrb[0].mxu0
        %2218 = vmatprep.mubr.bf16.mxu0 0
        %2219 = vmatmul.mubr.bf16.gmra.mrb[0].mxu0 %v2120
        %v2220 = vpop.f32.mrb[0].mxu0
        %v2221 = vadd.f32 %v2092, %v2220
        %v2222 = vpop.f32.mrb[0].mxu0
        %v2223 = vpop.f32.mrb[0].mxu0
        %v2224 = vadd.f32 %v2092, %v2223
        %v2225 = vpop.f32.mrb[0].mxu0
        %2226 = vmatprep.mubr.bf16.mxu0 0
        %2227 = vmatmul.mubr.bf16.gmra.mrb[0].mxu0 %v2123
        %v2228 = vpop.f32.mrb[0].mxu0
        %v2229 = vadd.f32 %v2092, %v2228
        %v2230 = vpop.f32.mrb[0].mxu0
        %v2231 = vpop.f32.mrb[0].mxu0
        %v2232 = vadd.f32 %v2092, %v2231
        %v2233 = vpop.f32.mrb[0].mxu0
        %2234 = vmatprep.mubr.bf16.mxu0 0
        %2235 = vmatmul.mubr.bf16.gmra.mrb[0].mxu0 %v2126
        %v2236 = vpop.f32.mrb[0].mxu0
        %v2237 = vadd.f32 %v2092, %v2236
        %v2238 = vpop.f32.mrb[0].mxu0
        %v2239 = vpop.f32.mrb[0].mxu0
        %v2240 = vadd.f32 %v2092, %v2239
        %v2241 = vpop.f32.mrb[0].mxu0
        %2242 = vmatprep.mubr.bf16.mxu0 0
        %2243 = vmatmul.mubr.bf16.gmra.mrb[0].mxu0 %v2129
        %v2244 = vpop.f32.mrb[0].mxu0
        %v2245 = vadd.f32 %v2092, %v2244
        %v2246 = vpop.f32.mrb[0].mxu0
        %v2247 = vpop.f32.mrb[0].mxu0
        %v2248 = vadd.f32 %v2092, %v2247
        %v2249 = vpop.f32.mrb[0].mxu0
        %2250 = vmatprep.mubr.bf16.mxu0 0
        %2251 = vmatmul.mubr.bf16.gmra.mrb[0].mxu0 %v2132
        %v2252 = vpop.f32.mrb[0].mxu0
        %v2253 = vadd.f32 %v2092, %v2252
        %v2254 = vpop.f32.mrb[0].mxu0
        %v2255 = vpop.f32.mrb[0].mxu0
        %v2256 = vadd.f32 %v2092, %v2255
        %v2257 = vpop.f32.mrb[0].mxu0
        %2258 = vmatprep.mubr.bf16.mxu0 0
        %2259 = vmatmul.mubr.bf16.gmra.mrb[0].mxu0 %v2135
        %v2260 = vpop.f32.mrb[0].mxu0
        %v2261 = vadd.f32 %v2092, %v2260
        %v2262 = vpop.f32.mrb[0].mxu0
        %v2263 = vpop.f32.mrb[0].mxu0
        %v2264 = vadd.f32 %v2092, %v2263
        %v2265 = vpop.f32.mrb[0].mxu0
        %2266 = vmatprep.mubr.bf16.mxu0 0
        %2267 = vmatmul.mubr.bf16.gmra.mrb[0].mxu0 %v2138
        %v2268 = vpop.f32.mrb[0].mxu0
        %v2269 = vadd.f32 %v2092, %v2268
        %v2270 = vpop.f32.mrb[0].mxu0
        %v2271 = vpop.f32.mrb[0].mxu0
        %v2272 = vadd.f32 %v2092, %v2271
        %v2273 = vpop.f32.mrb[0].mxu0
        %2274 = vmatprep.mubr.bf16.mxu0 0
        %2275 = vmatmul.mubr.bf16.gmra.mrb[0].mxu0 %v2141
        %v2276 = vpop.f32.mrb[0].mxu0
        %v2277 = vadd.f32 %v2092, %v2276
        %v2278 = vpop.f32.mrb[0].mxu0
        %v2279 = vpop.f32.mrb[0].mxu0
        %v2280 = vadd.f32 %v2092, %v2279
        %v2281 = vpop.f32.mrb[0].mxu0
        %2282 = vmatprep.mubr.bf16.mxu0 0
        %2283 = vmatmul.mubr.bf16.gmra.mrb[0].mxu0 %v2144
        %v2284 = vpop.f32.mrb[0].mxu0
        %v2285 = vadd.f32 %v2092, %v2284
        %v2286 = vpop.f32.mrb[0].mxu0
        %v2287 = vpop.f32.mrb[0].mxu0
        %v2288 = vadd.f32 %v2092, %v2287
        %v2289 = vpop.f32.mrb[0].mxu0
        %2290 = vmatprep.mubr.bf16.mxu0 0
        %2291 = vmatmul.mubr.bf16.gmra.mrb[0].mxu0 %v2147
        %v2292 = vpop.f32.mrb[0].mxu0
        %v2293 = vadd.f32 %v2092, %v2292
        %v2294 = vpop.f32.mrb[0].mxu0
        %v2295 = vpop.f32.mrb[0].mxu0
        %v2296 = vadd.f32 %v2092, %v2295
        %v2297 = vpop.f32.mrb[0].mxu0
        %2298 = vmatprep.mubr.bf16.mxu0 0
        %2299 = vmatmul.mubr.bf16.gmra.mrb[0].mxu0 %v2150
        %v2300 = vpop.f32.mrb[0].mxu0
        %v2301 = vadd.f32 %v2092, %v2300
        %v2302 = vpop.f32.mrb[0].mxu0
        %v2303 = vpop.f32.mrb[0].mxu0
        %v2304 = vadd.f32 %v2092, %v2303
        %v2305 = vpop.f32.mrb[0].mxu0
        %2306 = vmatprep.mubr.bf16.mxu0 0
        %2307 = vmatmul.mubr.bf16.gmra.mrb[0].mxu0 %v2153
        %v2308 = vpop.f32.mrb[0].mxu0
        %v2309 = vadd.f32 %v2092, %v2308
        %v2310 = vpop.f32.mrb[0].mxu0
        %v2311 = vpop.f32.mrb[0].mxu0
        %v2312 = vadd.f32 %v2092, %v2311
        %v2313 = vpop.f32.mrb[0].mxu0
        %2314 = vmatprep.mubr.bf16.mxu0 0
        %2315 = vmatmul.mubr.bf16.gmra.mrb[0].mxu0 %v2156
        %v2316 = vpop.f32.mrb[0].mxu0
        %v2317 = vadd.f32 %v2092, %v2316
        %v2318 = vpop.f32.mrb[0].mxu0
        %v2319 = vpop.f32.mrb[0].mxu0
        %v2320 = vadd.f32 %v2092, %v2319
        %v2321 = vpop.f32.mrb[0].mxu0
        %2322 = vdwg.mxu0
        %v2323 = vmax.f32 %v2197, 0.0
        %v2324 = vmax.f32 %v2200, 0.0
        %v2325 = vmax.f32 %v2205, 0.0
        %v2326 = vmax.f32 %v2208, 0.0
        %v2327 = vmax.f32 %v2213, 0.0
        %v2328 = vmax.f32 %v2216, 0.0
        %v2329 = vmax.f32 %v2221, 0.0
        %v2330 = vmax.f32 %v2224, 0.0
        %v2331 = vmax.f32 %v2229, 0.0
        %v2332 = vmax.f32 %v2232, 0.0
        %v2333 = vmax.f32 %v2237, 0.0
        %v2334 = vmax.f32 %v2240, 0.0
        %v2335 = vmax.f32 %v2245, 0.0
        %v2336 = vmax.f32 %v2248, 0.0
        %v2337 = vmax.f32 %v2253, 0.0
        %v2338 = vmax.f32 %v2256, 0.0
        %v2339 = vmax.f32 %v2261, 0.0
        %v2340 = vmax.f32 %v2264, 0.0
        %v2341 = vmax.f32 %v2269, 0.0
        %v2342 = vmax.f32 %v2272, 0.0
        %v2343 = vmax.f32 %v2277, 0.0
        %v2344 = vmax.f32 %v2280, 0.0
        %v2345 = vmax.f32 %v2285, 0.0
        %v2346 = vmax.f32 %v2288, 0.0
        %v2347 = vmax.f32 %v2293, 0.0
        %v2348 = vmax.f32 %v2296, 0.0
        %v2349 = vmax.f32 %v2301, 0.0
        %v2350 = vmax.f32 %v2304, 0.0
        %v2351 = vmax.f32 %v2309, 0.0
        %v2352 = vmax.f32 %v2312, 0.0
        %v2353 = vmax.f32 %v2317, 0.0
        %v2354 = vmax.f32 %v2320, 0.0
        %2355 = vst.msk [vmem:[#allocation3] sm:$0xff] %vm1835, %v2323
        %2356 = vst.msk [vmem:[#allocation3 + $0x8] sm:$0xff] %vm1835, %v2324
        %2357 = vst.msk [vmem:[#allocation3 + $0x10] sm:$0xff] %vm1835, %v2325
        %2358 = vst.msk [vmem:[#allocation3 + $0x18] sm:$0xff] %vm1835, %v2326
        %2359 = vst.msk [vmem:[#allocation3 + $0x20] sm:$0xff] %vm1835, %v2327
        %2360 = vst.msk [vmem:[#allocation3 + $0x28] sm:$0xff] %vm1835, %v2328
        %2361 = vst.msk [vmem:[#allocation3 + $0x30] sm:$0xff] %vm1835, %v2329
        %2362 = vst.msk [vmem:[#allocation3 + $0x38] sm:$0xff] %vm1835, %v2330
        %2363 = vst.msk [vmem:[#allocation3 + $0x40] sm:$0xff] %vm1835, %v2331
        %2364 = vst.msk [vmem:[#allocation3 + $0x48] sm:$0xff] %vm1835, %v2332
        %2365 = vst.msk [vmem:[#allocation3 + $0x50] sm:$0xff] %vm1835, %v2333
        %2366 = vst.msk [vmem:[#allocation3 + $0x58] sm:$0xff] %vm1835, %v2334
        %2367 = vst.msk [vmem:[#allocation3 + $0x60] sm:$0xff] %vm1835, %v2335
        %2368 = vst.msk [vmem:[#allocation3 + $0x68] sm:$0xff] %vm1835, %v2336
        %2369 = vst.msk [vmem:[#allocation3 + $0x70] sm:$0xff] %vm1835, %v2337
        %2370 = vst.msk [vmem:[#allocation3 + $0x78] sm:$0xff] %vm1835, %v2338
        %2371 = vst.msk [vmem:[#allocation3 + $0x80] sm:$0xff] %vm1835, %v2339
        %2372 = vst.msk [vmem:[#allocation3 + $0x88] sm:$0xff] %vm1835, %v2340
        %2373 = vst.msk [vmem:[#allocation3 + $0x90] sm:$0xff] %vm1835, %v2341
        %2374 = vst.msk [vmem:[#allocation3 + $0x98] sm:$0xff] %vm1835, %v2342
        %2375 = vst.msk [vmem:[#allocation3 + $0xa0] sm:$0xff] %vm1835, %v2343
        %2376 = vst.msk [vmem:[#allocation3 + $0xa8] sm:$0xff] %vm1835, %v2344
        %2377 = vst.msk [vmem:[#allocation3 + $0xb0] sm:$0xff] %vm1835, %v2345
        %2378 = vst.msk [vmem:[#allocation3 + $0xb8] sm:$0xff] %vm1835, %v2346
        %2379 = vst.msk [vmem:[#allocation3 + $0xc0] sm:$0xff] %vm1835, %v2347
        %2380 = vst.msk [vmem:[#allocation3 + $0xc8] sm:$0xff] %vm1835, %v2348
        %2381 = vst.msk [vmem:[#allocation3 + $0xd0] sm:$0xff] %vm1835, %v2349
        %2382 = vst.msk [vmem:[#allocation3 + $0xd8] sm:$0xff] %vm1835, %v2350
        %2383 = vst.msk [vmem:[#allocation3 + $0xe0] sm:$0xff] %vm1835, %v2351
        %2384 = vst.msk [vmem:[#allocation3 + $0xe8] sm:$0xff] %vm1835, %v2352
        %2385 = vst.msk [vmem:[#allocation3 + $0xf0] sm:$0xff] %vm1835, %v2353
        %2386 = vst.msk [vmem:[#allocation3 + $0xf8] sm:$0xff] %vm1835, %v2354
        %v2387 = vld [vmem:[#allocation3] sm:$0xff]
        %v2388 = vld [vmem:[#allocation3 + $0x8] sm:$0xff]
        %v2389 = vld [vmem:[#allocation3 + $0x20] sm:$0xff]
        %v2390 = vld [vmem:[#allocation3 + $0x28] sm:$0xff]
        %v2391 = vld [vmem:[#allocation3 + $0x40] sm:$0xff]
        %v2392 = vld [vmem:[#allocation3 + $0x48] sm:$0xff]
        %v2393 = vld [vmem:[#allocation3 + $0x60] sm:$0xff]
        %v2394 = vld [vmem:[#allocation3 + $0x68] sm:$0xff]
        %v2395 = vld [vmem:[#allocation3 + $0x80] sm:$0xff]
        %v2396 = vld [vmem:[#allocation3 + $0x88] sm:$0xff]
        %v2397 = vld [vmem:[#allocation3 + $0xa0] sm:$0xff]
        %v2398 = vld [vmem:[#allocation3 + $0xa8] sm:$0xff]
        %v2399 = vld [vmem:[#allocation3 + $0xc0] sm:$0xff]
        %v2400 = vld [vmem:[#allocation3 + $0xc8] sm:$0xff]
        %v2401 = vld [vmem:[#allocation3 + $0xe0] sm:$0xff]
        %v2402 = vld [vmem:[#allocation3 + $0xe8] sm:$0xff]
        %s2403 = scalar_lea.vmem [#allocation3], 16
        %v2404 = vld [vmem:[%s2403] sm:$0xff]
        %v2405 = vld [vmem:[%s2403 + $0x8] sm:$0xff]
        %v2406 = vld [vmem:[%s2403 + $0x20] sm:$0xff]
        %v2407 = vld [vmem:[%s2403 + $0x28] sm:$0xff]
        %v2408 = vld [vmem:[%s2403 + $0x40] sm:$0xff]
        %v2409 = vld [vmem:[%s2403 + $0x48] sm:$0xff]
        %v2410 = vld [vmem:[%s2403 + $0x60] sm:$0xff]
        %v2411 = vld [vmem:[%s2403 + $0x68] sm:$0xff]
        %v2412 = vld [vmem:[%s2403 + $0x80] sm:$0xff]
        %v2413 = vld [vmem:[%s2403 + $0x88] sm:$0xff]
        %v2414 = vld [vmem:[%s2403 + $0xa0] sm:$0xff]
        %v2415 = vld [vmem:[%s2403 + $0xa8] sm:$0xff]
        %v2416 = vld [vmem:[%s2403 + $0xc0] sm:$0xff]
        %v2417 = vld [vmem:[%s2403 + $0xc8] sm:$0xff]
        %v2418 = vld [vmem:[%s2403 + $0xe0] sm:$0xff]
        %v2419 = vld [vmem:[%s2403 + $0xe8] sm:$0xff]
        %v2420 = vmax.f32 %v2387, %v2404
        %v2421 = vmax.f32 %v2388, %v2405
        %v2422 = vmax.f32 %v2389, %v2406
        %v2423 = vmax.f32 %v2390, %v2407
        %v2424 = vmax.f32 %v2391, %v2408
        %v2425 = vmax.f32 %v2392, %v2409
        %v2426 = vmax.f32 %v2393, %v2410
        %v2427 = vmax.f32 %v2394, %v2411
        %v2428 = vmax.f32 %v2395, %v2412
        %v2429 = vmax.f32 %v2396, %v2413
        %v2430 = vmax.f32 %v2397, %v2414
        %v2431 = vmax.f32 %v2398, %v2415
        %v2432 = vmax.f32 %v2399, %v2416
        %v2433 = vmax.f32 %v2400, %v2417
        %v2434 = vmax.f32 %v2401, %v2418
        %v2435 = vmax.f32 %v2402, %v2419
        %2436 = vst.msk [vmem:[#allocation4] sm:$0xff] %vm1835, %v2420
        %2437 = vst.msk [vmem:[#allocation4 + $0x8] sm:$0xff] %vm1835, %v2421
        %2438 = vst.msk [vmem:[#allocation4 + $0x10] sm:$0xff] %vm1835, %v2422
        %2439 = vst.msk [vmem:[#allocation4 + $0x18] sm:$0xff] %vm1835, %v2423
        %2440 = vst.msk [vmem:[#allocation4 + $0x20] sm:$0xff] %vm1835, %v2424
        %2441 = vst.msk [vmem:[#allocation4 + $0x28] sm:$0xff] %vm1835, %v2425
        %2442 = vst.msk [vmem:[#allocation4 + $0x30] sm:$0xff] %vm1835, %v2426
        %2443 = vst.msk [vmem:[#allocation4 + $0x38] sm:$0xff] %vm1835, %v2427
        %2444 = vst.msk [vmem:[#allocation4 + $0x40] sm:$0xff] %vm1835, %v2428
        %2445 = vst.msk [vmem:[#allocation4 + $0x48] sm:$0xff] %vm1835, %v2429
        %2446 = vst.msk [vmem:[#allocation4 + $0x50] sm:$0xff] %vm1835, %v2430
        %2447 = vst.msk [vmem:[#allocation4 + $0x58] sm:$0xff] %vm1835, %v2431
        %2448 = vst.msk [vmem:[#allocation4 + $0x60] sm:$0xff] %vm1835, %v2432
        %2449 = vst.msk [vmem:[#allocation4 + $0x68] sm:$0xff] %vm1835, %v2433
        %2450 = vst.msk [vmem:[#allocation4 + $0x70] sm:$0xff] %vm1835, %v2434
        %2451 = vst.msk [vmem:[#allocation4 + $0x78] sm:$0xff] %vm1835, %v2435
        %v2452 = vld [vmem:[#allocation4] ss:$2 sm:$0xff]
        %s2453 = scalar_lea.vmem [#allocation4], 16
        %v2454 = vld [vmem:[%s2453] ss:$2 sm:$0xff]
        %s2455 = scalar_lea.vmem [#allocation4], 32
        %v2456 = vld [vmem:[%s2455] ss:$2 sm:$0xff]
        %s2457 = scalar_lea.vmem [#allocation4], 48
        %v2458 = vld [vmem:[%s2457] ss:$2 sm:$0xff]
        %s2459 = scalar_lea.vmem [#allocation4], 64
        %v2460 = vld [vmem:[%s2459] ss:$2 sm:$0xff]
        %s2461 = scalar_lea.vmem [#allocation4], 80
        %v2462 = vld [vmem:[%s2461] ss:$2 sm:$0xff]
        %s2463 = scalar_lea.vmem [#allocation4], 96
        %v2464 = vld [vmem:[%s2463] ss:$2 sm:$0xff]
        %s2465 = scalar_lea.vmem [#allocation4], 112
        %v2466 = vld [vmem:[%s2465] ss:$2 sm:$0xff]
        %s2467 = scalar_lea.vmem [#allocation4], 1
        %v2468 = vld [vmem:[%s2467] ss:$2 sm:$0xff]
        %s2469 = scalar_lea.vmem [#allocation4], 17
        %v2470 = vld [vmem:[%s2469] ss:$2 sm:$0xff]
        %s2471 = scalar_lea.vmem [#allocation4], 33
        %v2472 = vld [vmem:[%s2471] ss:$2 sm:$0xff]
        %s2473 = scalar_lea.vmem [#allocation4], 49
        %v2474 = vld [vmem:[%s2473] ss:$2 sm:$0xff]
        %s2475 = scalar_lea.vmem [#allocation4], 65
        %v2476 = vld [vmem:[%s2475] ss:$2 sm:$0xff]
        %s2477 = scalar_lea.vmem [#allocation4], 81
        %v2478 = vld [vmem:[%s2477] ss:$2 sm:$0xff]
        %s2479 = scalar_lea.vmem [#allocation4], 97
        %v2480 = vld [vmem:[%s2479] ss:$2 sm:$0xff]
        %s2481 = scalar_lea.vmem [#allocation4], 113
        %v2482 = vld [vmem:[%s2481] ss:$2 sm:$0xff]
        %v2483 = vmax.f32 %v2452, %v2468
        %v2484 = vmax.f32 %v2454, %v2470
        %v2485 = vmax.f32 %v2456, %v2472
        %v2486 = vmax.f32 %v2458, %v2474
        %v2487 = vmax.f32 %v2460, %v2476
        %v2488 = vmax.f32 %v2462, %v2478
        %v2489 = vmax.f32 %v2464, %v2480
        %v2490 = vmax.f32 %v2466, %v2482
        %2491 = vst.msk [vmem:[#allocation5] sm:$0xff] %vm1835, 0.0
        %vm2492 = vcmask 58368
        %2493 = vst.msk [vmem:[#allocation5 + $0x8] sm:$0x3] %vm2492, 0.0
        %2494 = vst.msk [vmem:[#allocation5 + $0x10] sm:$0xff] %vm1835, 0.0
        %2495 = vst.msk [vmem:[#allocation5 + $0x18] sm:$0x3] %vm2492, 0.0
        %2496 = vst.msk [vmem:[#allocation5 + $0x20] sm:$0xff] %vm1835, 0.0
        %2497 = vst.msk [vmem:[#allocation5 + $0x28] sm:$0x3] %vm2492, 0.0
        %2498 = vst.msk [vmem:[#allocation5 + $0x30] sm:$0xff] %vm1835, 0.0
        %2499 = vst.msk [vmem:[#allocation5 + $0x38] sm:$0x3] %vm2492, 0.0
        %2500 = vst.msk [vmem:[#allocation5 + $0x40] sm:$0xff] %vm1835, 0.0
        %2501 = vst.msk [vmem:[#allocation5 + $0x48] sm:$0x3] %vm2492, 0.0
        %2502 = vst.msk [vmem:[#allocation5 + $0x50] sm:$0xff] %vm1835, 0.0
        %2503 = vst.msk [vmem:[#allocation5 + $0x58] sm:$0x3] %vm2492, 0.0
        %2504 = vst.msk [vmem:[#allocation5 + $0x60] sm:$0xff] %vm1835, 0.0
        %2505 = vst.msk [vmem:[#allocation5 + $0x68] sm:$0x3] %vm2492, 0.0
        %2506 = vst.msk [vmem:[#allocation5 + $0x70] sm:$0xff] %vm1835, 0.0
        %2507 = vst.msk [vmem:[#allocation5 + $0x78] sm:$0x3] %vm2492, 0.0
        %2508 = vst.msk [vmem:[#allocation5 + $0x80] sm:$0xff] %vm1835, 0.0
        %2509 = vst.msk [vmem:[#allocation5 + $0x88] sm:$0x3] %vm2492, 0.0
        %2510 = vst.msk [vmem:[#allocation5 + $0x90] sm:$0xff] %vm1835, 0.0
        %2511 = vst.msk [vmem:[#allocation5 + $0x98] sm:$0x3] %vm2492, 0.0
        %s2512 = scalar_lea.vmem [#allocation5], 16
        %2513 = vst.msk [vmem:[%s2512 + $0x1] sm:$0xff] %vm1835, %v2483
        %2514 = vst.msk [vmem:[%s2512 + $0x11] sm:$0xff] %vm1835, %v2484
        %2515 = vst.msk [vmem:[%s2512 + $0x21] sm:$0xff] %vm1835, %v2485
        %2516 = vst.msk [vmem:[%s2512 + $0x31] sm:$0xff] %vm1835, %v2486
        %2517 = vst.msk [vmem:[%s2512 + $0x41] sm:$0xff] %vm1835, %v2487
        %2518 = vst.msk [vmem:[%s2512 + $0x51] sm:$0xff] %vm1835, %v2488
        %2519 = vst.msk [vmem:[%s2512 + $0x61] sm:$0xff] %vm1835, %v2489
        %2520 = vst.msk [vmem:[%s2512 + $0x71] sm:$0xff] %vm1835, %v2490
        %v2521 = vld [vmem:[#allocation5] sm:$0xff]
        %v2522 = vld [vmem:[#allocation5 + $0x10] sm:$0xff]
        %v2523 = vld [vmem:[#allocation5 + $0x20] sm:$0xff]
        %v2524 = vld [vmem:[#allocation5 + $0x30] sm:$0xff]
        %v2525 = vld [vmem:[#allocation5 + $0x40] sm:$0xff]
        %v2526 = vld [vmem:[#allocation5 + $0x50] sm:$0xff]
        %v2527 = vld [vmem:[#allocation5 + $0x60] sm:$0xff]
        %v2528 = vld [vmem:[#allocation5 + $0x70] sm:$0xff]
        %v2529 = vld [vmem:[#allocation5 + $0x1] sm:$0xff]
        %v2530 = vld [vmem:[#allocation5 + $0x11] sm:$0xff]
        %v2531 = vld [vmem:[#allocation5 + $0x21] sm:$0xff]
        %v2532 = vld [vmem:[#allocation5 + $0x31] sm:$0xff]
        %v2533 = vld [vmem:[#allocation5 + $0x41] sm:$0xff]
        %v2534 = vld [vmem:[#allocation5 + $0x51] sm:$0xff]
        %v2535 = vld [vmem:[#allocation5 + $0x61] sm:$0xff]
        %v2536 = vld [vmem:[#allocation5 + $0x71] sm:$0xff]
        %v2537 = vld [vmem:[#allocation5 + $0x2] sm:$0xff]
        %v2538 = vld [vmem:[#allocation5 + $0x12] sm:$0xff]
        %v2539 = vld [vmem:[#allocation5 + $0x22] sm:$0xff]
        %v2540 = vld [vmem:[#allocation5 + $0x32] sm:$0xff]
        %v2541 = vld [vmem:[#allocation5 + $0x42] sm:$0xff]
        %v2542 = vld [vmem:[#allocation5 + $0x52] sm:$0xff]
        %v2543 = vld [vmem:[#allocation5 + $0x62] sm:$0xff]
        %v2544 = vld [vmem:[#allocation5 + $0x72] sm:$0xff]
        %v2545 = vld [vmem:[%s2512] sm:$0xff]
        %v2546 = vld [vmem:[%s2512 + $0x10] sm:$0xff]
        %v2547 = vld [vmem:[%s2512 + $0x20] sm:$0xff]
        %v2548 = vld [vmem:[%s2512 + $0x30] sm:$0xff]
        %v2549 = vld [vmem:[%s2512 + $0x40] sm:$0xff]
        %v2550 = vld [vmem:[%s2512 + $0x50] sm:$0xff]
        %v2551 = vld [vmem:[%s2512 + $0x60] sm:$0xff]
        %v2552 = vld [vmem:[%s2512 + $0x70] sm:$0xff]
        %v2553 = vld [vmem:[%s2512 + $0x1] sm:$0xff]
        %v2554 = vld [vmem:[%s2512 + $0x11] sm:$0xff]
        %v2555 = vld [vmem:[%s2512 + $0x21] sm:$0xff]
        %v2556 = vld [vmem:[%s2512 + $0x31] sm:$0xff]
        %v2557 = vld [vmem:[%s2512 + $0x41] sm:$0xff]
        %v2558 = vld [vmem:[%s2512 + $0x51] sm:$0xff]
        %v2559 = vld [vmem:[%s2512 + $0x61] sm:$0xff]
        %v2560 = vld [vmem:[%s2512 + $0x71] sm:$0xff]
        %v2561 = vld [vmem:[%s2512 + $0x2] sm:$0xff]
        %v2562 = vld [vmem:[%s2512 + $0x12] sm:$0xff]
        %v2563 = vld [vmem:[%s2512 + $0x22] sm:$0xff]
        %v2564 = vld [vmem:[%s2512 + $0x32] sm:$0xff]
        %v2565 = vld [vmem:[%s2512 + $0x42] sm:$0xff]
        %v2566 = vld [vmem:[%s2512 + $0x52] sm:$0xff]
        %v2567 = vld [vmem:[%s2512 + $0x62] sm:$0xff]
        %v2568 = vld [vmem:[%s2512 + $0x72] sm:$0xff]
        %s2569 = scalar_lea.vmem [#allocation5], 32
        %v2570 = vld [vmem:[%s2569] sm:$0xff]
        %v2571 = vld [vmem:[%s2569 + $0x10] sm:$0xff]
        %v2572 = vld [vmem:[%s2569 + $0x20] sm:$0xff]
        %v2573 = vld [vmem:[%s2569 + $0x30] sm:$0xff]
        %v2574 = vld [vmem:[%s2569 + $0x40] sm:$0xff]
        %v2575 = vld [vmem:[%s2569 + $0x50] sm:$0xff]
        %v2576 = vld [vmem:[%s2569 + $0x60] sm:$0xff]
        %v2577 = vld [vmem:[%s2569 + $0x70] sm:$0xff]
        %v2578 = vld [vmem:[%s2569 + $0x1] sm:$0xff]
        %v2579 = vld [vmem:[%s2569 + $0x11] sm:$0xff]
        %v2580 = vld [vmem:[%s2569 + $0x21] sm:$0xff]
        %v2581 = vld [vmem:[%s2569 + $0x31] sm:$0xff]
        %v2582 = vld [vmem:[%s2569 + $0x41] sm:$0xff]
        %v2583 = vld [vmem:[%s2569 + $0x51] sm:$0xff]
        %v2584 = vld [vmem:[%s2569 + $0x61] sm:$0xff]
        %v2585 = vld [vmem:[%s2569 + $0x71] sm:$0xff]
        %v2586 = vld [vmem:[%s2569 + $0x2] sm:$0xff]
        %v2587 = vld [vmem:[%s2569 + $0x12] sm:$0xff]
        %v2588 = vld [vmem:[%s2569 + $0x22] sm:$0xff]
        %v2589 = vld [vmem:[%s2569 + $0x32] sm:$0xff]
        %v2590 = vld [vmem:[%s2569 + $0x42] sm:$0xff]
        %v2591 = vld [vmem:[%s2569 + $0x52] sm:$0xff]
        %v2592 = vld [vmem:[%s2569 + $0x62] sm:$0xff]
        %v2593 = vld [vmem:[%s2569 + $0x72] sm:$0xff]
        %2602 = vrot.lane.b32.xlu0 %v2529, 8
        %v2603 = vpop.permute.xlu0 %2602
        %2604 = vrot.lane.b32.xlu0 %v2530, 8
        %v2605 = vpop.permute.xlu0 %2604
        %2606 = vrot.lane.b32.xlu0 %v2531, 8
        %v2607 = vpop.permute.xlu0 %2606
        %2608 = vrot.lane.b32.xlu0 %v2532, 8
        %v2609 = vpop.permute.xlu0 %2608
        %2610 = vrot.lane.b32.xlu0 %v2533, 8
        %v2611 = vpop.permute.xlu0 %2610
        %2612 = vrot.lane.b32.xlu0 %v2534, 8
        %v2613 = vpop.permute.xlu0 %2612
        %2614 = vrot.lane.b32.xlu0 %v2535, 8
        %v2615 = vpop.permute.xlu0 %2614
        %2616 = vrot.lane.b32.xlu0 %v2536, 8
        %v2617 = vpop.permute.xlu0 %2616
        %2634 = vrot.lane.b32.xlu0 %v2537, 16
        %v2635 = vpop.permute.xlu0 %2634
        %2636 = vrot.lane.b32.xlu0 %v2538, 16
        %v2637 = vpop.permute.xlu0 %2636
        %2638 = vrot.lane.b32.xlu0 %v2539, 16
        %v2639 = vpop.permute.xlu0 %2638
        %2640 = vrot.lane.b32.xlu0 %v2540, 16
        %v2641 = vpop.permute.xlu0 %2640
        %2642 = vrot.lane.b32.xlu0 %v2541, 16
        %v2643 = vpop.permute.xlu0 %2642
        %2644 = vrot.lane.b32.xlu0 %v2542, 16
        %v2645 = vpop.permute.xlu0 %2644
        %2646 = vrot.lane.b32.xlu0 %v2543, 16
        %v2647 = vpop.permute.xlu0 %2646
        %2648 = vrot.lane.b32.xlu0 %v2544, 16
        %v2649 = vpop.permute.xlu0 %2648
        %2666 = vrot.lane.b32.xlu0 %v2545, 24
        %v2667 = vpop.permute.xlu0 %2666
        %2668 = vrot.lane.b32.xlu0 %v2546, 24
        %v2669 = vpop.permute.xlu0 %2668
        %2670 = vrot.lane.b32.xlu0 %v2547, 24
        %v2671 = vpop.permute.xlu0 %2670
        %2672 = vrot.lane.b32.xlu0 %v2548, 24
        %v2673 = vpop.permute.xlu0 %2672
        %2674 = vrot.lane.b32.xlu0 %v2549, 24
        %v2675 = vpop.permute.xlu0 %2674
        %2676 = vrot.lane.b32.xlu0 %v2550, 24
        %v2677 = vpop.permute.xlu0 %2676
        %2678 = vrot.lane.b32.xlu0 %v2551, 24
        %v2679 = vpop.permute.xlu0 %2678
        %2680 = vrot.lane.b32.xlu0 %v2552, 24
        %v2681 = vpop.permute.xlu0 %2680
        %2698 = vrot.lane.b32.xlu0 %v2553, 32
        %v2699 = vpop.permute.xlu0 %2698
        %2700 = vrot.lane.b32.xlu0 %v2554, 32
        %v2701 = vpop.permute.xlu0 %2700
        %2702 = vrot.lane.b32.xlu0 %v2555, 32
        %v2703 = vpop.permute.xlu0 %2702
        %2704 = vrot.lane.b32.xlu0 %v2556, 32
        %v2705 = vpop.permute.xlu0 %2704
        %2706 = vrot.lane.b32.xlu0 %v2557, 32
        %v2707 = vpop.permute.xlu0 %2706
        %2708 = vrot.lane.b32.xlu0 %v2558, 32
        %v2709 = vpop.permute.xlu0 %2708
        %2710 = vrot.lane.b32.xlu0 %v2559, 32
        %v2711 = vpop.permute.xlu0 %2710
        %2712 = vrot.lane.b32.xlu0 %v2560, 32
        %v2713 = vpop.permute.xlu0 %2712
        %2730 = vrot.lane.b32.xlu0 %v2561, 40
        %v2731 = vpop.permute.xlu0 %2730
        %2732 = vrot.lane.b32.xlu0 %v2562, 40
        %v2733 = vpop.permute.xlu0 %2732
        %2734 = vrot.lane.b32.xlu0 %v2563, 40
        %v2735 = vpop.permute.xlu0 %2734
        %2736 = vrot.lane.b32.xlu0 %v2564, 40
        %v2737 = vpop.permute.xlu0 %2736
        %2738 = vrot.lane.b32.xlu0 %v2565, 40
        %v2739 = vpop.permute.xlu0 %2738
        %2740 = vrot.lane.b32.xlu0 %v2566, 40
        %v2741 = vpop.permute.xlu0 %2740
        %2742 = vrot.lane.b32.xlu0 %v2567, 40
        %v2743 = vpop.permute.xlu0 %2742
        %2744 = vrot.lane.b32.xlu0 %v2568, 40
        %v2745 = vpop.permute.xlu0 %2744
        %2762 = vrot.lane.b32.xlu0 %v2570, 48
        %v2763 = vpop.permute.xlu0 %2762
        %2764 = vrot.lane.b32.xlu0 %v2571, 48
        %v2765 = vpop.permute.xlu0 %2764
        %2766 = vrot.lane.b32.xlu0 %v2572, 48
        %v2767 = vpop.permute.xlu0 %2766
        %2768 = vrot.lane.b32.xlu0 %v2573, 48
        %v2769 = vpop.permute.xlu0 %2768
        %2770 = vrot.lane.b32.xlu0 %v2574, 48
        %v2771 = vpop.permute.xlu0 %2770
        %2772 = vrot.lane.b32.xlu0 %v2575, 48
        %v2773 = vpop.permute.xlu0 %2772
        %2774 = vrot.lane.b32.xlu0 %v2576, 48
        %v2775 = vpop.permute.xlu0 %2774
        %2776 = vrot.lane.b32.xlu0 %v2577, 48
        %v2777 = vpop.permute.xlu0 %2776
        %2794 = vrot.lane.b32.xlu0 %v2578, 56
        %v2795 = vpop.permute.xlu0 %2794
        %2796 = vrot.lane.b32.xlu0 %v2579, 56
        %v2797 = vpop.permute.xlu0 %2796
        %2798 = vrot.lane.b32.xlu0 %v2580, 56
        %v2799 = vpop.permute.xlu0 %2798
        %2800 = vrot.lane.b32.xlu0 %v2581, 56
        %v2801 = vpop.permute.xlu0 %2800
        %2802 = vrot.lane.b32.xlu0 %v2582, 56
        %v2803 = vpop.permute.xlu0 %2802
        %2804 = vrot.lane.b32.xlu0 %v2583, 56
        %v2805 = vpop.permute.xlu0 %2804
        %2806 = vrot.lane.b32.xlu0 %v2584, 56
        %v2807 = vpop.permute.xlu0 %2806
        %2808 = vrot.lane.b32.xlu0 %v2585, 56
        %v2809 = vpop.permute.xlu0 %2808
        %2826 = vrot.lane.b32.xlu0 %v2586, 64
        %v2827 = vpop.permute.xlu0 %2826
        %2828 = vrot.lane.b32.xlu0 %v2587, 64
        %v2829 = vpop.permute.xlu0 %2828
        %2830 = vrot.lane.b32.xlu0 %v2588, 64
        %v2831 = vpop.permute.xlu0 %2830
        %2832 = vrot.lane.b32.xlu0 %v2589, 64
        %v2833 = vpop.permute.xlu0 %2832
        %2834 = vrot.lane.b32.xlu0 %v2590, 64
        %v2835 = vpop.permute.xlu0 %2834
        %2836 = vrot.lane.b32.xlu0 %v2591, 64
        %v2837 = vpop.permute.xlu0 %2836
        %2838 = vrot.lane.b32.xlu0 %v2592, 64
        %v2839 = vpop.permute.xlu0 %2838
        %2840 = vrot.lane.b32.xlu0 %v2593, 64
        %v2841 = vpop.permute.xlu0 %2840
        %v2850 = vsel %vm1835, %v2521, %v2603
        %v2851 = vsel %vm1835, %v2522, %v2605
        %v2852 = vsel %vm1835, %v2523, %v2607
        %v2853 = vsel %vm1835, %v2524, %v2609
        %v2854 = vsel %vm1835, %v2525, %v2611
        %v2855 = vsel %vm1835, %v2526, %v2613
        %v2856 = vsel %vm1835, %v2527, %v2615
        %v2857 = vsel %vm1835, %v2528, %v2617
        %v2858 = vsel %vm1901, %v2850, %v2635
        %v2859 = vsel %vm1901, %v2851, %v2637
        %v2860 = vsel %vm1901, %v2852, %v2639
        %v2861 = vsel %vm1901, %v2853, %v2641
        %v2862 = vsel %vm1901, %v2854, %v2643
        %v2863 = vsel %vm1901, %v2855, %v2645
        %v2864 = vsel %vm1901, %v2856, %v2647
        %v2865 = vsel %vm1901, %v2857, %v2649
        %v2866 = vsel %vm1967, %v2858, %v2667
        %v2867 = vsel %vm1967, %v2859, %v2669
        %v2868 = vsel %vm1967, %v2860, %v2671
        %v2869 = vsel %vm1967, %v2861, %v2673
        %v2870 = vsel %vm1967, %v2862, %v2675
        %v2871 = vsel %vm1967, %v2863, %v2677
        %v2872 = vsel %vm1967, %v2864, %v2679
        %v2873 = vsel %vm1967, %v2865, %v2681
        %v2874 = vsel %vm2033, %v2866, %v2699
        %v2875 = vsel %vm2033, %v2867, %v2701
        %v2876 = vsel %vm2033, %v2868, %v2703
        %v2877 = vsel %vm2033, %v2869, %v2705
        %v2878 = vsel %vm2033, %v2870, %v2707
        %v2879 = vsel %vm2033, %v2871, %v2709
        %v2880 = vsel %vm2033, %v2872, %v2711
        %v2881 = vsel %vm2033, %v2873, %v2713
        %vm2882 = vcmask 326656
        %v2883 = vsel %vm2882, %v2874, %v2731
        %v2884 = vsel %vm2882, %v2875, %v2733
        %v2885 = vsel %vm2882, %v2876, %v2735
        %v2886 = vsel %vm2882, %v2877, %v2737
        %v2887 = vsel %vm2882, %v2878, %v2739
        %v2888 = vsel %vm2882, %v2879, %v2741
        %v2889 = vsel %vm2882, %v2880, %v2743
        %v2890 = vsel %vm2882, %v2881, %v2745
        %vm2891 = vcmask 392192
        %v2892 = vsel %vm2891, %v2883, %v2763
        %v2893 = vsel %vm2891, %v2884, %v2765
        %v2894 = vsel %vm2891, %v2885, %v2767
        %v2895 = vsel %vm2891, %v2886, %v2769
        %v2896 = vsel %vm2891, %v2887, %v2771
        %v2897 = vsel %vm2891, %v2888, %v2773
        %v2898 = vsel %vm2891, %v2889, %v2775
        %v2899 = vsel %vm2891, %v2890, %v2777
        %vm2900 = vcmask 457728
        %v2901 = vsel %vm2900, %v2892, %v2795
        %v2902 = vsel %vm2900, %v2893, %v2797
        %v2903 = vsel %vm2900, %v2894, %v2799
        %v2904 = vsel %vm2900, %v2895, %v2801
        %v2905 = vsel %vm2900, %v2896, %v2803
        %v2906 = vsel %vm2900, %v2897, %v2805
        %v2907 = vsel %vm2900, %v2898, %v2807
        %v2908 = vsel %vm2900, %v2899, %v2809
        %vm2909 = vcmask 523264
        %v2910 = vsel %vm2909, %v2901, %v2827
        %v2911 = vsel %vm2909, %v2902, %v2829
        %v2912 = vsel %vm2909, %v2903, %v2831
        %v2913 = vsel %vm2909, %v2904, %v2833
        %v2914 = vsel %vm2909, %v2905, %v2835
        %v2915 = vsel %vm2909, %v2906, %v2837
        %v2916 = vsel %vm2909, %v2907, %v2839
        %v2917 = vsel %vm2909, %v2908, %v2841
        %v2918 = vpack.c.bf16 %v2911, %v2910
        %v2919 = vpack.c.bf16 %v2913, %v2912
        %v2920 = vpack.c.bf16 %v2915, %v2914
        %v2921 = vpack.c.bf16 %v2917, %v2916
        %v2922 = vld [vmem:[%s3] sm:$0xf]
        %v2923 = vld [vmem:[%s3 + $0x4] sm:$0xf]
        %v2924 = vld [vmem:[%s3 + $0x8] sm:$0xf]
        %v2925 = vld [vmem:[%s3 + $0xc] sm:$0xf]
        %v2926 = vld [vmem:[%s3 + $0x10] sm:$0xf]
        %v2927 = vld [vmem:[%s3 + $0x14] sm:$0xf]
        %v2928 = vld [vmem:[%s3 + $0x18] sm:$0xf]
        %v2929 = vld [vmem:[%s3 + $0x1c] sm:$0xf]
        %v2930 = vld [vmem:[%s3 + $0x20] sm:$0xf]
        %v2931 = vld [vmem:[%s4] sm:$0x1]
        %v2933 = vlaneseq
        %v2934 = vshrl.u32 %v2933, 7
        %v2935 = vsub.s32 0, %v2934
        %v2936 = vrot.slane %v2931, %v2935
        %v2947 = vunpack.c.l.b16 %v2922
        %v2948 = vunpack.c.l.b16 %v2923
        %v2949 = vunpack.c.l.b16 %v2924
        %v2950 = vunpack.c.l.b16 %v2925
        %v2951 = vunpack.c.l.b16 %v2926
        %v2952 = vunpack.c.l.b16 %v2927
        %v2953 = vunpack.c.l.b16 %v2928
        %v2954 = vunpack.c.l.b16 %v2929
        %v2955 = vunpack.c.l.b16 %v2930
        %v2956 = vpack.c.b16 %v2948, %v2947
        %v2957 = vpack.c.b16 %v2950, %v2949
        %v2958 = vpack.c.b16 %v2952, %v2951
        %v2959 = vpack.c.b16 %v2954, %v2953
        %v2960 = vpack.c.b16 %v2955, %v2955
        %vm2965 = vcmask 588800
        %v2967 = vsel %vm2965, %v2918, 0
        %v2970 = vsel %vm2965, %v2919, 0
        %v2973 = vsel %vm2965, %v2920, 0
        %v2976 = vsel %vm2965, %v2921, 0
        %vm2978 = vcmask 1043456
        %v2980 = vsel %vm2978, %v2960, 0
        %2982 = vmatprep.subr.bf16.mxu0 0
        %2983 = vmatpush1.bf16.msra.mxu0 %v2956
        %2984 = vmatprep.subr.bf16.mxu0 0
        %2985 = vmatpush1.bf16.msra.mxu0 %v2957
        %2986 = vmatprep.subr.bf16.mxu0 0
        %2987 = vmatpush1.bf16.msra.mxu0 %v2958
        %2988 = vmatprep.subr.bf16.mxu0 0
        %2989 = vmatpush1.bf16.msra.mxu0 %v2959
        %2990 = vmatprep.subr.bf16.mxu0 0
        %2991 = vmatpush1.bf16.msra.mxu0 %v2980
        %2992 = vmatprep.subr.bf16.mxu0 0
        %2993 = vmatpush1.bf16.msra.mxu0 0
        %2994 = vmatprep.subr.bf16.mxu0 0
        %2995 = vmatpush1.bf16.msra.mxu0 0
        %2996 = vmatprep.subr.bf16.mxu0 0
        %2997 = vmatpush1.bf16.msra.mxu0 0
        %2998 = vmatprep.subr.bf16.mxu0 0
        %2999 = vmatpush1.bf16.msra.mxu0 0
        %3000 = vmatprep.subr.bf16.mxu0 0
        %3001 = vmatpush1.bf16.msra.mxu0 0
        %3002 = vmatprep.subr.bf16.mxu0 0
        %3003 = vmatpush1.bf16.msra.mxu0 0
        %3004 = vmatprep.subr.bf16.mxu0 0
        %3005 = vmatpush1.bf16.msra.mxu0 0
        %3006 = vmatprep.subr.bf16.mxu0 0
        %3007 = vmatpush1.bf16.msra.mxu0 0
        %3008 = vmatprep.subr.bf16.mxu0 0
        %3009 = vmatpush1.bf16.msra.mxu0 0
        %3010 = vmatprep.subr.bf16.mxu0 0
        %3011 = vmatpush1.bf16.msra.mxu0 0
        %3012 = vmatprep.subr.bf16.mxu0 0
        %3013 = vmatpush1.bf16.msra.mxu0 0
        %3014 = vmatprep.mubr.bf16.mxu0 0
        %3015 = vmatmul.mubr.bf16.gmra.mrb[0].mxu0 %v2967
        %v3016 = vpop.f32.mrb[0].mxu0
        %v3017 = vadd.f32 %v2936, %v3016
        %v3018 = vpop.f32.mrb[0].mxu0
        %v3019 = vpop.f32.mrb[0].mxu0
        %v3020 = vadd.f32 %v2936, %v3019
        %v3021 = vpop.f32.mrb[0].mxu0
        %3022 = vmatprep.mubr.bf16.mxu0 0
        %3023 = vmatmul.mubr.bf16.gmra.mrb[0].mxu0 %v2970
        %v3024 = vpop.f32.mrb[0].mxu0
        %v3025 = vadd.f32 %v2936, %v3024
        %v3026 = vpop.f32.mrb[0].mxu0
        %v3027 = vpop.f32.mrb[0].mxu0
        %v3028 = vadd.f32 %v2936, %v3027
        %v3029 = vpop.f32.mrb[0].mxu0
        %3030 = vmatprep.mubr.bf16.mxu0 0
        %3031 = vmatmul.mubr.bf16.gmra.mrb[0].mxu0 %v2973
        %v3032 = vpop.f32.mrb[0].mxu0
        %v3033 = vadd.f32 %v2936, %v3032
        %v3034 = vpop.f32.mrb[0].mxu0
        %v3035 = vpop.f32.mrb[0].mxu0
        %v3036 = vadd.f32 %v2936, %v3035
        %v3037 = vpop.f32.mrb[0].mxu0
        %3038 = vmatprep.mubr.bf16.mxu0 0
        %3039 = vmatmul.mubr.bf16.gmra.mrb[0].mxu0 %v2976
        %v3040 = vpop.f32.mrb[0].mxu0
        %v3041 = vadd.f32 %v2936, %v3040
        %v3042 = vpop.f32.mrb[0].mxu0
        %v3043 = vpop.f32.mrb[0].mxu0
        %v3044 = vadd.f32 %v2936, %v3043
        %v3045 = vpop.f32.mrb[0].mxu0
        %3046 = vdwg.mxu0
        %v3047 = vmax.f32 %v3017, 0.0
        %v3048 = vmax.f32 %v3020, 0.0
        %v3049 = vmax.f32 %v3025, 0.0
        %v3050 = vmax.f32 %v3028, 0.0
        %v3051 = vmax.f32 %v3033, 0.0
        %v3052 = vmax.f32 %v3036, 0.0
        %v3053 = vmax.f32 %v3041, 0.0
        %v3054 = vmax.f32 %v3044, 0.0
        %3055 = vst.msk [vmem:[#allocation6] sm:$0xff] %vm1901, %v3047
        %3056 = vst.msk [vmem:[#allocation6 + $0x8] sm:$0xff] %vm1901, %v3048
        %3057 = vst.msk [vmem:[#allocation6 + $0x10] sm:$0xff] %vm1901, %v3049
        %3058 = vst.msk [vmem:[#allocation6 + $0x18] sm:$0xff] %vm1901, %v3050
        %3059 = vst.msk [vmem:[#allocation6 + $0x20] sm:$0xff] %vm1901, %v3051
        %3060 = vst.msk [vmem:[#allocation6 + $0x28] sm:$0xff] %vm1901, %v3052
        %3061 = vst.msk [vmem:[#allocation6 + $0x30] sm:$0xff] %vm1901, %v3053
        %3062 = vst.msk [vmem:[#allocation6 + $0x38] sm:$0xff] %vm1901, %v3054
        %v3063 = vld [vmem:[#allocation6] sm:$0xff]
        %v3064 = vld [vmem:[#allocation6 + $0x10] sm:$0xff]
        %v3065 = vld [vmem:[#allocation6 + $0x20] sm:$0xff]
        %v3066 = vld [vmem:[#allocation6 + $0x30] sm:$0xff]
        %s3067 = scalar_lea.vmem [#allocation6], 8
        %v3068 = vld [vmem:[%s3067] sm:$0xff]
        %v3069 = vld [vmem:[%s3067 + $0x10] sm:$0xff]
        %v3070 = vld [vmem:[%s3067 + $0x20] sm:$0xff]
        %v3071 = vld [vmem:[%s3067 + $0x30] sm:$0xff]
        %v3072 = vmax.f32 %v3063, %v3068
        %v3073 = vmax.f32 %v3064, %v3069
        %v3074 = vmax.f32 %v3065, %v3070
        %v3075 = vmax.f32 %v3066, %v3071
        %3076 = vst.msk [vmem:[#allocation7] sm:$0xff] %vm1901, %v3072
        %3077 = vst.msk [vmem:[#allocation7 + $0x8] sm:$0xff] %vm1901, %v3073
        %3078 = vst.msk [vmem:[#allocation7 + $0x10] sm:$0xff] %vm1901, %v3074
        %3079 = vst.msk [vmem:[#allocation7 + $0x18] sm:$0xff] %vm1901, %v3075
        %v3080 = vld [vmem:[#allocation7] ss:$2 sm:$0xf]
        %s3081 = scalar_lea.vmem [#allocation7], 8
        %v3082 = vld [vmem:[%s3081] ss:$2 sm:$0xf]
        %s3083 = scalar_lea.vmem [#allocation7], 16
        %v3084 = vld [vmem:[%s3083] ss:$2 sm:$0xf]
        %s3085 = scalar_lea.vmem [#allocation7], 24
        %v3086 = vld [vmem:[%s3085] ss:$2 sm:$0xf]
        %s3087 = scalar_lea.vmem [#allocation7], 1
        %v3088 = vld [vmem:[%s3087] ss:$2 sm:$0xf]
        %s3089 = scalar_lea.vmem [#allocation7], 9
        %v3090 = vld [vmem:[%s3089] ss:$2 sm:$0xf]
        %s3091 = scalar_lea.vmem [#allocation7], 17
        %v3092 = vld [vmem:[%s3091] ss:$2 sm:$0xf]
        %s3093 = scalar_lea.vmem [#allocation7], 25
        %v3094 = vld [vmem:[%s3093] ss:$2 sm:$0xf]
        %v3095 = vmax.f32 %v3080, %v3088
        %v3096 = vmax.f32 %v3082, %v3090
        %v3097 = vmax.f32 %v3084, %v3092
        %v3098 = vmax.f32 %v3086, %v3094
        %v3099 = vlaneseq
        %vm3100 = vcmp.ge.s32.totalorder %v3099, 0
        %vm3101 = vcmp.lt.s32.totalorder %v3099, 16
        %vm3102 = vmand %vm3100, %vm3101
        %3103 = vst.msk [vmem:[%s367] sm:$0x1] %vm3102, %v3095
        %v3106 = vunpack.c.l.s4 1966171168
        %v3107 = vunpack.c.0.s8 %v3106
        %v3108 = vlaneseq
        %v3109 = vshrl.u32 %v3108, 7
        %v3110 = vsub.s32 %v3107, %v3109
        %v3111 = vrot.slane %v3095, %v3110
        %v3112 = vcombine.high %v3111, %v3111
        %v3114 = vunpack.c.l.s4 1966171168
        %v3115 = vunpack.c.0.s8 %v3114
        %v3116 = vlaneseq
        %v3117 = vshrl.u32 %v3116, 7
        %v3118 = vsub.s32 %v3115, %v3117
        %v3119 = vrot.slane %v3111, %v3118
        %v3121 = vunpack.c.l.s4 1966171168
        %v3122 = vunpack.c.0.s8 %v3121
        %v3123 = vlaneseq
        %v3124 = vshrl.u32 %v3123, 7
        %v3125 = vsub.s32 %v3122, %v3124
        %v3126 = vrot.slane %v3112, %v3125
        %3127 = vrot.lane.b32.xlu0 %v3126, 16
        %v3128 = vpop.permute.xlu0 %3127
        %vm3130 = vcmp.ge.s32.totalorder %v3099, 16
        %vm3131 = vcmp.lt.s32.totalorder %v3099, 32
        %vm3132 = vmand %vm3130, %vm3131
        %3133 = vst.msk [vmem:[%s367] sm:$0x1] %vm3132, %v3128
        %v3134 = vcombine.high %v3119, %v3119
        %3135 = vrot.lane.b32.xlu0 %v3134, 32
        %v3136 = vpop.permute.xlu0 %3135
        %vm3138 = vcmp.ge.s32.totalorder %v3099, 32
        %vm3139 = vcmp.lt.s32.totalorder %v3099, 48
        %vm3140 = vmand %vm3138, %vm3139
        %3141 = vst.msk [vmem:[%s367] sm:$0x1] %vm3140, %v3136
        %v3142 = vcombine.high %v3126, %v3126
        %3143 = vrot.lane.b32.xlu0 %v3142, 48
        %v3144 = vpop.permute.xlu0 %3143
        %vm3146 = vcmp.ge.s32.totalorder %v3099, 48
        %vm3147 = vcmp.lt.s32.totalorder %v3099, 64
        %vm3148 = vmand %vm3146, %vm3147
        %3149 = vst.msk [vmem:[%s367] sm:$0x1] %vm3148, %v3144
        %v3152 = vunpack.c.l.s4 1966171168
        %v3153 = vunpack.c.0.s8 %v3152
        %v3154 = vlaneseq
        %v3155 = vshrl.u32 %v3154, 7
        %v3156 = vsub.s32 %v3153, %v3155
        %v3157 = vrot.slane %v3096, %v3156
        %v3159 = vunpack.c.l.s4 1966171168
        %v3160 = vunpack.c.0.s8 %v3159
        %v3161 = vlaneseq
        %v3162 = vshrl.u32 %v3161, 7
        %v3163 = vsub.s32 %v3160, %v3162
        %v3164 = vrot.slane %v3157, %v3163
        %3165 = vrot.lane.b32.xlu0 %v3164, 64
        %v3166 = vpop.permute.xlu0 %3165
        %vm3168 = vcmp.ge.s32.totalorder %v3099, 64
        %vm3169 = vcmp.lt.s32.totalorder %v3099, 80
        %vm3170 = vmand %vm3168, %vm3169
        %3171 = vst.msk [vmem:[%s367] sm:$0x1] %vm3170, %v3166
        %v3172 = vcombine.high %v3157, %v3157
        %v3174 = vunpack.c.l.s4 1966171168
        %v3175 = vunpack.c.0.s8 %v3174
        %v3176 = vlaneseq
        %v3177 = vshrl.u32 %v3176, 7
        %v3178 = vsub.s32 %v3175, %v3177
        %v3179 = vrot.slane %v3172, %v3178
        %3180 = vrot.lane.b32.xlu0 %v3179, 80
        %v3181 = vpop.permute.xlu0 %3180
        %vm3183 = vcmp.ge.s32.totalorder %v3099, 80
        %vm3184 = vcmp.lt.s32.totalorder %v3099, 96
        %vm3185 = vmand %vm3183, %vm3184
        %3186 = vst.msk [vmem:[%s367] sm:$0x1] %vm3185, %v3181
        %v3187 = vcombine.high %v3164, %v3164
        %3188 = vrot.lane.b32.xlu0 %v3187, 96
        %v3189 = vpop.permute.xlu0 %3188
        %vm3191 = vcmp.ge.s32.totalorder %v3099, 96
        %vm3192 = vcmp.lt.s32.totalorder %v3099, 112
        %vm3193 = vmand %vm3191, %vm3192
        %3194 = vst.msk [vmem:[%s367] sm:$0x1] %vm3193, %v3189
        %v3195 = vcombine.high %v3179, %v3179
        %3196 = vrot.lane.b32.xlu0 %v3195, 112
        %v3197 = vpop.permute.xlu0 %3196
        %vm3199 = vcmp.ge.s32.totalorder %v3099, 112
        %vm3200 = vcmp.lt.s32.totalorder %v3099, 128
        %vm3201 = vmand %vm3199, %vm3200
        %3202 = vst.msk [vmem:[%s367] sm:$0x1] %vm3201, %v3197
        %3203 = vst.msk [vmem:[%s367 + $0x1] sm:$0x1] %vm3102, %v3097
        %v3206 = vunpack.c.l.s4 1966171168
        %v3207 = vunpack.c.0.s8 %v3206
        %v3208 = vlaneseq
        %v3209 = vshrl.u32 %v3208, 7
        %v3210 = vsub.s32 %v3207, %v3209
        %v3211 = vrot.slane %v3097, %v3210
        %v3212 = vcombine.high %v3211, %v3211
        %v3214 = vunpack.c.l.s4 1966171168
        %v3215 = vunpack.c.0.s8 %v3214
        %v3216 = vlaneseq
        %v3217 = vshrl.u32 %v3216, 7
        %v3218 = vsub.s32 %v3215, %v3217
        %v3219 = vrot.slane %v3211, %v3218
        %v3221 = vunpack.c.l.s4 1966171168
        %v3222 = vunpack.c.0.s8 %v3221
        %v3223 = vlaneseq
        %v3224 = vshrl.u32 %v3223, 7
        %v3225 = vsub.s32 %v3222, %v3224
        %v3226 = vrot.slane %v3212, %v3225
        %3227 = vrot.lane.b32.xlu0 %v3226, 16
        %v3228 = vpop.permute.xlu0 %3227
        %3230 = vst.msk [vmem:[%s367 + $0x1] sm:$0x1] %vm3132, %v3228
        %v3231 = vcombine.high %v3219, %v3219
        %3232 = vrot.lane.b32.xlu0 %v3231, 32
        %v3233 = vpop.permute.xlu0 %3232
        %3235 = vst.msk [vmem:[%s367 + $0x1] sm:$0x1] %vm3140, %v3233
        %v3236 = vcombine.high %v3226, %v3226
        %3237 = vrot.lane.b32.xlu0 %v3236, 48
        %v3238 = vpop.permute.xlu0 %3237
        %3240 = vst.msk [vmem:[%s367 + $0x1] sm:$0x1] %vm3148, %v3238
        %v3243 = vunpack.c.l.s4 1966171168
        %v3244 = vunpack.c.0.s8 %v3243
        %v3245 = vlaneseq
        %v3246 = vshrl.u32 %v3245, 7
        %v3247 = vsub.s32 %v3244, %v3246
        %v3248 = vrot.slane %v3098, %v3247
        %v3250 = vunpack.c.l.s4 1966171168
        %v3251 = vunpack.c.0.s8 %v3250
        %v3252 = vlaneseq
        %v3253 = vshrl.u32 %v3252, 7
        %v3254 = vsub.s32 %v3251, %v3253
        %v3255 = vrot.slane %v3248, %v3254
        %3256 = vrot.lane.b32.xlu0 %v3255, 64
        %v3257 = vpop.permute.xlu0 %3256
        %3259 = vst.msk [vmem:[%s367 + $0x1] sm:$0x1] %vm3170, %v3257
        %v3260 = vcombine.high %v3248, %v3248
        %v3262 = vunpack.c.l.s4 1966171168
        %v3263 = vunpack.c.0.s8 %v3262
        %v3264 = vlaneseq
        %v3265 = vshrl.u32 %v3264, 7
        %v3266 = vsub.s32 %v3263, %v3265
        %v3267 = vrot.slane %v3260, %v3266
        %3268 = vrot.lane.b32.xlu0 %v3267, 80
        %v3269 = vpop.permute.xlu0 %3268
        %3271 = vst.msk [vmem:[%s367 + $0x1] sm:$0x1] %vm3185, %v3269
        %v3272 = vcombine.high %v3255, %v3255
        %3273 = vrot.lane.b32.xlu0 %v3272, 96
        %v3274 = vpop.permute.xlu0 %3273
        %3276 = vst.msk [vmem:[%s367 + $0x1] sm:$0x1] %vm3193, %v3274
        %v3277 = vcombine.high %v3267, %v3267
        %3278 = vrot.lane.b32.xlu0 %v3277, 112
        %v3279 = vpop.permute.xlu0 %3278
        %3281 = vst.msk [vmem:[%s367 + $0x1] sm:$0x1] %vm3201, %v3279
        %v3282 = vld [vmem:[%s367] sm:$0x3]
        %v3284 = vlaneseq
        %v3285 = vshrl.u32 %v3284, 7
        %v3286 = vsub.s32 0, %v3285
        %v3287 = vrot.slane %v3282, %v3286
        %v3288 = vlaneseq
        %v3289 = vshrl.u32 %v3288, 7
        %v3290 = vsub.s32 1, %v3289
        %v3291 = vrot.slane %v3282, %v3290
        %v3294 = vpack.c.bf16 %v3287, %v3287
        %v3295 = vpack.c.bf16 %v3291, %v3291
        %v3296 = vld [vmem:[%s5] sm:$0xf]
        %v3297 = vld [vmem:[%s5 + $0x4] sm:$0xf]
        %v3298 = vld [vmem:[%s5 + $0x8] sm:$0xf]
        %v3299 = vld [vmem:[%s5 + $0xc] sm:$0xf]
        %v3300 = vld [vmem:[%s5 + $0x10] sm:$0xf]
        %v3301 = vld [vmem:[%s5 + $0x14] sm:$0xf]
        %v3302 = vld [vmem:[%s5 + $0x18] sm:$0xf]
        %v3303 = vld [vmem:[%s5 + $0x1c] sm:$0xf]
        %v3304 = vld [vmem:[%s5 + $0x20] sm:$0xf]
        %v3305 = vld [vmem:[%s5 + $0x24] sm:$0xf]
        %v3306 = vld [vmem:[%s5 + $0x28] sm:$0xf]
        %v3307 = vld [vmem:[%s5 + $0x2c] sm:$0xf]
        %v3308 = vld [vmem:[%s5 + $0x30] sm:$0xf]
        %v3309 = vld [vmem:[%s5 + $0x34] sm:$0xf]
        %v3310 = vld [vmem:[%s5 + $0x38] sm:$0xf]
        %v3311 = vld [vmem:[%s5 + $0x3c] sm:$0xf]
        %v3312 = vld [vmem:[%s5 + $0x40] sm:$0xf]
        %v3313 = vld [vmem:[%s5 + $0x44] sm:$0xf]
        %v3314 = vld [vmem:[%s5 + $0x48] sm:$0xf]
        %v3315 = vld [vmem:[%s5 + $0x4c] sm:$0xf]
        %v3316 = vld [vmem:[%s5 + $0x50] sm:$0xf]
        %v3317 = vld [vmem:[%s5 + $0x54] sm:$0xf]
        %v3318 = vld [vmem:[%s5 + $0x58] sm:$0xf]
        %v3319 = vld [vmem:[%s5 + $0x5c] sm:$0xf]
        %v3320 = vld [vmem:[%s5 + $0x60] sm:$0xf]
        %v3321 = vld [vmem:[%s5 + $0x64] sm:$0xf]
        %v3322 = vld [vmem:[%s5 + $0x68] sm:$0xf]
        %v3323 = vld [vmem:[%s5 + $0x6c] sm:$0xf]
        %v3324 = vld [vmem:[%s5 + $0x70] sm:$0xf]
        %v3325 = vld [vmem:[%s5 + $0x74] sm:$0xf]
        %v3326 = vld [vmem:[%s5 + $0x78] sm:$0xf]
        %v3327 = vld [vmem:[%s5 + $0x7c] sm:$0xf]
        %v3328 = vld [vmem:[%s6] sm:$0x1]
        %v3361 = vunpack.c.l.b16 %v3296
        %v3362 = vunpack.c.l.b16 %v3297
        %v3363 = vunpack.c.l.b16 %v3298
        %v3364 = vunpack.c.l.b16 %v3299
        %v3365 = vunpack.c.l.b16 %v3300
        %v3366 = vunpack.c.l.b16 %v3301
        %v3367 = vunpack.c.l.b16 %v3302
        %v3368 = vunpack.c.l.b16 %v3303
        %v3369 = vunpack.c.l.b16 %v3304
        %v3370 = vunpack.c.l.b16 %v3305
        %v3371 = vunpack.c.l.b16 %v3306
        %v3372 = vunpack.c.l.b16 %v3307
        %v3373 = vunpack.c.l.b16 %v3308
        %v3374 = vunpack.c.l.b16 %v3309
        %v3375 = vunpack.c.l.b16 %v3310
        %v3376 = vunpack.c.l.b16 %v3311
        %v3377 = vunpack.c.l.b16 %v3312
        %v3378 = vunpack.c.l.b16 %v3313
        %v3379 = vunpack.c.l.b16 %v3314
        %v3380 = vunpack.c.l.b16 %v3315
        %v3381 = vunpack.c.l.b16 %v3316
        %v3382 = vunpack.c.l.b16 %v3317
        %v3383 = vunpack.c.l.b16 %v3318
        %v3384 = vunpack.c.l.b16 %v3319
        %v3385 = vunpack.c.l.b16 %v3320
        %v3386 = vunpack.c.l.b16 %v3321
        %v3387 = vunpack.c.l.b16 %v3322
        %v3388 = vunpack.c.l.b16 %v3323
        %v3389 = vunpack.c.l.b16 %v3324
        %v3390 = vunpack.c.l.b16 %v3325
        %v3391 = vunpack.c.l.b16 %v3326
        %v3392 = vunpack.c.l.b16 %v3327
        %v3393 = vpack.c.b16 %v3362, %v3361
        %v3394 = vpack.c.b16 %v3364, %v3363
        %v3395 = vpack.c.b16 %v3366, %v3365
        %v3396 = vpack.c.b16 %v3368, %v3367
        %v3397 = vpack.c.b16 %v3370, %v3369
        %v3398 = vpack.c.b16 %v3372, %v3371
        %v3399 = vpack.c.b16 %v3374, %v3373
        %v3400 = vpack.c.b16 %v3376, %v3375
        %v3401 = vpack.c.b16 %v3378, %v3377
        %v3402 = vpack.c.b16 %v3380, %v3379
        %v3403 = vpack.c.b16 %v3382, %v3381
        %v3404 = vpack.c.b16 %v3384, %v3383
        %v3405 = vpack.c.b16 %v3386, %v3385
        %v3406 = vpack.c.b16 %v3388, %v3387
        %v3407 = vpack.c.b16 %v3390, %v3389
        %v3408 = vpack.c.b16 %v3392, %v3391
        %3425 = vmatprep.subr.bf16.mxu0 0
        %3426 = vmatpush1.bf16.msra.mxu0 %v3393
        %3427 = vmatprep.subr.bf16.mxu0 0
        %3428 = vmatpush1.bf16.msra.mxu0 %v3394
        %3429 = vmatprep.subr.bf16.mxu0 0
        %3430 = vmatpush1.bf16.msra.mxu0 %v3395
        %3431 = vmatprep.subr.bf16.mxu0 0
        %3432 = vmatpush1.bf16.msra.mxu0 %v3396
        %3433 = vmatprep.subr.bf16.mxu0 0
        %3434 = vmatpush1.bf16.msra.mxu0 %v3397
        %3435 = vmatprep.subr.bf16.mxu0 0
        %3436 = vmatpush1.bf16.msra.mxu0 %v3398
        %3437 = vmatprep.subr.bf16.mxu0 0
        %3438 = vmatpush1.bf16.msra.mxu0 %v3399
        %3439 = vmatprep.subr.bf16.mxu0 0
        %3440 = vmatpush1.bf16.msra.mxu0 %v3400
        %3441 = vmatprep.subr.bf16.mxu0 0
        %3442 = vmatpush1.bf16.msra.mxu0 %v3401
        %3443 = vmatprep.subr.bf16.mxu0 0
        %3444 = vmatpush1.bf16.msra.mxu0 %v3402
        %3445 = vmatprep.subr.bf16.mxu0 0
        %3446 = vmatpush1.bf16.msra.mxu0 %v3403
        %3447 = vmatprep.subr.bf16.mxu0 0
        %3448 = vmatpush1.bf16.msra.mxu0 %v3404
        %3449 = vmatprep.subr.bf16.mxu0 0
        %3450 = vmatpush1.bf16.msra.mxu0 %v3405
        %3451 = vmatprep.subr.bf16.mxu0 0
        %3452 = vmatpush1.bf16.msra.mxu0 %v3406
        %3453 = vmatprep.subr.bf16.mxu0 0
        %3454 = vmatpush1.bf16.msra.mxu0 %v3407
        %3455 = vmatprep.subr.bf16.mxu0 0
        %3456 = vmatpush1.bf16.msra.mxu0 %v3408
        %3457 = vmatprep.mubr.bf16.mxu0 %v3295
        %3458 = vmatmul.mubr.bf16.gmra.mrb[0].mxu0 %v3294
        %v3459 = vpop.f32.mrb[0].mxu0
        %v3460 = vadd.f32 %v3328, %v3459
        %v3461 = vpop.f32.mrb[0].mxu0
        %v3462 = vpop.f32.mrb[0].mxu0
        %v3463 = vpop.f32.mrb[0].mxu0
        %3464 = vdwg.mxu0
        %v3465 = vmax.f32 %v3460, 0.0
        %v3466 = vpack.c.bf16 %v3465, %v3465
        %v3467 = vld [vmem:[%s7] sm:$0xf]
        %v3468 = vld [vmem:[%s7 + $0x4] sm:$0xf]
        %v3469 = vld [vmem:[%s7 + $0x8] sm:$0xf]
        %v3470 = vld [vmem:[%s7 + $0xc] sm:$0xf]
        %v3471 = vld [vmem:[%s8] sm:$0x1]
        %v3476 = vunpack.c.l.b16 %v3467
        %v3477 = vunpack.c.l.b16 %v3468
        %v3478 = vunpack.c.l.b16 %v3469
        %v3479 = vunpack.c.l.b16 %v3470
        %v3480 = vpack.c.b16 %v3477, %v3476
        %v3481 = vpack.c.b16 %v3479, %v3478
        %v3485 = vsel %vm2033, %v3466, 0
        %3487 = vmatprep.subr.bf16.mxu0 0
        %3488 = vmatpush1.bf16.msra.mxu0 %v3480
        %3489 = vmatprep.subr.bf16.mxu0 0
        %3490 = vmatpush1.bf16.msra.mxu0 %v3481
        %3491 = vmatprep.subr.bf16.mxu0 0
        %3492 = vmatpush1.bf16.msra.mxu0 0
        %3493 = vmatprep.subr.bf16.mxu0 0
        %3494 = vmatpush1.bf16.msra.mxu0 0
        %3495 = vmatprep.subr.bf16.mxu0 0
        %3496 = vmatpush1.bf16.msra.mxu0 0
        %3497 = vmatprep.subr.bf16.mxu0 0
        %3498 = vmatpush1.bf16.msra.mxu0 0
        %3499 = vmatprep.subr.bf16.mxu0 0
        %3500 = vmatpush1.bf16.msra.mxu0 0
        %3501 = vmatprep.subr.bf16.mxu0 0
        %3502 = vmatpush1.bf16.msra.mxu0 0
        %3503 = vmatprep.subr.bf16.mxu0 0
        %3504 = vmatpush1.bf16.msra.mxu0 0
        %3505 = vmatprep.subr.bf16.mxu0 0
        %3506 = vmatpush1.bf16.msra.mxu0 0
        %3507 = vmatprep.subr.bf16.mxu0 0
        %3508 = vmatpush1.bf16.msra.mxu0 0
        %3509 = vmatprep.subr.bf16.mxu0 0
        %3510 = vmatpush1.bf16.msra.mxu0 0
        %3511 = vmatprep.subr.bf16.mxu0 0
        %3512 = vmatpush1.bf16.msra.mxu0 0
        %3513 = vmatprep.subr.bf16.mxu0 0
        %3514 = vmatpush1.bf16.msra.mxu0 0
        %3515 = vmatprep.subr.bf16.mxu0 0
        %3516 = vmatpush1.bf16.msra.mxu0 0
        %3517 = vmatprep.subr.bf16.mxu0 0
        %3518 = vmatpush1.bf16.msra.mxu0 0
        %3519 = vmatprep.mubr.bf16.mxu0 0
        %3520 = vmatmul.mubr.bf16.gmra.mrb[0].mxu0 %v3485
        %v3521 = vpop.f32.mrb[0].mxu0
        %v3522 = vadd.f32 %v3471, %v3521
        %v3523 = vpop.f32.mrb[0].mxu0
        %v3524 = vpop.f32.mrb[0].mxu0
        %v3525 = vpop.f32.mrb[0].mxu0
        %3526 = vdwg.mxu0
        %vm3527 = vcmask 73728
        %3528 = vst.msk [vmem:[%s352] sm:$0x1] %vm3527, %v3522
        %s3529 = sand.u32 %s227, 1
        %s3530 = scalar_lea.sflag [#allocation9], %s3529
        %s3531 = sand.u32 %s227, 1
        %s3532 = scalar_lea.vmem [#allocation8], %s3531
        %p3533 = scmp.lt.s32.totalorder %s25, 1
        %s3534 = scalar_select %p3533, %s25, 1
        %s3535 = smul.addr %s3534, 2
        %s3536 = scalar_lea.vmem %s10, %s3535
        // Predicated region
        $region57: #{_lambda_.1} parent=55 // pred_check
          %p3537 = pneg %p237
        $region58: #{_lambda_.1} parent=55 // pred_check_branch
          %3539 = sbr.rel (%p3537) target = $region60
        $region59: #{_lambda_.1} parent=55 // pred_region
          %s3541 = ssub.s32 16, 16
          %3542 = vsyncadd %s3530, %s3541
          %s3543 = smul.addr %s25, 16
          %s3544 = scalar_lea.hbm %s9, %s3543
          %s3546 = sshll.u32 %s3532, 4
          %s3547 = int_to_ptr.vmem [resolvable:$true] %s3546
          %3549 = dma.vmem_to_hbm [thread:$0]  %s3547, 16, %s3544, %s3530
        $region60: #{_lambda_.1} parent=55 // pred_fallthru
          _
        // Predicated region
        $region61: #{_lambda_.1} parent=55 // pred_check
          %p3550 = pneg %p263
        $region62: #{_lambda_.1} parent=55 // pred_check_branch
          %3552 = sbr.rel (%p3550) target = $region64
        $region63: #{_lambda_.1} parent=55 // pred_region
          _
        $region64: #{_lambda_.1} parent=55 // pred_fallthru
          _
      $region56: #{_lambda_.1} parent=5 // pred_fallthru
        _
      %p3553 = scmp.le.s32.totalorder 2, %s20
      // Predicated region
      $region65: #{_lambda_.1} parent=5 // pred_check
        %p3554 = pneg %p3553
      $region66: #{_lambda_.1} parent=5 // pred_check_branch
        %3556 = sbr.rel (%p3554) target = $region68
      $region67: #{_lambda_.1} parent=5 // pred_region
        %s3557 = ssub.s32 %s20, 2
        // Predicated region
        $region69: #{_lambda_.1} parent=67 // pred_check
          %p3558 = pneg %p243
        $region70: #{_lambda_.1} parent=67 // pred_check_branch
          %3560 = sbr.rel (%p3558) target = $region72
        $region71: #{_lambda_.1} parent=67 // pred_region
          %s3561 = sand.u32 %s228, 1
          %s3562 = scalar_lea.sflag [#allocation9], %s3561
          %s3563 = sand.u32 %s228, 1
          %s3564 = scalar_lea.vmem [#allocation8], %s3563
          %3565 = dma.done %s3562, 16
        $region72: #{_lambda_.1} parent=67 // pred_fallthru
          _
        // Predicated region
        $region73: #{_lambda_.1} parent=67 // pred_check
          %p3566 = pneg %p269
        $region74: #{_lambda_.1} parent=67 // pred_check_branch
          %3568 = sbr.rel (%p3566) target = $region76
        $region75: #{_lambda_.1} parent=67 // pred_region
          %p3569 = scmp.lt.s32.totalorder %s26, 1
          %s3570 = scalar_select %p3569, %s26, 1
          %s3571 = smul.addr %s3570, 2
          %s3572 = scalar_lea.vmem %s10, %s3571
        $region76: #{_lambda_.1} parent=67 // pred_fallthru
          _
      $region68: #{_lambda_.1} parent=5 // pred_fallthru
        _
    $region6: #{_lambda_.1} parent=1 // loop_footer
      %s24 = sadd.s32 1, %s20
    $region7: #{_lambda_.1} parent=1 // loop_footer_branch
      %19 = sbr.rel target = $region3
    $region8: #{_lambda_.1} parent=1 // loop_exit
      _
    %3573 = vsyncpa [#allocation9], 1
    %s3574 = scalar_lea.sflag [#allocation9], 1
    %3575 = vsyncpa %s3574, 1

</llo_original>
